<compile_context>
chip_gen: v6e
topology: v6e:2x2x1
jax: 0.10.0
libtpu: 0.0.40
codegen_flags: <defaults>
</compile_context>

<pallas_src>
import jax
import jax.numpy as jnp
from jax.experimental import pallas as pl
from jax.experimental.pallas import tpu as pltpu

LANE = 128        # TPU lane width: output-channel / FC widths are padded to this
TILE_P = 512      # max pooled-pixel rows per conv tile (post K-compaction, VMEM-safe)
TILE_M = 128      # max FC rows per tile
C1_KEEP = 8       # conv1 channels carried into conv2's K (6 real + 2 zero, sublane-mult)
C2_KEEP = 16      # conv2 real channels carried into fc1's K


def _cdiv(a, b):
    return -(-a // b)


def _round_up(x, m):
    return _cdiv(x, m) * m


def _choose_row_tiles(rows, max_tile):
    """>=2 row tiles when possible (v7x dual TensorCore), each a multiple of 8 rows."""
    if rows <= 8:
        return 8, 1
    n_tiles = max(2, _cdiv(rows, max_tile))
    return _round_up(_cdiv(rows, n_tiles), 8), n_tiles


# ----------------------------------------------------------------------------
# Pallas kernels
# ----------------------------------------------------------------------------
def _conv_bias_relu_pool_kernel(a_ref, w_ref, b_ref, o_ref):
    """Fused conv-as-matmul + 2x2 max-pool + bias + ReLU.

    a_ref: (4, tile_p, K) bf16 — the four 2x2-window shifts of the same pooled
    pixels, so a single M = 4*tile_p MXU matmul covers the whole pool window.
    """
    tp = o_ref.shape[0]
    a = jnp.concatenate([a_ref[0], a_ref[1], a_ref[2], a_ref[3]], axis=0)
    val = jnp.dot(a, w_ref[...], preferred_element_type=jnp.float32)   # (4*tp, 128)
    pooled = jnp.maximum(jnp.maximum(val[0:tp], val[tp:2 * tp]),
                         jnp.maximum(val[2 * tp:3 * tp], val[3 * tp:4 * tp]))
    o_ref[...] = jnp.maximum(pooled + b_ref[...], 0.0).astype(o_ref.dtype)


def _fc_head_kernel(x_ref, w1_ref, b1_ref, w2_ref, b2_ref, w3_ref, b3_ref, o_ref):
    """fc1+ReLU -> fc2+ReLU -> fc3 fused (all widths padded to 128 lanes)."""
    h = jnp.dot(x_ref[...], w1_ref[...], preferred_element_type=jnp.float32)
    h = jnp.maximum(h + b1_ref[...], 0.0).astype(jnp.bfloat16)
    h = jnp.dot(h, w2_ref[...], preferred_element_type=jnp.float32)
    h = jnp.maximum(h + b2_ref[...], 0.0).astype(jnp.bfloat16)
    h = jnp.dot(h, w3_ref[...], preferred_element_type=jnp.float32)
    o_ref[...] = h + b3_ref[...]


# ----------------------------------------------------------------------------
# Wrappers
# ----------------------------------------------------------------------------
def conv_relu_pool(x, w_mat, b_mat, k):
    """x: (N, H, W, C) bf16 NHWC -> (N, OH//2, OW//2, 128) bf16.

    w_mat: (Kpad, 128) bf16 pre-transposed (kh, kw, c) feature rows, zero-padded;
    b_mat: (1, 128) f32.
    """
    n, h, w, c = x.shape
    oh, ow = h - k + 1, w - k + 1
    ph, pw = oh // 2, ow // 2
    kdim = k * k * c
    kpad = w_mat.shape[0]
    assert kpad >= kdim and kpad % LANE == 0

    # im2col with (kh, kw, c) feature order; lane pad folded into the concatenate.
    cols = [x[:, kh:kh + oh, kw:kw + ow, :] for kh in range(k) for kw in range(k)]
    if kpad > kdim:
        cols.append(jnp.zeros((n, oh, ow, kpad - kdim), x.dtype))
    p = jnp.concatenate(cols, axis=-1)                     # (n, oh, ow, kpad)
    p = p[:, :2 * ph, :2 * pw, :]                          # floor-crop like torch pool
    a = (p.reshape(n, ph, 2, pw, 2, kpad)
           .transpose(2, 4, 0, 1, 3, 5)                    # (wh, ww, n, ph, pw, kpad)
           .reshape(4, n * ph * pw, kpad))

    npix = n * ph * pw
    tile_p, p_tiles = _choose_row_tiles(npix, TILE_P)
    p_pad = tile_p * p_tiles
    if p_pad != npix:
        a = jnp.pad(a, ((0, 0), (0, p_pad - npix), (0, 0)))

    out = pl.pallas_call(
        _conv_bias_relu_pool_kernel,
        out_shape=jax.ShapeDtypeStruct((p_pad, LANE), jnp.bfloat16),
        grid_spec=pltpu.PrefetchScalarGridSpec(
            num_scalar_prefetch=0,
            grid=(p_tiles,),
            in_specs=[
                pl.BlockSpec((4, tile_p, kpad), lambda i: (0, i, 0)),
                pl.BlockSpec((kpad, LANE), lambda i: (0, 0)),
                pl.BlockSpec((1, LANE), lambda i: (0, 0)),
            ],
            out_specs=pl.BlockSpec((tile_p, LANE), lambda i: (i, 0)),
        ),
        compiler_params=pltpu.CompilerParams(
            dimension_semantics=("parallel",)),
    )(a, w_mat, b_mat)
    return out[:npix].reshape(n, ph, pw, LANE)


def fc_head(x2d, w1, b1, w2, b2, w3, b3, num_classes):
    """x2d: (M, K_real) bf16 -> logits (M, num_classes) f32; one fused kernel."""
    m, kreal = x2d.shape
    k1 = w1.shape[0]                                       # padded K (mult of 128)
    tile_m, m_tiles = _choose_row_tiles(m, TILE_M)
    m_pad = tile_m * m_tiles
    if (m_pad, k1) != (m, kreal):
        x2d = jnp.pad(x2d, ((0, m_pad - m), (0, k1 - kreal)))

    out = pl.pallas_call(
        _fc_head_kernel,
        out_shape=jax.ShapeDtypeStruct((m_pad, LANE), jnp.float32),
        grid_spec=pltpu.PrefetchScalarGridSpec(
            num_scalar_prefetch=0,
            grid=(m_tiles,),
            in_specs=[
                pl.BlockSpec((tile_m, k1), lambda i: (i, 0)),
                pl.BlockSpec((k1, LANE), lambda i: (0, 0)),
                pl.BlockSpec((1, LANE), lambda i: (0, 0)),
                pl.BlockSpec((LANE, LANE), lambda i: (0, 0)),
                pl.BlockSpec((1, LANE), lambda i: (0, 0)),
                pl.BlockSpec((LANE, LANE), lambda i: (0, 0)),
                pl.BlockSpec((1, LANE), lambda i: (0, 0)),
            ],
            out_specs=pl.BlockSpec((tile_m, LANE), lambda i: (i, 0)),
        ),
        compiler_params=pltpu.CompilerParams(dimension_semantics=("parallel",)),
    )(x2d, w1, b1, w2, b2, w3, b3)
    return out[:m, :num_classes]


# ----------------------------------------------------------------------------
# Parameters (torch layout) and one-time kernel-ready preparation
# ----------------------------------------------------------------------------
def init_params(key, input_size=(32, 32)):
    h, w = input_size
    fh = ((h - 5 + 1) // 2 - 5 + 1) // 2
    fw = ((w - 5 + 1) // 2 - 5 + 1) // 2
    ks = jax.random.split(key, 10)

    def wini(k, shape, fan_in):
        scale = 1.0 / jnp.sqrt(jnp.float32(fan_in))
        return jax.random.uniform(k, shape, jnp.float32, -scale, scale)

    return {
        "conv1_w": wini(ks[0], (6, 3, 5, 5), 3 * 25),
        "conv1_b": wini(ks[1], (6,), 3 * 25),
        "conv2_w": wini(ks[2], (16, 6, 5, 5), 6 * 25),
        "conv2_b": wini(ks[3], (16,), 6 * 25),
        "fc1_w": wini(ks[4], (120, 16 * fh * fw), 16 * fh * fw),
        "fc1_b": wini(ks[5], (120,), 16 * fh * fw),
        "fc2_w": wini(ks[6], (84, 120), 120),
        "fc2_b": wini(ks[7], (84,), 120),
        "fc3_w": wini(ks[8], (10, 84), 84),
        "fc3_b": wini(ks[9], (10,), 84),
    }


def prepare_params(params, input_size=(32, 32)):
    """One-time: transpose, zero-pad (lanes + compacted K), cast weights to bf16."""
    h, w = input_size
    fh = ((h - 5 + 1) // 2 - 5 + 1) // 2
    fw = ((w - 5 + 1) // 2 - 5 + 1) // 2

    def prep_conv(wt, bt, ic_pad):
        oc, ic, k, _ = wt.shape
        wm = jnp.transpose(wt, (2, 3, 1, 0))                       # (k, k, ic, oc)
        wm = jnp.pad(wm, ((0, 0), (0, 0), (0, ic_pad - ic), (0, LANE - oc)))
        wm = wm.reshape(k * k * ic_pad, LANE)
        k_pad = _round_up(k * k * ic_pad, LANE)                    # lane-dense K
        wm = jnp.pad(wm, ((0, k_pad - k * k * ic_pad), (0, 0))).astype(jnp.bfloat16)
        bm = jnp.pad(bt, (0, LANE - oc)).astype(jnp.float32).reshape(1, LANE)
        return wm, bm

    def prep_fc(wt, bt):
        out_f, in_f = wt.shape
        wm = jnp.pad(wt.T, ((0, LANE - in_f), (0, LANE - out_f))).astype(jnp.bfloat16)
        bm = jnp.pad(bt, (0, LANE - out_f)).astype(jnp.float32).reshape(1, LANE)
        return wm, bm

    # conv1 contracts over the raw 3 input channels (K = 75 -> 128);
    # conv2 contracts over C1_KEEP = 8 channels of conv1's output (K = 200 -> 256).
    c1w, c1b = prep_conv(params["conv1_w"], params["conv1_b"], ic_pad=3)
    c2w, c2b = prep_conv(params["conv2_w"], params["conv2_b"], ic_pad=C1_KEEP)

    # fc1: torch flattens (C=16, fh, fw); our flatten order is (fh, fw, C=16).
    # Permute the weight rows once -> identical numerics; K = 400 -> 512.
    out_f = params["fc1_w"].shape[0]
    w1 = params["fc1_w"].reshape(out_f, C2_KEEP, fh, fw)
    w1 = jnp.transpose(w1, (2, 3, 1, 0))                           # (fh, fw, c, out)
    w1 = w1.reshape(fh * fw * C2_KEEP, out_f)
    k1_pad = _round_up(fh * fw * C2_KEEP, LANE)
    w1 = jnp.pad(w1, ((0, k1_pad - fh * fw * C2_KEEP),
                      (0, LANE - out_f))).astype(jnp.bfloat16)
    b1 = jnp.pad(params["fc1_b"], (0, LANE - out_f)).astype(jnp.float32).reshape(1, LANE)

    w2, b2 = prep_fc(params["fc2_w"], params["fc2_b"])
    w3, b3 = prep_fc(params["fc3_w"], params["fc3_b"])
    return {"conv1_w": c1w, "conv1_b": c1b, "conv2_w": c2w, "conv2_b": c2b,
            "fc1_w": w1, "fc1_b": b1, "fc2_w": w2, "fc2_b": b2,
            "fc3_w": w3, "fc3_b": b3}


# ----------------------------------------------------------------------------
# Forward pass (matches the PyTorch module: conv-relu-pool x2, fc1/fc2/fc3)
# ----------------------------------------------------------------------------
def alexnet_forward(prep, x):
    # x: (N, 3, H, W) f32 NCHW (torch interface) -> logits (N, 10) f32
    x = jnp.transpose(x, (0, 2, 3, 1)).astype(jnp.bfloat16)        # NHWC + bf16 once
    out = conv_relu_pool(x, prep["conv1_w"], prep["conv1_b"], k=5)            # (N,14,14,128)
    # K-compaction: carry only the first 8 channels (6 real + 2 exact-zero pads)
    out = conv_relu_pool(out[..., :C1_KEEP], prep["conv2_w"], prep["conv2_b"], k=5)  # (N,5,5,128)
    n = out.shape[0]
    feat = out[..., :C2_KEEP].reshape(n, -1)                       # (N, 400), (fh,fw,c) order
    return fc_head(feat, prep["fc1_w"], prep["fc1_b"], prep["fc2_w"], prep["fc2_b"],
                   prep["fc3_w"], prep["fc3_b"], num_classes=10)


if __name__ == "__main__":
    key = jax.random.PRNGKey(0)
    pkey, xkey = jax.random.split(key)
    params = init_params(pkey, input_size=(32, 32))
    prep = prepare_params(params, input_size=(32, 32))             # one-time weight prep
    # CIFAR-10 configuration: 3x32x32 input (required so 16*5*5 matches fc1)
    x = jax.random.normal(xkey, (2, 3, 32, 32), dtype=jnp.float32)

    out = jax.jit(alexnet_forward)(prep, x)
    out = jax.block_until_ready(out)
    assert out.shape == (2, 10), out.shape
    assert bool(jnp.all(jnp.isfinite(out)))
    print("KERNEL_OK")
</pallas_src>

<mosaic_0001>
module attributes {stable_mosaic.version = 11 : i64} {
  func.func @_conv_bias_relu_pool_kernel(%arg0: i32, %arg1: memref<4x200x128xbf16, #tpu.memory_space<vmem>>, %arg2: memref<128x128xbf16, #tpu.memory_space<vmem>>, %arg3: memref<1x128xf32, #tpu.memory_space<vmem>>, %arg4: memref<200x128xbf16, #tpu.memory_space<vmem>>) attributes {dimension_semantics = [#tpu.dimension_semantics<parallel>], iteration_bounds = array<i64: 2>, scalar_prefetch = 0 : i64, scratch_operands = 0 : i64, tpu.core_type = #tpu.core_type<tc>, window_params = [{transform_indices = @transform_0, window_bounds = array<i64: 4, 200, 128>}, {pipeline_mode = #tpu.pipeline_mode<synchronous>, transform_indices = @transform_1, window_bounds = array<i64: 128, 128>}, {pipeline_mode = #tpu.pipeline_mode<synchronous>, transform_indices = @transform_2, window_bounds = array<i64: 1, 128>}, {transform_indices = @transform_3, window_bounds = array<i64: 200, 128>}]} {
    %c0 = arith.constant 0 : index
    %c0_0 = arith.constant 0 : index
    %c0_1 = arith.constant 0 : index
    %0 = vector.load %arg1[%c0, %c0_0, %c0_1] : memref<4x200x128xbf16, #tpu.memory_space<vmem>>, vector<1x200x128xbf16>
    %1 = vector.shape_cast %0 : vector<1x200x128xbf16> to vector<200x128xbf16>
    %c1 = arith.constant 1 : index
    %c0_2 = arith.constant 0 : index
    %c0_3 = arith.constant 0 : index
    %2 = vector.load %arg1[%c1, %c0_2, %c0_3] : memref<4x200x128xbf16, #tpu.memory_space<vmem>>, vector<1x200x128xbf16>
    %3 = vector.shape_cast %2 : vector<1x200x128xbf16> to vector<200x128xbf16>
    %c2 = arith.constant 2 : index
    %c0_4 = arith.constant 0 : index
    %c0_5 = arith.constant 0 : index
    %4 = vector.load %arg1[%c2, %c0_4, %c0_5] : memref<4x200x128xbf16, #tpu.memory_space<vmem>>, vector<1x200x128xbf16>
    %5 = vector.shape_cast %4 : vector<1x200x128xbf16> to vector<200x128xbf16>
    %c3 = arith.constant 3 : index
    %c0_6 = arith.constant 0 : index
    %c0_7 = arith.constant 0 : index
    %6 = vector.load %arg1[%c3, %c0_6, %c0_7] : memref<4x200x128xbf16, #tpu.memory_space<vmem>>, vector<1x200x128xbf16>
    %7 = vector.shape_cast %6 : vector<1x200x128xbf16> to vector<200x128xbf16>
    %8 = tpu.concatenate %1, %3, %5, %7 in 0 : vector<200x128xbf16>, vector<200x128xbf16>, vector<200x128xbf16>, vector<200x128xbf16> -> vector<800x128xbf16>
    %c0_8 = arith.constant 0 : index
    %c0_9 = arith.constant 0 : index
    %9 = vector.load %arg2[%c0_8, %c0_9] : memref<128x128xbf16, #tpu.memory_space<vmem>>, vector<128x128xbf16>
    %cst = arith.constant dense<0.000000e+00> : vector<800x128xf32>
    %10 = tpu.matmul %8, %9, %cst {dimension_numbers = #tpu.dot_dimension_numbers<[1], [0], [0], [1], [0, 0, 1, 1], [], []>} : vector<800x128xbf16>, vector<128x128xbf16>, vector<800x128xf32> -> vector<800x128xf32>
    %11 = vector.extract_strided_slice %10 {offsets = [0, 0], sizes = [200, 128], strides = [1, 1]} : vector<800x128xf32> to vector<200x128xf32>
    %12 = vector.extract_strided_slice %10 {offsets = [200, 0], sizes = [200, 128], strides = [1, 1]} : vector<800x128xf32> to vector<200x128xf32>
    %13 = arith.maximumf %11, %12 : vector<200x128xf32>
    %14 = vector.extract_strided_slice %10 {offsets = [400, 0], sizes = [200, 128], strides = [1, 1]} : vector<800x128xf32> to vector<200x128xf32>
    %15 = vector.extract_strided_slice %10 {offsets = [600, 0], sizes = [200, 128], strides = [1, 1]} : vector<800x128xf32> to vector<200x128xf32>
    %16 = arith.maximumf %14, %15 : vector<200x128xf32>
    %17 = arith.maximumf %13, %16 : vector<200x128xf32>
    %c0_10 = arith.constant 0 : index
    %c0_11 = arith.constant 0 : index
    %18 = vector.load %arg3[%c0_10, %c0_11] : memref<1x128xf32, #tpu.memory_space<vmem>>, vector<1x128xf32>
    %19 = vector.broadcast %18 : vector<1x128xf32> to vector<200x128xf32>
    %20 = arith.addf %17, %19 : vector<200x128xf32>
    %cst_12 = arith.constant 0.000000e+00 : f32
    %21 = vector.broadcast %cst_12 : f32 to vector<200x128xf32>
    %22 = arith.maximumf %20, %21 : vector<200x128xf32>
    %23 = arith.truncf %22 : vector<200x128xf32> to vector<200x128xbf16>
    %c0_13 = arith.constant 0 : index
    %c0_14 = arith.constant 0 : index
    %24 = vector.load %arg4[%c0_13, %c0_14] : memref<200x128xbf16, #tpu.memory_space<vmem>>, vector<200x128xbf16>
    tpu.vector_store %arg4[%c0_13, %c0_14], %23 {strides = array<i32>} : memref<200x128xbf16, #tpu.memory_space<vmem>>, vector<200x128xbf16>,
    return
  }
  func.func @transform_0(%arg0: i32) -> (i32, i32, i32) {
    %c0_i32 = arith.constant 0 : i32
    %c0_i32_0 = arith.constant 0 : i32
    %c0_i32_1 = arith.constant 0 : i32
    return %c0_i32, %arg0, %c0_i32_0 : i32, i32, i32
  }
  func.func @transform_1(%arg0: i32) -> (i32, i32) {
    %c0_i32 = arith.constant 0 : i32
    %c0_i32_0 = arith.constant 0 : i32
    %c0_i32_1 = arith.constant 0 : i32
    return %c0_i32, %c0_i32_0 : i32, i32
  }
  func.func @transform_2(%arg0: i32) -> (i32, i32) {
    %c0_i32 = arith.constant 0 : i32
    %c0_i32_0 = arith.constant 0 : i32
    %c0_i32_1 = arith.constant 0 : i32
    return %c0_i32, %c0_i32_0 : i32, i32
  }
  func.func @transform_3(%arg0: i32) -> (i32, i32) {
    %c0_i32 = arith.constant 0 : i32
    %c0_i32_0 = arith.constant 0 : i32
    return %arg0, %c0_i32 : i32, i32
  }
}

module attributes {stable_mosaic.version = 11 : i64} {
  func.func @_conv_bias_relu_pool_kernel(%arg0: i32, %arg1: memref<4x32x256xbf16, #tpu.memory_space<vmem>>, %arg2: memref<256x128xbf16, #tpu.memory_space<vmem>>, %arg3: memref<1x128xf32, #tpu.memory_space<vmem>>, %arg4: memref<32x128xbf16, #tpu.memory_space<vmem>>) attributes {dimension_semantics = [#tpu.dimension_semantics<parallel>], iteration_bounds = array<i64: 2>, scalar_prefetch = 0 : i64, scratch_operands = 0 : i64, tpu.core_type = #tpu.core_type<tc>, window_params = [{transform_indices = @transform_0, window_bounds = array<i64: 4, 32, 256>}, {pipeline_mode = #tpu.pipeline_mode<synchronous>, transform_indices = @transform_1, window_bounds = array<i64: 256, 128>}, {pipeline_mode = #tpu.pipeline_mode<synchronous>, transform_indices = @transform_2, window_bounds = array<i64: 1, 128>}, {transform_indices = @transform_3, window_bounds = array<i64: 32, 128>}]} {
    %c0 = arith.constant 0 : index
    %c0_0 = arith.constant 0 : index
    %c0_1 = arith.constant 0 : index
    %0 = vector.load %arg1[%c0, %c0_0, %c0_1] : memref<4x32x256xbf16, #tpu.memory_space<vmem>>, vector<1x32x256xbf16>
    %1 = vector.shape_cast %0 : vector<1x32x256xbf16> to vector<32x256xbf16>
    %c1 = arith.constant 1 : index
    %c0_2 = arith.constant 0 : index
    %c0_3 = arith.constant 0 : index
    %2 = vector.load %arg1[%c1, %c0_2, %c0_3] : memref<4x32x256xbf16, #tpu.memory_space<vmem>>, vector<1x32x256xbf16>
    %3 = vector.shape_cast %2 : vector<1x32x256xbf16> to vector<32x256xbf16>
    %c2 = arith.constant 2 : index
    %c0_4 = arith.constant 0 : index
    %c0_5 = arith.constant 0 : index
    %4 = vector.load %arg1[%c2, %c0_4, %c0_5] : memref<4x32x256xbf16, #tpu.memory_space<vmem>>, vector<1x32x256xbf16>
    %5 = vector.shape_cast %4 : vector<1x32x256xbf16> to vector<32x256xbf16>
    %c3 = arith.constant 3 : index
    %c0_6 = arith.constant 0 : index
    %c0_7 = arith.constant 0 : index
    %6 = vector.load %arg1[%c3, %c0_6, %c0_7] : memref<4x32x256xbf16, #tpu.memory_space<vmem>>, vector<1x32x256xbf16>
    %7 = vector.shape_cast %6 : vector<1x32x256xbf16> to vector<32x256xbf16>
    %8 = tpu.concatenate %1, %3, %5, %7 in 0 : vector<32x256xbf16>, vector<32x256xbf16>, vector<32x256xbf16>, vector<32x256xbf16> -> vector<128x256xbf16>
    %c0_8 = arith.constant 0 : index
    %c0_9 = arith.constant 0 : index
    %9 = vector.load %arg2[%c0_8, %c0_9] : memref<256x128xbf16, #tpu.memory_space<vmem>>, vector<256x128xbf16>
    %cst = arith.constant dense<0.000000e+00> : vector<128x128xf32>
    %10 = tpu.matmul %8, %9, %cst {dimension_numbers = #tpu.dot_dimension_numbers<[1], [0], [0], [1], [0, 0, 1, 1], [], []>} : vector<128x256xbf16>, vector<256x128xbf16>, vector<128x128xf32> -> vector<128x128xf32>
    %11 = vector.extract_strided_slice %10 {offsets = [0, 0], sizes = [32, 128], strides = [1, 1]} : vector<128x128xf32> to vector<32x128xf32>
    %12 = vector.extract_strided_slice %10 {offsets = [32, 0], sizes = [32, 128], strides = [1, 1]} : vector<128x128xf32> to vector<32x128xf32>
    %13 = arith.maximumf %11, %12 : vector<32x128xf32>
    %14 = vector.extract_strided_slice %10 {offsets = [64, 0], sizes = [32, 128], strides = [1, 1]} : vector<128x128xf32> to vector<32x128xf32>
    %15 = vector.extract_strided_slice %10 {offsets = [96, 0], sizes = [32, 128], strides = [1, 1]} : vector<128x128xf32> to vector<32x128xf32>
    %16 = arith.maximumf %14, %15 : vector<32x128xf32>
    %17 = arith.maximumf %13, %16 : vector<32x128xf32>
    %c0_10 = arith.constant 0 : index
    %c0_11 = arith.constant 0 : index
    %18 = vector.load %arg3[%c0_10, %c0_11] : memref<1x128xf32, #tpu.memory_space<vmem>>, vector<1x128xf32>
    %19 = vector.broadcast %18 : vector<1x128xf32> to vector<32x128xf32>
    %20 = arith.addf %17, %19 : vector<32x128xf32>
    %cst_12 = arith.constant 0.000000e+00 : f32
    %21 = vector.broadcast %cst_12 : f32 to vector<32x128xf32>
    %22 = arith.maximumf %20, %21 : vector<32x128xf32>
    %23 = arith.truncf %22 : vector<32x128xf32> to vector<32x128xbf16>
    %c0_13 = arith.constant 0 : index
    %c0_14 = arith.constant 0 : index
    %24 = vector.load %arg4[%c0_13, %c0_14] : memref<32x128xbf16, #tpu.memory_space<vmem>>, vector<32x128xbf16>
    tpu.vector_store %arg4[%c0_13, %c0_14], %23 {strides = array<i32>} : memref<32x128xbf16, #tpu.memory_space<vmem>>, vector<32x128xbf16>,
    return
  }
  func.func @transform_0(%arg0: i32) -> (i32, i32, i32) {
    %c0_i32 = arith.constant 0 : i32
    %c0_i32_0 = arith.constant 0 : i32
    %c0_i32_1 = arith.constant 0 : i32
    return %c0_i32, %arg0, %c0_i32_0 : i32, i32, i32
  }
  func.func @transform_1(%arg0: i32) -> (i32, i32) {
    %c0_i32 = arith.constant 0 : i32
    %c0_i32_0 = arith.constant 0 : i32
    %c0_i32_1 = arith.constant 0 : i32
    return %c0_i32, %c0_i32_0 : i32, i32
  }
  func.func @transform_2(%arg0: i32) -> (i32, i32) {
    %c0_i32 = arith.constant 0 : i32
    %c0_i32_0 = arith.constant 0 : i32
    %c0_i32_1 = arith.constant 0 : i32
    return %c0_i32, %c0_i32_0 : i32, i32
  }
  func.func @transform_3(%arg0: i32) -> (i32, i32) {
    %c0_i32 = arith.constant 0 : i32
    %c0_i32_0 = arith.constant 0 : i32
    return %arg0, %c0_i32 : i32, i32
  }
}

module attributes {stable_mosaic.version = 11 : i64} {
  func.func @_fc_head_kernel(%arg0: i32, %arg1: memref<8x512xbf16, #tpu.memory_space<vmem>>, %arg2: memref<512x128xbf16, #tpu.memory_space<vmem>>, %arg3: memref<1x128xf32, #tpu.memory_space<vmem>>, %arg4: memref<128x128xbf16, #tpu.memory_space<vmem>>, %arg5: memref<1x128xf32, #tpu.memory_space<vmem>>, %arg6: memref<128x128xbf16, #tpu.memory_space<vmem>>, %arg7: memref<1x128xf32, #tpu.memory_space<vmem>>, %arg8: memref<8x128xf32, #tpu.memory_space<vmem>>) attributes {dimension_semantics = [#tpu.dimension_semantics<parallel>], iteration_bounds = array<i64: 1>, scalar_prefetch = 0 : i64, scratch_operands = 0 : i64, tpu.core_type = #tpu.core_type<tc>, window_params = [{transform_indices = @transform_0, window_bounds = array<i64: 8, 512>}, {pipeline_mode = #tpu.pipeline_mode<synchronous>, transform_indices = @transform_1, window_bounds = array<i64: 512, 128>}, {pipeline_mode = #tpu.pipeline_mode<synchronous>, transform_indices = @transform_2, window_bounds = array<i64: 1, 128>}, {pipeline_mode = #tpu.pipeline_mode<synchronous>, transform_indices = @transform_3, window_bounds = array<i64: 128, 128>}, {pipeline_mode = #tpu.pipeline_mode<synchronous>, transform_indices = @transform_4, window_bounds = array<i64: 1, 128>}, {pipeline_mode = #tpu.pipeline_mode<synchronous>, transform_indices = @transform_5, window_bounds = array<i64: 128, 128>}, {pipeline_mode = #tpu.pipeline_mode<synchronous>, transform_indices = @transform_6, window_bounds = array<i64: 1, 128>}, {transform_indices = @transform_7, window_bounds = array<i64: 8, 128>}]} {
    %c0 = arith.constant 0 : index
    %c0_0 = arith.constant 0 : index
    %0 = vector.load %arg1[%c0, %c0_0] : memref<8x512xbf16, #tpu.memory_space<vmem>>, vector<8x512xbf16>
    %c0_1 = arith.constant 0 : index
    %c0_2 = arith.constant 0 : index
    %1 = vector.load %arg2[%c0_1, %c0_2] : memref<512x128xbf16, #tpu.memory_space<vmem>>, vector<512x128xbf16>
    %cst = arith.constant dense<0.000000e+00> : vector<8x128xf32>
    %2 = tpu.matmul %0, %1, %cst {dimension_numbers = #tpu.dot_dimension_numbers<[1], [0], [0], [1], [0, 0, 1, 1], [], []>} : vector<8x512xbf16>, vector<512x128xbf16>, vector<8x128xf32> -> vector<8x128xf32>
    %c0_3 = arith.constant 0 : index
    %c0_4 = arith.constant 0 : index
    %3 = vector.load %arg3[%c0_3, %c0_4] : memref<1x128xf32, #tpu.memory_space<vmem>>, vector<1x128xf32>
    %4 = vector.broadcast %3 : vector<1x128xf32> to vector<8x128xf32>
    %5 = arith.addf %2, %4 : vector<8x128xf32>
    %cst_5 = arith.constant 0.000000e+00 : f32
    %6 = vector.broadcast %cst_5 : f32 to vector<8x128xf32>
    %7 = arith.maximumf %5, %6 : vector<8x128xf32>
    %8 = arith.truncf %7 : vector<8x128xf32> to vector<8x128xbf16>
    %c0_6 = arith.constant 0 : index
    %c0_7 = arith.constant 0 : index
    %9 = vector.load %arg4[%c0_6, %c0_7] : memref<128x128xbf16, #tpu.memory_space<vmem>>, vector<128x128xbf16>
    %cst_8 = arith.constant dense<0.000000e+00> : vector<8x128xf32>
    %10 = tpu.matmul %8, %9, %cst_8 {dimension_numbers = #tpu.dot_dimension_numbers<[1], [0], [0], [1], [0, 0, 1, 1], [], []>} : vector<8x128xbf16>, vector<128x128xbf16>, vector<8x128xf32> -> vector<8x128xf32>
    %c0_9 = arith.constant 0 : index
    %c0_10 = arith.constant 0 : index
    %11 = vector.load %arg5[%c0_9, %c0_10] : memref<1x128xf32, #tpu.memory_space<vmem>>, vector<1x128xf32>
    %12 = vector.broadcast %11 : vector<1x128xf32> to vector<8x128xf32>
    %13 = arith.addf %10, %12 : vector<8x128xf32>
    %cst_11 = arith.constant 0.000000e+00 : f32
    %14 = vector.broadcast %cst_11 : f32 to vector<8x128xf32>
    %15 = arith.maximumf %13, %14 : vector<8x128xf32>
    %16 = arith.truncf %15 : vector<8x128xf32> to vector<8x128xbf16>
    %c0_12 = arith.constant 0 : index
    %c0_13 = arith.constant 0 : index
    %17 = vector.load %arg6[%c0_12, %c0_13] : memref<128x128xbf16, #tpu.memory_space<vmem>>, vector<128x128xbf16>
    %cst_14 = arith.constant dense<0.000000e+00> : vector<8x128xf32>
    %18 = tpu.matmul %16, %17, %cst_14 {dimension_numbers = #tpu.dot_dimension_numbers<[1], [0], [0], [1], [0, 0, 1, 1], [], []>} : vector<8x128xbf16>, vector<128x128xbf16>, vector<8x128xf32> -> vector<8x128xf32>
    %c0_15 = arith.constant 0 : index
    %c0_16 = arith.constant 0 : index
    %19 = vector.load %arg7[%c0_15, %c0_16] : memref<1x128xf32, #tpu.memory_space<vmem>>, vector<1x128xf32>
    %20 = vector.broadcast %19 : vector<1x128xf32> to vector<8x128xf32>
    %21 = arith.addf %18, %20 : vector<8x128xf32>
    %c0_17 = arith.constant 0 : index
    %c0_18 = arith.constant 0 : index
    %22 = vector.load %arg8[%c0_17, %c0_18] : memref<8x128xf32, #tpu.memory_space<vmem>>, vector<8x128xf32>
    tpu.vector_store %arg8[%c0_17, %c0_18], %21 {strides = array<i32>} : memref<8x128xf32, #tpu.memory_space<vmem>>, vector<8x128xf32>,
    return
  }
  func.func @transform_0(%arg0: i32) -> (i32, i32) {
    %c0_i32 = arith.constant 0 : i32
    %c0_i32_0 = arith.constant 0 : i32
    return %arg0, %c0_i32 : i32, i32
  }
  func.func @transform_1(%arg0: i32) -> (i32, i32) {
    %c0_i32 = arith.constant 0 : i32
    %c0_i32_0 = arith.constant 0 : i32
    %c0_i32_1 = arith.constant 0 : i32
    return %c0_i32, %c0_i32_0 : i32, i32
  }
  func.func @transform_2(%arg0: i32) -> (i32, i32) {
    %c0_i32 = arith.constant 0 : i32
    %c0_i32_0 = arith.constant 0 : i32
    %c0_i32_1 = arith.constant 0 : i32
    return %c0_i32, %c0_i32_0 : i32, i32
  }
  func.func @transform_3(%arg0: i32) -> (i32, i32) {
    %c0_i32 = arith.constant 0 : i32
    %c0_i32_0 = arith.constant 0 : i32
    %c0_i32_1 = arith.constant 0 : i32
    return %c0_i32, %c0_i32_0 : i32, i32
  }
  func.func @transform_4(%arg0: i32) -> (i32, i32) {
    %c0_i32 = arith.constant 0 : i32
    %c0_i32_0 = arith.constant 0 : i32
    %c0_i32_1 = arith.constant 0 : i32
    return %c0_i32, %c0_i32_0 : i32, i32
  }
  func.func @transform_5(%arg0: i32) -> (i32, i32) {
    %c0_i32 = arith.constant 0 : i32
    %c0_i32_0 = arith.constant 0 : i32
    %c0_i32_1 = arith.constant 0 : i32
    return %c0_i32, %c0_i32_0 : i32, i32
  }
  func.func @transform_6(%arg0: i32) -> (i32, i32) {
    %c0_i32 = arith.constant 0 : i32
    %c0_i32_0 = arith.constant 0 : i32
    %c0_i32_1 = arith.constant 0 : i32
    return %c0_i32, %c0_i32_0 : i32, i32
  }
  func.func @transform_7(%arg0: i32) -> (i32, i32) {
    %c0_i32 = arith.constant 0 : i32
    %c0_i32_0 = arith.constant 0 : i32
    return %arg0, %c0_i32 : i32, i32
  }
}

</mosaic_0001>

<llo_original>
// kernel: alexnet_forward.3
$region0: #{alexnet_forward.3}
  #allocation0 [shape = 'u32[]', space=smem, size = 0x4, offset = 0x4, fixed_abs, tag = 'smem constant byte address 0x4 - core index']
  #allocation1 [shape = 'u32[144,128]{1,0:T(1,128)}', space=vmem, size = 0x12000, scoped, tag = 'internal scratch']
  %s0 = inlined_call_operand.vmem [shape: bf16[4,400,128], index: 0, kind: input, shape index: {}]
  %s1 = inlined_call_operand.vmem [shape: bf16[128,128], index: 1, kind: input, shape index: {}]
  %s2 = inlined_call_operand.vmem [shape: f32[1,128], index: 2, kind: input, shape index: {}]
  %s3 = inlined_call_operand.vmem [shape: bf16[400,128], index: 3, kind: output, shape index: {}]
  %s4 = sld [smem:[#allocation0]]
  $region86: #{alexnet_forward.3} parent=0
    _
  %s6 = ssub.s32 1, %s4
  %s7 = scalar_select 0, %s6, %s4
  $region1: #{alexnet_forward.3} parent=0
    #allocation2 [shape = 'u8[409600]{0}', space=vmem, size = 0x64000, scoped, tag = 'input window, operand 0']
    loop: start=0, step=1, limit=4
    $region2: #{alexnet_forward.3} parent=1 // loop_pre_header
      _
    $region3: #{alexnet_forward.3} parent=1 // loop_header
      %s9 = sphi 0, %s13
      %p10 = scmp.ge.s32.totalorder %s9, 4
      %s19 = sphi 0, %s21
      %s22 = sphi 0, %s19
      %s23 = sphi 0, %s22
      %s39 = sphi 0, %s23
      %s43 = sphi 0, %s43
      %s45 = sphi 0, %s43
      %s46 = sphi 0, %s45
      %s60 = sphi 0, %s46
      %s64 = sphi 0, %s64
      %s66 = sphi 0, %s64
      %s67 = sphi 0, %s66
      %s81 = sphi 0, %s67
      %s87 = sphi 0, %s89
      %s90 = sphi 0, %s87
      %s91 = sphi 0, %s90
      %s107 = sphi 0, %s91
    $region4: #{alexnet_forward.3} parent=1 // loop_header_branch
      %12 = sbr.rel (%p10) target = $region8
    $region5: #{alexnet_forward.3} parent=1 // loop_body
      %s14 = ssub.s32 %s9, 1
      %s15 = ssub.s32 %s9, 2
      %s16 = sadd.s32 %s9, 1
      %s17 = ssub.s32 %s9, %s16
      %p18 = scmp.eq.s32.totalorder %s17, 0
      %s20 = sadd.s32 %s19, 1
      %s21 = scalar_select %p18, %s19, %s20
      %p24 = pneg %p18
      %p25 = scmp.eq.s32.totalorder %s9, 1
      %p26 = por %p24, %p25
      %p27 = scmp.ne.s32.totalorder %s19, %s22
      %p28 = scmp.eq.s32.totalorder %s9, 0
      %p29 = por %p27, %p28
      %p30 = scmp.ne.s32.totalorder %s19, %s22
      %p31 = scmp.eq.s32.totalorder %s14, 1
      %p32 = por %p30, %p31
      %p33 = scmp.ne.s32.totalorder %s22, %s23
      %p34 = scmp.eq.s32.totalorder %s14, 0
      %p35 = por %p33, %p34
      %p36 = scmp.ne.s32.totalorder %s22, %s23
      %p37 = scmp.eq.s32.totalorder %s15, 1
      %p38 = por %p36, %p37
      %p40 = scmp.ne.s32.totalorder %s23, %s39
      %p41 = scmp.eq.s32.totalorder %s15, 0
      %p42 = por %p40, %p41
      %s44 = sadd.s32 %s43, 1
      %p47 = scmp.eq.s32.totalorder %s9, 1
      %p48 = scmp.ne.s32.totalorder %s43, %s45
      %p49 = scmp.eq.s32.totalorder %s9, 0
      %p50 = por %p48, %p49
      %p51 = scmp.ne.s32.totalorder %s43, %s45
      %p52 = scmp.eq.s32.totalorder %s14, 1
      %p53 = por %p51, %p52
      %p54 = scmp.ne.s32.totalorder %s45, %s46
      %p55 = scmp.eq.s32.totalorder %s14, 0
      %p56 = por %p54, %p55
      %p57 = scmp.ne.s32.totalorder %s45, %s46
      %p58 = scmp.eq.s32.totalorder %s15, 1
      %p59 = por %p57, %p58
      %p61 = scmp.ne.s32.totalorder %s46, %s60
      %p62 = scmp.eq.s32.totalorder %s15, 0
      %p63 = por %p61, %p62
      %s65 = sadd.s32 %s64, 1
      %p68 = scmp.eq.s32.totalorder %s9, 1
      %p69 = scmp.ne.s32.totalorder %s64, %s66
      %p70 = scmp.eq.s32.totalorder %s9, 0
      %p71 = por %p69, %p70
      %p72 = scmp.ne.s32.totalorder %s64, %s66
      %p73 = scmp.eq.s32.totalorder %s14, 1
      %p74 = por %p72, %p73
      %p75 = scmp.ne.s32.totalorder %s66, %s67
      %p76 = scmp.eq.s32.totalorder %s14, 0
      %p77 = por %p75, %p76
      %p78 = scmp.ne.s32.totalorder %s66, %s67
      %p79 = scmp.eq.s32.totalorder %s15, 1
      %p80 = por %p78, %p79
      %p82 = scmp.ne.s32.totalorder %s67, %s81
      %p83 = scmp.eq.s32.totalorder %s15, 0
      %p84 = por %p82, %p83
      %s85 = ssub.s32 %s9, %s16
      %p86 = scmp.eq.s32.totalorder %s85, 0
      %s88 = sadd.s32 %s87, 1
      %s89 = scalar_select %p86, %s87, %s88
      %p92 = pneg %p86
      %p93 = scmp.eq.s32.totalorder %s9, 1
      %p94 = por %p92, %p93
      %p95 = scmp.ne.s32.totalorder %s87, %s90
      %p96 = scmp.eq.s32.totalorder %s9, 0
      %p97 = por %p95, %p96
      %p98 = scmp.ne.s32.totalorder %s87, %s90
      %p99 = scmp.eq.s32.totalorder %s14, 1
      %p100 = por %p98, %p99
      %p101 = scmp.ne.s32.totalorder %s90, %s91
      %p102 = scmp.eq.s32.totalorder %s14, 0
      %p103 = por %p101, %p102
      %p104 = scmp.ne.s32.totalorder %s90, %s91
      %p105 = scmp.eq.s32.totalorder %s15, 1
      %p106 = por %p104, %p105
      %p108 = scmp.ne.s32.totalorder %s91, %s107
      %p109 = scmp.eq.s32.totalorder %s15, 0
      %p110 = por %p108, %p109
      %p111 = scmp.le.s32.totalorder 1, %s9
      %p112 = scmp.lt.s32.totalorder %s9, 3
      %p113 = pnand %p111, %p112
      %p114 = pneg %p113
      // Predicated region
      $region9: #{alexnet_forward.3} parent=5 // pred_check
        _
      $region10: #{alexnet_forward.3} parent=5 // pred_check_branch
        %116 = sbr.rel (%p113) target = $region12
      $region11: #{alexnet_forward.3} parent=5 // pred_region
        %s117 = ssub.s32 %s9, 1
        // Predicated region
        $region13: #{alexnet_forward.3} parent=11 // pred_check
          %p118 = pneg %p56
        $region14: #{alexnet_forward.3} parent=11 // pred_check_branch
          %120 = sbr.rel (%p118) target = $region16
        $region15: #{alexnet_forward.3} parent=11 // pred_region
          _
        $region16: #{alexnet_forward.3} parent=11 // pred_fallthru
          _
        // Predicated region
        $region17: #{alexnet_forward.3} parent=11 // pred_check
          %p121 = pneg %p77
        $region18: #{alexnet_forward.3} parent=11 // pred_check_branch
          %123 = sbr.rel (%p121) target = $region20
        $region19: #{alexnet_forward.3} parent=11 // pred_region
          _
        $region20: #{alexnet_forward.3} parent=11 // pred_fallthru
          _
      $region12: #{alexnet_forward.3} parent=5 // pred_fallthru
        _
      %p124 = scmp.lt.s32.totalorder %s9, 2
      // Predicated region
      $region21: #{alexnet_forward.3} parent=5 // pred_check
        %p125 = pneg %p124
      $region22: #{alexnet_forward.3} parent=5 // pred_check_branch
        %127 = sbr.rel (%p125) target = $region24
      $region23: #{alexnet_forward.3} parent=5 // pred_region
        // Predicated region
        $region25: #{alexnet_forward.3} parent=23 // pred_check
          %p128 = pneg %p29
        $region26: #{alexnet_forward.3} parent=23 // pred_check_branch
          %130 = sbr.rel (%p128) target = $region28
        $region27: #{alexnet_forward.3} parent=23 // pred_region
          %s131 = sand.u32 %s19, 1
          %s132 = sand.u32 %s19, 1
          %s133 = smul.addr %s132, 400
          %s134 = scalar_lea.vmem [#allocation2], %s133
          %s135 = smul.u32 25, %s9
          %s136 = smul.addr %s135, 4
          %s137 = scalar_lea.vmem %s0, %s136
          // Predicated region
          $region29: #{alexnet_forward.3} parent=27 // pred_check
            _
          $region30: #{alexnet_forward.3} parent=27 // pred_check_branch
            %139 = sbr.rel (0) target = $region32
          $region31: #{alexnet_forward.3} parent=27 // pred_region
            // Predicated region
            $region33: #{alexnet_forward.3} parent=31 // pred_check
              _
            $region34: #{alexnet_forward.3} parent=31 // pred_check_branch
              %141 = sbr.rel target = $region36
            $region35: #{alexnet_forward.3} parent=31 // pred_region
              // Predicated region
              $region48: #{alexnet_forward.3} parent=35 // pred_check
                _
              $region49: #{alexnet_forward.3} parent=35 // pred_check_branch
                %355 = sbr.rel (0) target = $region51
              $region50: #{alexnet_forward.3} parent=35 // pred_region
                loop: start=0, step=1, limit=1
                $region52: #{alexnet_forward.3} parent=50 // loop_pre_header
                  _
                $region53: #{alexnet_forward.3} parent=50 // loop_header
                  %s357 = sphi 0, %s361
                  %p358 = scmp.ge.s32.totalorder %s357, 1
                  %s362 = sphi %s137, %s137
                  %s363 = sphi %s134, %s134
                $region54: #{alexnet_forward.3} parent=50 // loop_header_branch
                  %360 = sbr.rel (%p358) target = $region58
                $region55: #{alexnet_forward.3} parent=50 // loop_body
                  _
                $region56: #{alexnet_forward.3} parent=50 // loop_footer
                  %s361 = sadd.s32 1, %s357
                $region57: #{alexnet_forward.3} parent=50 // loop_footer_branch
                  %356 = sbr.rel target = $region53
                $region58: #{alexnet_forward.3} parent=50 // loop_exit
                  _
                %s365 = ssub.s32 16, 1
                loop: start=0, step=1, limit=1
                $region59: #{alexnet_forward.3} parent=50 // loop_pre_header
                  _
                $region60: #{alexnet_forward.3} parent=50 // loop_header
                  %s367 = sphi 0, %s371
                  %p368 = scmp.ge.s32.totalorder %s367, 1
                  %s372 = sphi %s137, %s137
                  %s373 = sphi %s134, %s134
                $region61: #{alexnet_forward.3} parent=50 // loop_header_branch
                  %370 = sbr.rel (%p368) target = $region65
                $region62: #{alexnet_forward.3} parent=50 // loop_body
                  %v374 = vld [vmem:[%s372] sm:%s365]
                  %375 = vst [vmem:[%s373] sm:%s365] %v374
                  %v376 = vld [vmem:[%s372 + $0x4] sm:%s365]
                  %377 = vst [vmem:[%s373 + $0x4] sm:%s365] %v376
                  %v378 = vld [vmem:[%s372 + $0x8] sm:%s365]
                  %379 = vst [vmem:[%s373 + $0x8] sm:%s365] %v378
                  %v380 = vld [vmem:[%s372 + $0xc] sm:%s365]
                  %381 = vst [vmem:[%s373 + $0xc] sm:%s365] %v380
                  %v382 = vld [vmem:[%s372 + $0x10] sm:%s365]
                  %383 = vst [vmem:[%s373 + $0x10] sm:%s365] %v382
                  %v384 = vld [vmem:[%s372 + $0x14] sm:%s365]
                  %385 = vst [vmem:[%s373 + $0x14] sm:%s365] %v384
                  %v386 = vld [vmem:[%s372 + $0x18] sm:%s365]
                  %387 = vst [vmem:[%s373 + $0x18] sm:%s365] %v386
                  %v388 = vld [vmem:[%s372 + $0x1c] sm:%s365]
                  %389 = vst [vmem:[%s373 + $0x1c] sm:%s365] %v388
                  %v390 = vld [vmem:[%s372 + $0x20] sm:%s365]
                  %391 = vst [vmem:[%s373 + $0x20] sm:%s365] %v390
                  %v392 = vld [vmem:[%s372 + $0x24] sm:%s365]
                  %393 = vst [vmem:[%s373 + $0x24] sm:%s365] %v392
                  %v394 = vld [vmem:[%s372 + $0x28] sm:%s365]
                  %395 = vst [vmem:[%s373 + $0x28] sm:%s365] %v394
                  %v396 = vld [vmem:[%s372 + $0x2c] sm:%s365]
                  %397 = vst [vmem:[%s373 + $0x2c] sm:%s365] %v396
                  %v398 = vld [vmem:[%s372 + $0x30] sm:%s365]
                  %399 = vst [vmem:[%s373 + $0x30] sm:%s365] %v398
                  %v400 = vld [vmem:[%s372 + $0x34] sm:%s365]
                  %401 = vst [vmem:[%s373 + $0x34] sm:%s365] %v400
                  %v402 = vld [vmem:[%s372 + $0x38] sm:%s365]
                  %403 = vst [vmem:[%s373 + $0x38] sm:%s365] %v402
                  %v404 = vld [vmem:[%s372 + $0x3c] sm:%s365]
                  %405 = vst [vmem:[%s373 + $0x3c] sm:%s365] %v404
                  %v406 = vld [vmem:[%s372 + $0x40] sm:%s365]
                  %407 = vst [vmem:[%s373 + $0x40] sm:%s365] %v406
                  %v408 = vld [vmem:[%s372 + $0x44] sm:%s365]
                  %409 = vst [vmem:[%s373 + $0x44] sm:%s365] %v408
                  %v410 = vld [vmem:[%s372 + $0x48] sm:%s365]
                  %411 = vst [vmem:[%s373 + $0x48] sm:%s365] %v410
                  %v412 = vld [vmem:[%s372 + $0x4c] sm:%s365]
                  %413 = vst [vmem:[%s373 + $0x4c] sm:%s365] %v412
                  %v414 = vld [vmem:[%s372 + $0x50] sm:%s365]
                  %415 = vst [vmem:[%s373 + $0x50] sm:%s365] %v414
                  %v416 = vld [vmem:[%s372 + $0x54] sm:%s365]
                  %417 = vst [vmem:[%s373 + $0x54] sm:%s365] %v416
                  %v418 = vld [vmem:[%s372 + $0x58] sm:%s365]
                  %419 = vst [vmem:[%s373 + $0x58] sm:%s365] %v418
                  %v420 = vld [vmem:[%s372 + $0x5c] sm:%s365]
                  %421 = vst [vmem:[%s373 + $0x5c] sm:%s365] %v420
                  %v422 = vld [vmem:[%s372 + $0x60] sm:%s365]
                  %423 = vst [vmem:[%s373 + $0x60] sm:%s365] %v422
                  %v424 = vld [vmem:[%s372 + $0xc8] sm:%s365]
                  %425 = vst [vmem:[%s373 + $0x64] sm:%s365] %v424
                  %v426 = vld [vmem:[%s372 + $0xcc] sm:%s365]
                  %427 = vst [vmem:[%s373 + $0x68] sm:%s365] %v426
                  %v428 = vld [vmem:[%s372 + $0xd0] sm:%s365]
                  %429 = vst [vmem:[%s373 + $0x6c] sm:%s365] %v428
                  %v430 = vld [vmem:[%s372 + $0xd4] sm:%s365]
                  %431 = vst [vmem:[%s373 + $0x70] sm:%s365] %v430
                  %v432 = vld [vmem:[%s372 + $0xd8] sm:%s365]
                  %433 = vst [vmem:[%s373 + $0x74] sm:%s365] %v432
                  %v434 = vld [vmem:[%s372 + $0xdc] sm:%s365]
                  %435 = vst [vmem:[%s373 + $0x78] sm:%s365] %v434
                  %v436 = vld [vmem:[%s372 + $0xe0] sm:%s365]
                  %437 = vst [vmem:[%s373 + $0x7c] sm:%s365] %v436
                  %v438 = vld [vmem:[%s372 + $0xe4] sm:%s365]
                  %439 = vst [vmem:[%s373 + $0x80] sm:%s365] %v438
                  %v440 = vld [vmem:[%s372 + $0xe8] sm:%s365]
                  %441 = vst [vmem:[%s373 + $0x84] sm:%s365] %v440
                  %v442 = vld [vmem:[%s372 + $0xec] sm:%s365]
                  %443 = vst [vmem:[%s373 + $0x88] sm:%s365] %v442
                  %v444 = vld [vmem:[%s372 + $0xf0] sm:%s365]
                  %445 = vst [vmem:[%s373 + $0x8c] sm:%s365] %v444
                  %v446 = vld [vmem:[%s372 + $0xf4] sm:%s365]
                  %447 = vst [vmem:[%s373 + $0x90] sm:%s365] %v446
                  %v448 = vld [vmem:[%s372 + $0xf8] sm:%s365]
                  %449 = vst [vmem:[%s373 + $0x94] sm:%s365] %v448
                  %v450 = vld [vmem:[%s372 + $0xfc] sm:%s365]
                  %451 = vst [vmem:[%s373 + $0x98] sm:%s365] %v450
                  %v452 = vld [vmem:[%s372 + $0x100] sm:%s365]
                  %453 = vst [vmem:[%s373 + $0x9c] sm:%s365] %v452
                  %v454 = vld [vmem:[%s372 + $0x104] sm:%s365]
                  %455 = vst [vmem:[%s373 + $0xa0] sm:%s365] %v454
                  %v456 = vld [vmem:[%s372 + $0x108] sm:%s365]
                  %457 = vst [vmem:[%s373 + $0xa4] sm:%s365] %v456
                  %v458 = vld [vmem:[%s372 + $0x10c] sm:%s365]
                  %459 = vst [vmem:[%s373 + $0xa8] sm:%s365] %v458
                  %v460 = vld [vmem:[%s372 + $0x110] sm:%s365]
                  %461 = vst [vmem:[%s373 + $0xac] sm:%s365] %v460
                  %v462 = vld [vmem:[%s372 + $0x114] sm:%s365]
                  %463 = vst [vmem:[%s373 + $0xb0] sm:%s365] %v462
                  %v464 = vld [vmem:[%s372 + $0x118] sm:%s365]
                  %465 = vst [vmem:[%s373 + $0xb4] sm:%s365] %v464
                  %v466 = vld [vmem:[%s372 + $0x11c] sm:%s365]
                  %467 = vst [vmem:[%s373 + $0xb8] sm:%s365] %v466
                  %v468 = vld [vmem:[%s372 + $0x120] sm:%s365]
                  %469 = vst [vmem:[%s373 + $0xbc] sm:%s365] %v468
                  %v470 = vld [vmem:[%s372 + $0x124] sm:%s365]
                  %471 = vst [vmem:[%s373 + $0xc0] sm:%s365] %v470
                  %v472 = vld [vmem:[%s372 + $0x128] sm:%s365]
                  %473 = vst [vmem:[%s373 + $0xc4] sm:%s365] %v472
                  %v474 = vld [vmem:[%s372 + $0x190] sm:%s365]
                  %475 = vst [vmem:[%s373 + $0xc8] sm:%s365] %v474
                  %v476 = vld [vmem:[%s372 + $0x194] sm:%s365]
                  %477 = vst [vmem:[%s373 + $0xcc] sm:%s365] %v476
                  %v478 = vld [vmem:[%s372 + $0x198] sm:%s365]
                  %479 = vst [vmem:[%s373 + $0xd0] sm:%s365] %v478
                  %v480 = vld [vmem:[%s372 + $0x19c] sm:%s365]
                  %481 = vst [vmem:[%s373 + $0xd4] sm:%s365] %v480
                  %v482 = vld [vmem:[%s372 + $0x1a0] sm:%s365]
                  %483 = vst [vmem:[%s373 + $0xd8] sm:%s365] %v482
                  %v484 = vld [vmem:[%s372 + $0x1a4] sm:%s365]
                  %485 = vst [vmem:[%s373 + $0xdc] sm:%s365] %v484
                  %v486 = vld [vmem:[%s372 + $0x1a8] sm:%s365]
                  %487 = vst [vmem:[%s373 + $0xe0] sm:%s365] %v486
                  %v488 = vld [vmem:[%s372 + $0x1ac] sm:%s365]
                  %489 = vst [vmem:[%s373 + $0xe4] sm:%s365] %v488
                  %v490 = vld [vmem:[%s372 + $0x1b0] sm:%s365]
                  %491 = vst [vmem:[%s373 + $0xe8] sm:%s365] %v490
                  %v492 = vld [vmem:[%s372 + $0x1b4] sm:%s365]
                  %493 = vst [vmem:[%s373 + $0xec] sm:%s365] %v492
                  %v494 = vld [vmem:[%s372 + $0x1b8] sm:%s365]
                  %495 = vst [vmem:[%s373 + $0xf0] sm:%s365] %v494
                  %v496 = vld [vmem:[%s372 + $0x1bc] sm:%s365]
                  %497 = vst [vmem:[%s373 + $0xf4] sm:%s365] %v496
                  %v498 = vld [vmem:[%s372 + $0x1c0] sm:%s365]
                  %499 = vst [vmem:[%s373 + $0xf8] sm:%s365] %v498
                  %v500 = vld [vmem:[%s372 + $0x1c4] sm:%s365]
                  %501 = vst [vmem:[%s373 + $0xfc] sm:%s365] %v500
                  %v502 = vld [vmem:[%s372 + $0x1c8] sm:%s365]
                  %503 = vst [vmem:[%s373 + $0x100] sm:%s365] %v502
                  %v504 = vld [vmem:[%s372 + $0x1cc] sm:%s365]
                  %505 = vst [vmem:[%s373 + $0x104] sm:%s365] %v504
                  %v506 = vld [vmem:[%s372 + $0x1d0] sm:%s365]
                  %507 = vst [vmem:[%s373 + $0x108] sm:%s365] %v506
                  %v508 = vld [vmem:[%s372 + $0x1d4] sm:%s365]
                  %509 = vst [vmem:[%s373 + $0x10c] sm:%s365] %v508
                  %v510 = vld [vmem:[%s372 + $0x1d8] sm:%s365]
                  %511 = vst [vmem:[%s373 + $0x110] sm:%s365] %v510
                  %v512 = vld [vmem:[%s372 + $0x1dc] sm:%s365]
                  %513 = vst [vmem:[%s373 + $0x114] sm:%s365] %v512
                  %v514 = vld [vmem:[%s372 + $0x1e0] sm:%s365]
                  %515 = vst [vmem:[%s373 + $0x118] sm:%s365] %v514
                  %v516 = vld [vmem:[%s372 + $0x1e4] sm:%s365]
                  %517 = vst [vmem:[%s373 + $0x11c] sm:%s365] %v516
                  %v518 = vld [vmem:[%s372 + $0x1e8] sm:%s365]
                  %519 = vst [vmem:[%s373 + $0x120] sm:%s365] %v518
                  %v520 = vld [vmem:[%s372 + $0x1ec] sm:%s365]
                  %521 = vst [vmem:[%s373 + $0x124] sm:%s365] %v520
                  %v522 = vld [vmem:[%s372 + $0x1f0] sm:%s365]
                  %523 = vst [vmem:[%s373 + $0x128] sm:%s365] %v522
                  %v524 = vld [vmem:[%s372 + $0x258] sm:%s365]
                  %525 = vst [vmem:[%s373 + $0x12c] sm:%s365] %v524
                  %v526 = vld [vmem:[%s372 + $0x25c] sm:%s365]
                  %527 = vst [vmem:[%s373 + $0x130] sm:%s365] %v526
                  %v528 = vld [vmem:[%s372 + $0x260] sm:%s365]
                  %529 = vst [vmem:[%s373 + $0x134] sm:%s365] %v528
                  %v530 = vld [vmem:[%s372 + $0x264] sm:%s365]
                  %531 = vst [vmem:[%s373 + $0x138] sm:%s365] %v530
                  %v532 = vld [vmem:[%s372 + $0x268] sm:%s365]
                  %533 = vst [vmem:[%s373 + $0x13c] sm:%s365] %v532
                  %v534 = vld [vmem:[%s372 + $0x26c] sm:%s365]
                  %535 = vst [vmem:[%s373 + $0x140] sm:%s365] %v534
                  %v536 = vld [vmem:[%s372 + $0x270] sm:%s365]
                  %537 = vst [vmem:[%s373 + $0x144] sm:%s365] %v536
                  %v538 = vld [vmem:[%s372 + $0x274] sm:%s365]
                  %539 = vst [vmem:[%s373 + $0x148] sm:%s365] %v538
                  %v540 = vld [vmem:[%s372 + $0x278] sm:%s365]
                  %541 = vst [vmem:[%s373 + $0x14c] sm:%s365] %v540
                  %v542 = vld [vmem:[%s372 + $0x27c] sm:%s365]
                  %543 = vst [vmem:[%s373 + $0x150] sm:%s365] %v542
                  %v544 = vld [vmem:[%s372 + $0x280] sm:%s365]
                  %545 = vst [vmem:[%s373 + $0x154] sm:%s365] %v544
                  %v546 = vld [vmem:[%s372 + $0x284] sm:%s365]
                  %547 = vst [vmem:[%s373 + $0x158] sm:%s365] %v546
                  %v548 = vld [vmem:[%s372 + $0x288] sm:%s365]
                  %549 = vst [vmem:[%s373 + $0x15c] sm:%s365] %v548
                  %v550 = vld [vmem:[%s372 + $0x28c] sm:%s365]
                  %551 = vst [vmem:[%s373 + $0x160] sm:%s365] %v550
                  %v552 = vld [vmem:[%s372 + $0x290] sm:%s365]
                  %553 = vst [vmem:[%s373 + $0x164] sm:%s365] %v552
                  %v554 = vld [vmem:[%s372 + $0x294] sm:%s365]
                  %555 = vst [vmem:[%s373 + $0x168] sm:%s365] %v554
                  %v556 = vld [vmem:[%s372 + $0x298] sm:%s365]
                  %557 = vst [vmem:[%s373 + $0x16c] sm:%s365] %v556
                  %v558 = vld [vmem:[%s372 + $0x29c] sm:%s365]
                  %559 = vst [vmem:[%s373 + $0x170] sm:%s365] %v558
                  %v560 = vld [vmem:[%s372 + $0x2a0] sm:%s365]
                  %561 = vst [vmem:[%s373 + $0x174] sm:%s365] %v560
                  %v562 = vld [vmem:[%s372 + $0x2a4] sm:%s365]
                  %563 = vst [vmem:[%s373 + $0x178] sm:%s365] %v562
                  %v564 = vld [vmem:[%s372 + $0x2a8] sm:%s365]
                  %565 = vst [vmem:[%s373 + $0x17c] sm:%s365] %v564
                  %v566 = vld [vmem:[%s372 + $0x2ac] sm:%s365]
                  %567 = vst [vmem:[%s373 + $0x180] sm:%s365] %v566
                  %v568 = vld [vmem:[%s372 + $0x2b0] sm:%s365]
                  %569 = vst [vmem:[%s373 + $0x184] sm:%s365] %v568
                  %v570 = vld [vmem:[%s372 + $0x2b4] sm:%s365]
                  %571 = vst [vmem:[%s373 + $0x188] sm:%s365] %v570
                  %v572 = vld [vmem:[%s372 + $0x2b8] sm:%s365]
                  %573 = vst [vmem:[%s373 + $0x18c] sm:%s365] %v572
                $region63: #{alexnet_forward.3} parent=50 // loop_footer
                  %s371 = sadd.s32 1, %s367
                $region64: #{alexnet_forward.3} parent=50 // loop_footer_branch
                  %366 = sbr.rel target = $region60
                $region65: #{alexnet_forward.3} parent=50 // loop_exit
                  _
              $region51: #{alexnet_forward.3} parent=35 // pred_fallthru
                _
            $region36: #{alexnet_forward.3} parent=31 // pred_fallthru
              _
            // Predicated region
            $region37: #{alexnet_forward.3} parent=31 // pred_check
              _
            $region38: #{alexnet_forward.3} parent=31 // pred_check_branch
              %143 = sbr.rel (0) target = $region40
            $region39: #{alexnet_forward.3} parent=31 // pred_region
              %s145 = ssub.s32 16, 1
              loop: start=0, step=1, limit=1
              $region41: #{alexnet_forward.3} parent=39 // loop_pre_header
                _
              $region42: #{alexnet_forward.3} parent=39 // loop_header
                %s147 = sphi 0, %s151
                %p148 = scmp.ge.s32.totalorder %s147, 1
                %s152 = sphi %s137, %s137
                %s153 = sphi %s134, %s134
              $region43: #{alexnet_forward.3} parent=39 // loop_header_branch
                %150 = sbr.rel (%p148) target = $region47
              $region44: #{alexnet_forward.3} parent=39 // loop_body
                %v154 = vld [vmem:[%s152] sm:%s145]
                %155 = vst [vmem:[%s153] sm:%s145] %v154
                %v156 = vld [vmem:[%s152 + $0x4] sm:%s145]
                %157 = vst [vmem:[%s153 + $0x4] sm:%s145] %v156
                %v158 = vld [vmem:[%s152 + $0x8] sm:%s145]
                %159 = vst [vmem:[%s153 + $0x8] sm:%s145] %v158
                %v160 = vld [vmem:[%s152 + $0xc] sm:%s145]
                %161 = vst [vmem:[%s153 + $0xc] sm:%s145] %v160
                %v162 = vld [vmem:[%s152 + $0x10] sm:%s145]
                %163 = vst [vmem:[%s153 + $0x10] sm:%s145] %v162
                %v164 = vld [vmem:[%s152 + $0x14] sm:%s145]
                %165 = vst [vmem:[%s153 + $0x14] sm:%s145] %v164
                %v166 = vld [vmem:[%s152 + $0x18] sm:%s145]
                %167 = vst [vmem:[%s153 + $0x18] sm:%s145] %v166
                %v168 = vld [vmem:[%s152 + $0x1c] sm:%s145]
                %169 = vst [vmem:[%s153 + $0x1c] sm:%s145] %v168
                %v170 = vld [vmem:[%s152 + $0x20] sm:%s145]
                %171 = vst [vmem:[%s153 + $0x20] sm:%s145] %v170
                %v172 = vld [vmem:[%s152 + $0x24] sm:%s145]
                %173 = vst [vmem:[%s153 + $0x24] sm:%s145] %v172
                %v174 = vld [vmem:[%s152 + $0x28] sm:%s145]
                %175 = vst [vmem:[%s153 + $0x28] sm:%s145] %v174
                %v176 = vld [vmem:[%s152 + $0x2c] sm:%s145]
                %177 = vst [vmem:[%s153 + $0x2c] sm:%s145] %v176
                %v178 = vld [vmem:[%s152 + $0x30] sm:%s145]
                %179 = vst [vmem:[%s153 + $0x30] sm:%s145] %v178
                %v180 = vld [vmem:[%s152 + $0x34] sm:%s145]
                %181 = vst [vmem:[%s153 + $0x34] sm:%s145] %v180
                %v182 = vld [vmem:[%s152 + $0x38] sm:%s145]
                %183 = vst [vmem:[%s153 + $0x38] sm:%s145] %v182
                %v184 = vld [vmem:[%s152 + $0x3c] sm:%s145]
                %185 = vst [vmem:[%s153 + $0x3c] sm:%s145] %v184
                %v186 = vld [vmem:[%s152 + $0x40] sm:%s145]
                %187 = vst [vmem:[%s153 + $0x40] sm:%s145] %v186
                %v188 = vld [vmem:[%s152 + $0x44] sm:%s145]
                %189 = vst [vmem:[%s153 + $0x44] sm:%s145] %v188
                %v190 = vld [vmem:[%s152 + $0x48] sm:%s145]
                %191 = vst [vmem:[%s153 + $0x48] sm:%s145] %v190
                %v192 = vld [vmem:[%s152 + $0x4c] sm:%s145]
                %193 = vst [vmem:[%s153 + $0x4c] sm:%s145] %v192
                %v194 = vld [vmem:[%s152 + $0x50] sm:%s145]
                %195 = vst [vmem:[%s153 + $0x50] sm:%s145] %v194
                %v196 = vld [vmem:[%s152 + $0x54] sm:%s145]
                %197 = vst [vmem:[%s153 + $0x54] sm:%s145] %v196
                %v198 = vld [vmem:[%s152 + $0x58] sm:%s145]
                %199 = vst [vmem:[%s153 + $0x58] sm:%s145] %v198
                %v200 = vld [vmem:[%s152 + $0x5c] sm:%s145]
                %201 = vst [vmem:[%s153 + $0x5c] sm:%s145] %v200
                %v202 = vld [vmem:[%s152 + $0x60] sm:%s145]
                %203 = vst [vmem:[%s153 + $0x60] sm:%s145] %v202
                %v204 = vld [vmem:[%s152 + $0xc8] sm:%s145]
                %205 = vst [vmem:[%s153 + $0x64] sm:%s145] %v204
                %v206 = vld [vmem:[%s152 + $0xcc] sm:%s145]
                %207 = vst [vmem:[%s153 + $0x68] sm:%s145] %v206
                %v208 = vld [vmem:[%s152 + $0xd0] sm:%s145]
                %209 = vst [vmem:[%s153 + $0x6c] sm:%s145] %v208
                %v210 = vld [vmem:[%s152 + $0xd4] sm:%s145]
                %211 = vst [vmem:[%s153 + $0x70] sm:%s145] %v210
                %v212 = vld [vmem:[%s152 + $0xd8] sm:%s145]
                %213 = vst [vmem:[%s153 + $0x74] sm:%s145] %v212
                %v214 = vld [vmem:[%s152 + $0xdc] sm:%s145]
                %215 = vst [vmem:[%s153 + $0x78] sm:%s145] %v214
                %v216 = vld [vmem:[%s152 + $0xe0] sm:%s145]
                %217 = vst [vmem:[%s153 + $0x7c] sm:%s145] %v216
                %v218 = vld [vmem:[%s152 + $0xe4] sm:%s145]
                %219 = vst [vmem:[%s153 + $0x80] sm:%s145] %v218
                %v220 = vld [vmem:[%s152 + $0xe8] sm:%s145]
                %221 = vst [vmem:[%s153 + $0x84] sm:%s145] %v220
                %v222 = vld [vmem:[%s152 + $0xec] sm:%s145]
                %223 = vst [vmem:[%s153 + $0x88] sm:%s145] %v222
                %v224 = vld [vmem:[%s152 + $0xf0] sm:%s145]
                %225 = vst [vmem:[%s153 + $0x8c] sm:%s145] %v224
                %v226 = vld [vmem:[%s152 + $0xf4] sm:%s145]
                %227 = vst [vmem:[%s153 + $0x90] sm:%s145] %v226
                %v228 = vld [vmem:[%s152 + $0xf8] sm:%s145]
                %229 = vst [vmem:[%s153 + $0x94] sm:%s145] %v228
                %v230 = vld [vmem:[%s152 + $0xfc] sm:%s145]
                %231 = vst [vmem:[%s153 + $0x98] sm:%s145] %v230
                %v232 = vld [vmem:[%s152 + $0x100] sm:%s145]
                %233 = vst [vmem:[%s153 + $0x9c] sm:%s145] %v232
                %v234 = vld [vmem:[%s152 + $0x104] sm:%s145]
                %235 = vst [vmem:[%s153 + $0xa0] sm:%s145] %v234
                %v236 = vld [vmem:[%s152 + $0x108] sm:%s145]
                %237 = vst [vmem:[%s153 + $0xa4] sm:%s145] %v236
                %v238 = vld [vmem:[%s152 + $0x10c] sm:%s145]
                %239 = vst [vmem:[%s153 + $0xa8] sm:%s145] %v238
                %v240 = vld [vmem:[%s152 + $0x110] sm:%s145]
                %241 = vst [vmem:[%s153 + $0xac] sm:%s145] %v240
                %v242 = vld [vmem:[%s152 + $0x114] sm:%s145]
                %243 = vst [vmem:[%s153 + $0xb0] sm:%s145] %v242
                %v244 = vld [vmem:[%s152 + $0x118] sm:%s145]
                %245 = vst [vmem:[%s153 + $0xb4] sm:%s145] %v244
                %v246 = vld [vmem:[%s152 + $0x11c] sm:%s145]
                %247 = vst [vmem:[%s153 + $0xb8] sm:%s145] %v246
                %v248 = vld [vmem:[%s152 + $0x120] sm:%s145]
                %249 = vst [vmem:[%s153 + $0xbc] sm:%s145] %v248
                %v250 = vld [vmem:[%s152 + $0x124] sm:%s145]
                %251 = vst [vmem:[%s153 + $0xc0] sm:%s145] %v250
                %v252 = vld [vmem:[%s152 + $0x128] sm:%s145]
                %253 = vst [vmem:[%s153 + $0xc4] sm:%s145] %v252
                %v254 = vld [vmem:[%s152 + $0x190] sm:%s145]
                %255 = vst [vmem:[%s153 + $0xc8] sm:%s145] %v254
                %v256 = vld [vmem:[%s152 + $0x194] sm:%s145]
                %257 = vst [vmem:[%s153 + $0xcc] sm:%s145] %v256
                %v258 = vld [vmem:[%s152 + $0x198] sm:%s145]
                %259 = vst [vmem:[%s153 + $0xd0] sm:%s145] %v258
                %v260 = vld [vmem:[%s152 + $0x19c] sm:%s145]
                %261 = vst [vmem:[%s153 + $0xd4] sm:%s145] %v260
                %v262 = vld [vmem:[%s152 + $0x1a0] sm:%s145]
                %263 = vst [vmem:[%s153 + $0xd8] sm:%s145] %v262
                %v264 = vld [vmem:[%s152 + $0x1a4] sm:%s145]
                %265 = vst [vmem:[%s153 + $0xdc] sm:%s145] %v264
                %v266 = vld [vmem:[%s152 + $0x1a8] sm:%s145]
                %267 = vst [vmem:[%s153 + $0xe0] sm:%s145] %v266
                %v268 = vld [vmem:[%s152 + $0x1ac] sm:%s145]
                %269 = vst [vmem:[%s153 + $0xe4] sm:%s145] %v268
                %v270 = vld [vmem:[%s152 + $0x1b0] sm:%s145]
                %271 = vst [vmem:[%s153 + $0xe8] sm:%s145] %v270
                %v272 = vld [vmem:[%s152 + $0x1b4] sm:%s145]
                %273 = vst [vmem:[%s153 + $0xec] sm:%s145] %v272
                %v274 = vld [vmem:[%s152 + $0x1b8] sm:%s145]
                %275 = vst [vmem:[%s153 + $0xf0] sm:%s145] %v274
                %v276 = vld [vmem:[%s152 + $0x1bc] sm:%s145]
                %277 = vst [vmem:[%s153 + $0xf4] sm:%s145] %v276
                %v278 = vld [vmem:[%s152 + $0x1c0] sm:%s145]
                %279 = vst [vmem:[%s153 + $0xf8] sm:%s145] %v278
                %v280 = vld [vmem:[%s152 + $0x1c4] sm:%s145]
                %281 = vst [vmem:[%s153 + $0xfc] sm:%s145] %v280
                %v282 = vld [vmem:[%s152 + $0x1c8] sm:%s145]
                %283 = vst [vmem:[%s153 + $0x100] sm:%s145] %v282
                %v284 = vld [vmem:[%s152 + $0x1cc] sm:%s145]
                %285 = vst [vmem:[%s153 + $0x104] sm:%s145] %v284
                %v286 = vld [vmem:[%s152 + $0x1d0] sm:%s145]
                %287 = vst [vmem:[%s153 + $0x108] sm:%s145] %v286
                %v288 = vld [vmem:[%s152 + $0x1d4] sm:%s145]
                %289 = vst [vmem:[%s153 + $0x10c] sm:%s145] %v288
                %v290 = vld [vmem:[%s152 + $0x1d8] sm:%s145]
                %291 = vst [vmem:[%s153 + $0x110] sm:%s145] %v290
                %v292 = vld [vmem:[%s152 + $0x1dc] sm:%s145]
                %293 = vst [vmem:[%s153 + $0x114] sm:%s145] %v292
                %v294 = vld [vmem:[%s152 + $0x1e0] sm:%s145]
                %295 = vst [vmem:[%s153 + $0x118] sm:%s145] %v294
                %v296 = vld [vmem:[%s152 + $0x1e4] sm:%s145]
                %297 = vst [vmem:[%s153 + $0x11c] sm:%s145] %v296
                %v298 = vld [vmem:[%s152 + $0x1e8] sm:%s145]
                %299 = vst [vmem:[%s153 + $0x120] sm:%s145] %v298
                %v300 = vld [vmem:[%s152 + $0x1ec] sm:%s145]
                %301 = vst [vmem:[%s153 + $0x124] sm:%s145] %v300
                %v302 = vld [vmem:[%s152 + $0x1f0] sm:%s145]
                %303 = vst [vmem:[%s153 + $0x128] sm:%s145] %v302
                %v304 = vld [vmem:[%s152 + $0x258] sm:%s145]
                %305 = vst [vmem:[%s153 + $0x12c] sm:%s145] %v304
                %v306 = vld [vmem:[%s152 + $0x25c] sm:%s145]
                %307 = vst [vmem:[%s153 + $0x130] sm:%s145] %v306
                %v308 = vld [vmem:[%s152 + $0x260] sm:%s145]
                %309 = vst [vmem:[%s153 + $0x134] sm:%s145] %v308
                %v310 = vld [vmem:[%s152 + $0x264] sm:%s145]
                %311 = vst [vmem:[%s153 + $0x138] sm:%s145] %v310
                %v312 = vld [vmem:[%s152 + $0x268] sm:%s145]
                %313 = vst [vmem:[%s153 + $0x13c] sm:%s145] %v312
                %v314 = vld [vmem:[%s152 + $0x26c] sm:%s145]
                %315 = vst [vmem:[%s153 + $0x140] sm:%s145] %v314
                %v316 = vld [vmem:[%s152 + $0x270] sm:%s145]
                %317 = vst [vmem:[%s153 + $0x144] sm:%s145] %v316
                %v318 = vld [vmem:[%s152 + $0x274] sm:%s145]
                %319 = vst [vmem:[%s153 + $0x148] sm:%s145] %v318
                %v320 = vld [vmem:[%s152 + $0x278] sm:%s145]
                %321 = vst [vmem:[%s153 + $0x14c] sm:%s145] %v320
                %v322 = vld [vmem:[%s152 + $0x27c] sm:%s145]
                %323 = vst [vmem:[%s153 + $0x150] sm:%s145] %v322
                %v324 = vld [vmem:[%s152 + $0x280] sm:%s145]
                %325 = vst [vmem:[%s153 + $0x154] sm:%s145] %v324
                %v326 = vld [vmem:[%s152 + $0x284] sm:%s145]
                %327 = vst [vmem:[%s153 + $0x158] sm:%s145] %v326
                %v328 = vld [vmem:[%s152 + $0x288] sm:%s145]
                %329 = vst [vmem:[%s153 + $0x15c] sm:%s145] %v328
                %v330 = vld [vmem:[%s152 + $0x28c] sm:%s145]
                %331 = vst [vmem:[%s153 + $0x160] sm:%s145] %v330
                %v332 = vld [vmem:[%s152 + $0x290] sm:%s145]
                %333 = vst [vmem:[%s153 + $0x164] sm:%s145] %v332
                %v334 = vld [vmem:[%s152 + $0x294] sm:%s145]
                %335 = vst [vmem:[%s153 + $0x168] sm:%s145] %v334
                %v336 = vld [vmem:[%s152 + $0x298] sm:%s145]
                %337 = vst [vmem:[%s153 + $0x16c] sm:%s145] %v336
                %v338 = vld [vmem:[%s152 + $0x29c] sm:%s145]
                %339 = vst [vmem:[%s153 + $0x170] sm:%s145] %v338
                %v340 = vld [vmem:[%s152 + $0x2a0] sm:%s145]
                %341 = vst [vmem:[%s153 + $0x174] sm:%s145] %v340
                %v342 = vld [vmem:[%s152 + $0x2a4] sm:%s145]
                %343 = vst [vmem:[%s153 + $0x178] sm:%s145] %v342
                %v344 = vld [vmem:[%s152 + $0x2a8] sm:%s145]
                %345 = vst [vmem:[%s153 + $0x17c] sm:%s145] %v344
                %v346 = vld [vmem:[%s152 + $0x2ac] sm:%s145]
                %347 = vst [vmem:[%s153 + $0x180] sm:%s145] %v346
                %v348 = vld [vmem:[%s152 + $0x2b0] sm:%s145]
                %349 = vst [vmem:[%s153 + $0x184] sm:%s145] %v348
                %v350 = vld [vmem:[%s152 + $0x2b4] sm:%s145]
                %351 = vst [vmem:[%s153 + $0x188] sm:%s145] %v350
                %v352 = vld [vmem:[%s152 + $0x2b8] sm:%s145]
                %353 = vst [vmem:[%s153 + $0x18c] sm:%s145] %v352
              $region45: #{alexnet_forward.3} parent=39 // loop_footer
                %s151 = sadd.s32 1, %s147
              $region46: #{alexnet_forward.3} parent=39 // loop_footer_branch
                %146 = sbr.rel target = $region42
              $region47: #{alexnet_forward.3} parent=39 // loop_exit
                _
            $region40: #{alexnet_forward.3} parent=31 // pred_fallthru
              _
          $region32: #{alexnet_forward.3} parent=27 // pred_fallthru
            _
          %574 = vnop
        $region28: #{alexnet_forward.3} parent=23 // pred_fallthru
          _
      $region24: #{alexnet_forward.3} parent=5 // pred_fallthru
        _
      %p575 = scmp.le.s32.totalorder 1, %s9
      %p576 = scmp.lt.s32.totalorder %s9, 3
      %p577 = pnand %p575, %p576
      %p578 = pneg %p577
      // Predicated region
      $region66: #{alexnet_forward.3} parent=5 // pred_check
        _
      $region67: #{alexnet_forward.3} parent=5 // pred_check_branch
        %580 = sbr.rel (%p577) target = $region69
      $region68: #{alexnet_forward.3} parent=5 // pred_region
        %s581 = ssub.s32 %s9, 1
        %s582 = sand.u32 %s22, 1
        %s583 = sand.u32 %s22, 1
        %s584 = smul.addr %s583, 400
        %s585 = scalar_lea.vmem [#allocation2], %s584
        // Predicated region
        $region70: #{alexnet_forward.3} parent=68 // pred_check
          %p586 = pneg %p35
        $region71: #{alexnet_forward.3} parent=68 // pred_check_branch
          %588 = sbr.rel (%p586) target = $region73
        $region72: #{alexnet_forward.3} parent=68 // pred_region
          _
        $region73: #{alexnet_forward.3} parent=68 // pred_fallthru
          _
        %s589 = sand.u32 %s22, 1
        %s590 = sand.u32 %s22, 1
        %s591 = smul.addr %s590, 400
        %s592 = scalar_lea.vmem [#allocation2], %s591
        %p593 = pneg %p35
        %p594 = pneg %p32
        %p595 = pneg %p56
        %p596 = pneg %p53
        %p597 = pneg %p77
        %p598 = pneg %p74
        %p599 = pneg %p103
        %p600 = pneg %p100
        %s601 = smul.u32 25, %s14
        %p602 = scmp.lt.s32.totalorder %s601, 49
        %s603 = scalar_select %p602, %s601, 49
        %s604 = smul.addr %s603, 4
        %s605 = scalar_lea.vmem %s3, %s604
        %s606 = smul.u32 25, %s14
        %s607 = smul.u32 25, %s14
        %p608 = scmp.lt.s32.totalorder %s607, 49
        %s609 = scalar_select %p608, %s607, 49
        %s610 = smul.addr %s609, 4
        %s611 = scalar_lea.vmem %s3, %s610
        %s612 = smul.u32 25, %s14
        %v614 = vld [vmem:[%s585] sm:$0xf]
        %v615 = vld [vmem:[%s585 + $0x4] sm:$0xf]
        %v616 = vld [vmem:[%s585 + $0x8] sm:$0xf]
        %v617 = vld [vmem:[%s585 + $0xc] sm:$0xf]
        %v618 = vld [vmem:[%s585 + $0x10] sm:$0xf]
        %v619 = vld [vmem:[%s585 + $0x14] sm:$0xf]
        %v620 = vld [vmem:[%s585 + $0x18] sm:$0xf]
        %v621 = vld [vmem:[%s585 + $0x1c] sm:$0xf]
        %v622 = vld [vmem:[%s585 + $0x20] sm:$0xf]
        %v623 = vld [vmem:[%s585 + $0x24] sm:$0xf]
        %v624 = vld [vmem:[%s585 + $0x28] sm:$0xf]
        %v625 = vld [vmem:[%s585 + $0x2c] sm:$0xf]
        %v626 = vld [vmem:[%s585 + $0x30] sm:$0xf]
        %v627 = vld [vmem:[%s585 + $0x34] sm:$0xf]
        %v628 = vld [vmem:[%s585 + $0x38] sm:$0xf]
        %v629 = vld [vmem:[%s585 + $0x3c] sm:$0xf]
        %v630 = vld [vmem:[%s585 + $0x40] sm:$0xf]
        %v631 = vld [vmem:[%s585 + $0x44] sm:$0xf]
        %v632 = vld [vmem:[%s585 + $0x48] sm:$0xf]
        %v633 = vld [vmem:[%s585 + $0x4c] sm:$0xf]
        %v634 = vld [vmem:[%s585 + $0x50] sm:$0xf]
        %v635 = vld [vmem:[%s585 + $0x54] sm:$0xf]
        %v636 = vld [vmem:[%s585 + $0x58] sm:$0xf]
        %v637 = vld [vmem:[%s585 + $0x5c] sm:$0xf]
        %v638 = vld [vmem:[%s585 + $0x60] sm:$0xf]
        %s639 = scalar_lea.vmem %s585, 100 [#allocation2]
        %v640 = vld [vmem:[%s639] sm:$0xf]
        %v641 = vld [vmem:[%s639 + $0x4] sm:$0xf]
        %v642 = vld [vmem:[%s639 + $0x8] sm:$0xf]
        %v643 = vld [vmem:[%s639 + $0xc] sm:$0xf]
        %v644 = vld [vmem:[%s639 + $0x10] sm:$0xf]
        %v645 = vld [vmem:[%s639 + $0x14] sm:$0xf]
        %v646 = vld [vmem:[%s639 + $0x18] sm:$0xf]
        %v647 = vld [vmem:[%s639 + $0x1c] sm:$0xf]
        %v648 = vld [vmem:[%s639 + $0x20] sm:$0xf]
        %v649 = vld [vmem:[%s639 + $0x24] sm:$0xf]
        %v650 = vld [vmem:[%s639 + $0x28] sm:$0xf]
        %v651 = vld [vmem:[%s639 + $0x2c] sm:$0xf]
        %v652 = vld [vmem:[%s639 + $0x30] sm:$0xf]
        %v653 = vld [vmem:[%s639 + $0x34] sm:$0xf]
        %v654 = vld [vmem:[%s639 + $0x38] sm:$0xf]
        %v655 = vld [vmem:[%s639 + $0x3c] sm:$0xf]
        %v656 = vld [vmem:[%s639 + $0x40] sm:$0xf]
        %v657 = vld [vmem:[%s639 + $0x44] sm:$0xf]
        %v658 = vld [vmem:[%s639 + $0x48] sm:$0xf]
        %v659 = vld [vmem:[%s639 + $0x4c] sm:$0xf]
        %v660 = vld [vmem:[%s639 + $0x50] sm:$0xf]
        %v661 = vld [vmem:[%s639 + $0x54] sm:$0xf]
        %v662 = vld [vmem:[%s639 + $0x58] sm:$0xf]
        %v663 = vld [vmem:[%s639 + $0x5c] sm:$0xf]
        %v664 = vld [vmem:[%s639 + $0x60] sm:$0xf]
        %s665 = scalar_lea.vmem %s585, 200 [#allocation2]
        %v666 = vld [vmem:[%s665] sm:$0xf]
        %v667 = vld [vmem:[%s665 + $0x4] sm:$0xf]
        %v668 = vld [vmem:[%s665 + $0x8] sm:$0xf]
        %v669 = vld [vmem:[%s665 + $0xc] sm:$0xf]
        %v670 = vld [vmem:[%s665 + $0x10] sm:$0xf]
        %v671 = vld [vmem:[%s665 + $0x14] sm:$0xf]
        %v672 = vld [vmem:[%s665 + $0x18] sm:$0xf]
        %v673 = vld [vmem:[%s665 + $0x1c] sm:$0xf]
        %v674 = vld [vmem:[%s665 + $0x20] sm:$0xf]
        %v675 = vld [vmem:[%s665 + $0x24] sm:$0xf]
        %v676 = vld [vmem:[%s665 + $0x28] sm:$0xf]
        %v677 = vld [vmem:[%s665 + $0x2c] sm:$0xf]
        %v678 = vld [vmem:[%s665 + $0x30] sm:$0xf]
        %v679 = vld [vmem:[%s665 + $0x34] sm:$0xf]
        %v680 = vld [vmem:[%s665 + $0x38] sm:$0xf]
        %v681 = vld [vmem:[%s665 + $0x3c] sm:$0xf]
        %v682 = vld [vmem:[%s665 + $0x40] sm:$0xf]
        %v683 = vld [vmem:[%s665 + $0x44] sm:$0xf]
        %v684 = vld [vmem:[%s665 + $0x48] sm:$0xf]
        %v685 = vld [vmem:[%s665 + $0x4c] sm:$0xf]
        %v686 = vld [vmem:[%s665 + $0x50] sm:$0xf]
        %v687 = vld [vmem:[%s665 + $0x54] sm:$0xf]
        %v688 = vld [vmem:[%s665 + $0x58] sm:$0xf]
        %v689 = vld [vmem:[%s665 + $0x5c] sm:$0xf]
        %v690 = vld [vmem:[%s665 + $0x60] sm:$0xf]
        %s691 = scalar_lea.vmem %s585, 300 [#allocation2]
        %v692 = vld [vmem:[%s691] sm:$0xf]
        %v693 = vld [vmem:[%s691 + $0x4] sm:$0xf]
        %v694 = vld [vmem:[%s691 + $0x8] sm:$0xf]
        %v695 = vld [vmem:[%s691 + $0xc] sm:$0xf]
        %v696 = vld [vmem:[%s691 + $0x10] sm:$0xf]
        %v697 = vld [vmem:[%s691 + $0x14] sm:$0xf]
        %v698 = vld [vmem:[%s691 + $0x18] sm:$0xf]
        %v699 = vld [vmem:[%s691 + $0x1c] sm:$0xf]
        %v700 = vld [vmem:[%s691 + $0x20] sm:$0xf]
        %v701 = vld [vmem:[%s691 + $0x24] sm:$0xf]
        %v702 = vld [vmem:[%s691 + $0x28] sm:$0xf]
        %v703 = vld [vmem:[%s691 + $0x2c] sm:$0xf]
        %v704 = vld [vmem:[%s691 + $0x30] sm:$0xf]
        %v705 = vld [vmem:[%s691 + $0x34] sm:$0xf]
        %v706 = vld [vmem:[%s691 + $0x38] sm:$0xf]
        %v707 = vld [vmem:[%s691 + $0x3c] sm:$0xf]
        %v708 = vld [vmem:[%s691 + $0x40] sm:$0xf]
        %v709 = vld [vmem:[%s691 + $0x44] sm:$0xf]
        %v710 = vld [vmem:[%s691 + $0x48] sm:$0xf]
        %v711 = vld [vmem:[%s691 + $0x4c] sm:$0xf]
        %v712 = vld [vmem:[%s691 + $0x50] sm:$0xf]
        %v713 = vld [vmem:[%s691 + $0x54] sm:$0xf]
        %v714 = vld [vmem:[%s691 + $0x58] sm:$0xf]
        %v715 = vld [vmem:[%s691 + $0x5c] sm:$0xf]
        %v716 = vld [vmem:[%s691 + $0x60] sm:$0xf]
        %v742 = vunpack.c.l.b16 %v614
        %v743 = vunpack.c.l.b16 %v615
        %v744 = vunpack.c.l.b16 %v616
        %v745 = vunpack.c.l.b16 %v617
        %v746 = vunpack.c.l.b16 %v618
        %v747 = vunpack.c.l.b16 %v619
        %v748 = vunpack.c.l.b16 %v620
        %v749 = vunpack.c.l.b16 %v621
        %v750 = vunpack.c.l.b16 %v622
        %v751 = vunpack.c.l.b16 %v623
        %v752 = vunpack.c.l.b16 %v624
        %v753 = vunpack.c.l.b16 %v625
        %v754 = vunpack.c.l.b16 %v626
        %v755 = vunpack.c.l.b16 %v627
        %v756 = vunpack.c.l.b16 %v628
        %v757 = vunpack.c.l.b16 %v629
        %v758 = vunpack.c.l.b16 %v630
        %v759 = vunpack.c.l.b16 %v631
        %v760 = vunpack.c.l.b16 %v632
        %v761 = vunpack.c.l.b16 %v633
        %v762 = vunpack.c.l.b16 %v634
        %v763 = vunpack.c.l.b16 %v635
        %v764 = vunpack.c.l.b16 %v636
        %v765 = vunpack.c.l.b16 %v637
        %v766 = vunpack.c.l.b16 %v638
        %v767 = vpack.c.b16 %v743, %v742
        %v768 = vpack.c.b16 %v745, %v744
        %v769 = vpack.c.b16 %v747, %v746
        %v770 = vpack.c.b16 %v749, %v748
        %v771 = vpack.c.b16 %v751, %v750
        %v772 = vpack.c.b16 %v753, %v752
        %v773 = vpack.c.b16 %v755, %v754
        %v774 = vpack.c.b16 %v757, %v756
        %v775 = vpack.c.b16 %v759, %v758
        %v776 = vpack.c.b16 %v761, %v760
        %v777 = vpack.c.b16 %v763, %v762
        %v778 = vpack.c.b16 %v765, %v764
        %v779 = vpack.c.b16 %v766, %v766
        %v817 = vunpack.c.l.b16 %v640
        %v818 = vunpack.c.l.b16 %v641
        %v819 = vunpack.c.l.b16 %v642
        %v820 = vunpack.c.l.b16 %v643
        %v821 = vunpack.c.l.b16 %v644
        %v822 = vunpack.c.l.b16 %v645
        %v823 = vunpack.c.l.b16 %v646
        %v824 = vunpack.c.l.b16 %v647
        %v825 = vunpack.c.l.b16 %v648
        %v826 = vunpack.c.l.b16 %v649
        %v827 = vunpack.c.l.b16 %v650
        %v828 = vunpack.c.l.b16 %v651
        %v829 = vunpack.c.l.b16 %v652
        %v830 = vunpack.c.l.b16 %v653
        %v831 = vunpack.c.l.b16 %v654
        %v832 = vunpack.c.l.b16 %v655
        %v833 = vunpack.c.l.b16 %v656
        %v834 = vunpack.c.l.b16 %v657
        %v835 = vunpack.c.l.b16 %v658
        %v836 = vunpack.c.l.b16 %v659
        %v837 = vunpack.c.l.b16 %v660
        %v838 = vunpack.c.l.b16 %v661
        %v839 = vunpack.c.l.b16 %v662
        %v840 = vunpack.c.l.b16 %v663
        %v841 = vunpack.c.l.b16 %v664
        %v842 = vpack.c.b16 %v817, %v817
        %v843 = vpack.c.b16 %v819, %v818
        %v844 = vpack.c.b16 %v821, %v820
        %v845 = vpack.c.b16 %v823, %v822
        %v846 = vpack.c.b16 %v825, %v824
        %v847 = vpack.c.b16 %v827, %v826
        %v848 = vpack.c.b16 %v829, %v828
        %v849 = vpack.c.b16 %v831, %v830
        %v850 = vpack.c.b16 %v833, %v832
        %v851 = vpack.c.b16 %v835, %v834
        %v852 = vpack.c.b16 %v837, %v836
        %v853 = vpack.c.b16 %v839, %v838
        %v854 = vpack.c.b16 %v841, %v840
        %v892 = vunpack.c.l.b16 %v666
        %v893 = vunpack.c.l.b16 %v667
        %v894 = vunpack.c.l.b16 %v668
        %v895 = vunpack.c.l.b16 %v669
        %v896 = vunpack.c.l.b16 %v670
        %v897 = vunpack.c.l.b16 %v671
        %v898 = vunpack.c.l.b16 %v672
        %v899 = vunpack.c.l.b16 %v673
        %v900 = vunpack.c.l.b16 %v674
        %v901 = vunpack.c.l.b16 %v675
        %v902 = vunpack.c.l.b16 %v676
        %v903 = vunpack.c.l.b16 %v677
        %v904 = vunpack.c.l.b16 %v678
        %v905 = vunpack.c.l.b16 %v679
        %v906 = vunpack.c.l.b16 %v680
        %v907 = vunpack.c.l.b16 %v681
        %v908 = vunpack.c.l.b16 %v682
        %v909 = vunpack.c.l.b16 %v683
        %v910 = vunpack.c.l.b16 %v684
        %v911 = vunpack.c.l.b16 %v685
        %v912 = vunpack.c.l.b16 %v686
        %v913 = vunpack.c.l.b16 %v687
        %v914 = vunpack.c.l.b16 %v688
        %v915 = vunpack.c.l.b16 %v689
        %v916 = vunpack.c.l.b16 %v690
        %v917 = vpack.c.b16 %v893, %v892
        %v918 = vpack.c.b16 %v895, %v894
        %v919 = vpack.c.b16 %v897, %v896
        %v920 = vpack.c.b16 %v899, %v898
        %v921 = vpack.c.b16 %v901, %v900
        %v922 = vpack.c.b16 %v903, %v902
        %v923 = vpack.c.b16 %v905, %v904
        %v924 = vpack.c.b16 %v907, %v906
        %v925 = vpack.c.b16 %v909, %v908
        %v926 = vpack.c.b16 %v911, %v910
        %v927 = vpack.c.b16 %v913, %v912
        %v928 = vpack.c.b16 %v915, %v914
        %v929 = vpack.c.b16 %v916, %v916
        %v967 = vunpack.c.l.b16 %v692
        %v968 = vunpack.c.l.b16 %v693
        %v969 = vunpack.c.l.b16 %v694
        %v970 = vunpack.c.l.b16 %v695
        %v971 = vunpack.c.l.b16 %v696
        %v972 = vunpack.c.l.b16 %v697
        %v973 = vunpack.c.l.b16 %v698
        %v974 = vunpack.c.l.b16 %v699
        %v975 = vunpack.c.l.b16 %v700
        %v976 = vunpack.c.l.b16 %v701
        %v977 = vunpack.c.l.b16 %v702
        %v978 = vunpack.c.l.b16 %v703
        %v979 = vunpack.c.l.b16 %v704
        %v980 = vunpack.c.l.b16 %v705
        %v981 = vunpack.c.l.b16 %v706
        %v982 = vunpack.c.l.b16 %v707
        %v983 = vunpack.c.l.b16 %v708
        %v984 = vunpack.c.l.b16 %v709
        %v985 = vunpack.c.l.b16 %v710
        %v986 = vunpack.c.l.b16 %v711
        %v987 = vunpack.c.l.b16 %v712
        %v988 = vunpack.c.l.b16 %v713
        %v989 = vunpack.c.l.b16 %v714
        %v990 = vunpack.c.l.b16 %v715
        %v991 = vunpack.c.l.b16 %v716
        %v992 = vpack.c.b16 %v967, %v967
        %v993 = vpack.c.b16 %v969, %v968
        %v994 = vpack.c.b16 %v971, %v970
        %v995 = vpack.c.b16 %v973, %v972
        %v996 = vpack.c.b16 %v975, %v974
        %v997 = vpack.c.b16 %v977, %v976
        %v998 = vpack.c.b16 %v979, %v978
        %v999 = vpack.c.b16 %v981, %v980
        %v1000 = vpack.c.b16 %v983, %v982
        %v1001 = vpack.c.b16 %v985, %v984
        %v1002 = vpack.c.b16 %v987, %v986
        %v1003 = vpack.c.b16 %v989, %v988
        %v1004 = vpack.c.b16 %v991, %v990
        %vm1017 = vcmask 1043456
        %v1020 = vsel %vm1017, %v779, %v842
        %v1024 = vsel %vm1017, %v929, %v992
        %v1026 = vld [vmem:[%s1] sm:$0xf]
        %v1027 = vld [vmem:[%s1 + $0x4] sm:$0xf]
        %v1028 = vld [vmem:[%s1 + $0x8] sm:$0xf]
        %v1029 = vld [vmem:[%s1 + $0xc] sm:$0xf]
        %v1030 = vld [vmem:[%s1 + $0x10] sm:$0xf]
        %v1031 = vld [vmem:[%s1 + $0x14] sm:$0xf]
        %v1032 = vld [vmem:[%s1 + $0x18] sm:$0xf]
        %v1033 = vld [vmem:[%s1 + $0x1c] sm:$0xf]
        %v1034 = vld [vmem:[%s1 + $0x20] sm:$0xf]
        %v1035 = vld [vmem:[%s1 + $0x24] sm:$0xf]
        %v1036 = vld [vmem:[%s1 + $0x28] sm:$0xf]
        %v1037 = vld [vmem:[%s1 + $0x2c] sm:$0xf]
        %v1038 = vld [vmem:[%s1 + $0x30] sm:$0xf]
        %v1039 = vld [vmem:[%s1 + $0x34] sm:$0xf]
        %v1040 = vld [vmem:[%s1 + $0x38] sm:$0xf]
        %v1041 = vld [vmem:[%s1 + $0x3c] sm:$0xf]
        %v1058 = vunpack.c.l.b16 %v1026
        %v1059 = vunpack.c.l.b16 %v1027
        %v1060 = vunpack.c.l.b16 %v1028
        %v1061 = vunpack.c.l.b16 %v1029
        %v1062 = vunpack.c.l.b16 %v1030
        %v1063 = vunpack.c.l.b16 %v1031
        %v1064 = vunpack.c.l.b16 %v1032
        %v1065 = vunpack.c.l.b16 %v1033
        %v1066 = vunpack.c.l.b16 %v1034
        %v1067 = vunpack.c.l.b16 %v1035
        %v1068 = vunpack.c.l.b16 %v1036
        %v1069 = vunpack.c.l.b16 %v1037
        %v1070 = vunpack.c.l.b16 %v1038
        %v1071 = vunpack.c.l.b16 %v1039
        %v1072 = vunpack.c.l.b16 %v1040
        %v1073 = vunpack.c.l.b16 %v1041
        %v1074 = vpack.c.b16 %v1059, %v1058
        %v1075 = vpack.c.b16 %v1061, %v1060
        %v1076 = vpack.c.b16 %v1063, %v1062
        %v1077 = vpack.c.b16 %v1065, %v1064
        %v1078 = vpack.c.b16 %v1067, %v1066
        %v1079 = vpack.c.b16 %v1069, %v1068
        %v1080 = vpack.c.b16 %v1071, %v1070
        %v1081 = vpack.c.b16 %v1073, %v1072
        %1090 = vmatprep.subr.bf16.mxu0 0
        %1091 = vmatpush1.bf16.msra.mxu0 %v1081
        %1092 = vmatprep.subr.bf16.mxu0 0
        %1093 = vmatpush1.bf16.msra.mxu0 %v1080
        %1094 = vmatprep.subr.bf16.mxu0 0
        %1095 = vmatpush1.bf16.msra.mxu0 %v1079
        %1096 = vmatprep.subr.bf16.mxu0 0
        %1097 = vmatpush1.bf16.msra.mxu0 %v1078
        %1098 = vmatprep.subr.bf16.mxu0 0
        %1099 = vmatpush1.bf16.msra.mxu0 %v1077
        %1100 = vmatprep.subr.bf16.mxu0 0
        %1101 = vmatpush1.bf16.msra.mxu0 %v1076
        %1102 = vmatprep.subr.bf16.mxu0 0
        %1103 = vmatpush1.bf16.msra.mxu0 %v1075
        %1104 = vmatprep.subr.bf16.mxu0 0
        %1105 = vmatpush1.bf16.msra.mxu0 %v1074
        %1106 = vmatprep.subr.bf16.mxu0 0
        %1107 = vmatpush2.bf16.msra.mxu0 0
        %1108 = vmatprep.subr.bf16.mxu0 0
        %1109 = vmatpush2.bf16.msra.mxu0 0
        %1110 = vmatprep.subr.bf16.mxu0 0
        %1111 = vmatpush2.bf16.msra.mxu0 0
        %1112 = vmatprep.subr.bf16.mxu0 0
        %1113 = vmatpush2.bf16.msra.mxu0 0
        %1114 = vmatprep.subr.bf16.mxu0 0
        %1115 = vmatpush2.bf16.msra.mxu0 0
        %1116 = vmatprep.subr.bf16.mxu0 0
        %1117 = vmatpush2.bf16.msra.mxu0 0
        %1118 = vmatprep.subr.bf16.mxu0 0
        %1119 = vmatpush2.bf16.msra.mxu0 0
        %1120 = vmatprep.subr.bf16.mxu0 0
        %1121 = vmatpush2.bf16.msra.mxu0 0
        %1122 = vmatprep.mubr.bf16.mxu0 0
        %1123 = vmatmul.mubr.bf16.gmra.mxu0 %v767
        %v1124 = vpop.f32.mrf.mxu0
        %v1125 = vadd.f32 0.0, %v1124
        %v1126 = vpop.f32.mrf.mxu0
        %v1127 = vpop.f32.mrf.mxu0
        %v1128 = vadd.f32 0.0, %v1127
        %v1129 = vpop.f32.mrf.mxu0
        %1130 = vmatprep.mubr.bf16.mxu0 0
        %1131 = vmatmul.mubr.bf16.gmra.mxu0 %v768
        %v1132 = vpop.f32.mrf.mxu0
        %v1133 = vadd.f32 0.0, %v1132
        %v1134 = vpop.f32.mrf.mxu0
        %v1135 = vpop.f32.mrf.mxu0
        %v1136 = vadd.f32 0.0, %v1135
        %v1137 = vpop.f32.mrf.mxu0
        %1138 = vmatprep.mubr.bf16.mxu0 0
        %1139 = vmatmul.mubr.bf16.gmra.mxu0 %v769
        %v1140 = vpop.f32.mrf.mxu0
        %v1141 = vadd.f32 0.0, %v1140
        %v1142 = vpop.f32.mrf.mxu0
        %v1143 = vpop.f32.mrf.mxu0
        %v1144 = vadd.f32 0.0, %v1143
        %v1145 = vpop.f32.mrf.mxu0
        %1146 = vmatprep.mubr.bf16.mxu0 0
        %1147 = vmatmul.mubr.bf16.gmra.mxu0 %v770
        %v1148 = vpop.f32.mrf.mxu0
        %v1149 = vadd.f32 0.0, %v1148
        %v1150 = vpop.f32.mrf.mxu0
        %v1151 = vpop.f32.mrf.mxu0
        %v1152 = vadd.f32 0.0, %v1151
        %v1153 = vpop.f32.mrf.mxu0
        %1154 = vmatprep.mubr.bf16.mxu0 0
        %1155 = vmatmul.mubr.bf16.gmra.mxu0 %v771
        %v1156 = vpop.f32.mrf.mxu0
        %v1157 = vadd.f32 0.0, %v1156
        %v1158 = vpop.f32.mrf.mxu0
        %v1159 = vpop.f32.mrf.mxu0
        %v1160 = vadd.f32 0.0, %v1159
        %v1161 = vpop.f32.mrf.mxu0
        %1162 = vmatprep.mubr.bf16.mxu0 0
        %1163 = vmatmul.mubr.bf16.gmra.mxu0 %v772
        %v1164 = vpop.f32.mrf.mxu0
        %v1165 = vadd.f32 0.0, %v1164
        %v1166 = vpop.f32.mrf.mxu0
        %v1167 = vpop.f32.mrf.mxu0
        %v1168 = vadd.f32 0.0, %v1167
        %v1169 = vpop.f32.mrf.mxu0
        %1170 = vmatprep.mubr.bf16.mxu0 0
        %1171 = vmatmul.mubr.bf16.gmra.mxu0 %v773
        %v1172 = vpop.f32.mrf.mxu0
        %v1173 = vadd.f32 0.0, %v1172
        %v1174 = vpop.f32.mrf.mxu0
        %v1175 = vpop.f32.mrf.mxu0
        %v1176 = vadd.f32 0.0, %v1175
        %v1177 = vpop.f32.mrf.mxu0
        %1178 = vmatprep.mubr.bf16.mxu0 0
        %1179 = vmatmul.mubr.bf16.gmra.mxu0 %v774
        %v1180 = vpop.f32.mrf.mxu0
        %v1181 = vadd.f32 0.0, %v1180
        %v1182 = vpop.f32.mrf.mxu0
        %v1183 = vpop.f32.mrf.mxu0
        %v1184 = vadd.f32 0.0, %v1183
        %v1185 = vpop.f32.mrf.mxu0
        %1186 = vmatprep.mubr.bf16.mxu0 0
        %1187 = vmatmul.mubr.bf16.gmra.mxu0 %v775
        %v1188 = vpop.f32.mrf.mxu0
        %v1189 = vadd.f32 0.0, %v1188
        %v1190 = vpop.f32.mrf.mxu0
        %v1191 = vpop.f32.mrf.mxu0
        %v1192 = vadd.f32 0.0, %v1191
        %v1193 = vpop.f32.mrf.mxu0
        %1194 = vmatprep.mubr.bf16.mxu0 0
        %1195 = vmatmul.mubr.bf16.gmra.mxu0 %v776
        %v1196 = vpop.f32.mrf.mxu0
        %v1197 = vadd.f32 0.0, %v1196
        %v1198 = vpop.f32.mrf.mxu0
        %v1199 = vpop.f32.mrf.mxu0
        %v1200 = vadd.f32 0.0, %v1199
        %v1201 = vpop.f32.mrf.mxu0
        %1202 = vmatprep.mubr.bf16.mxu0 0
        %1203 = vmatmul.mubr.bf16.gmra.mxu0 %v777
        %v1204 = vpop.f32.mrf.mxu0
        %v1205 = vadd.f32 0.0, %v1204
        %v1206 = vpop.f32.mrf.mxu0
        %v1207 = vpop.f32.mrf.mxu0
        %v1208 = vadd.f32 0.0, %v1207
        %v1209 = vpop.f32.mrf.mxu0
        %1210 = vmatprep.mubr.bf16.mxu0 0
        %1211 = vmatmul.mubr.bf16.gmra.mxu0 %v778
        %v1212 = vpop.f32.mrf.mxu0
        %v1213 = vadd.f32 0.0, %v1212
        %v1214 = vpop.f32.mrf.mxu0
        %v1215 = vpop.f32.mrf.mxu0
        %v1216 = vadd.f32 0.0, %v1215
        %v1217 = vpop.f32.mrf.mxu0
        %1218 = vmatprep.mubr.bf16.mxu0 0
        %1219 = vmatmul.mubr.bf16.gmra.mxu0 %v1020
        %v1220 = vpop.f32.mrf.mxu0
        %v1221 = vadd.f32 0.0, %v1220
        %v1222 = vpop.f32.mrf.mxu0
        %v1223 = vpop.f32.mrf.mxu0
        %v1224 = vadd.f32 0.0, %v1223
        %v1225 = vpop.f32.mrf.mxu0
        %1226 = vmatprep.mubr.bf16.mxu0 0
        %1227 = vmatmul.mubr.bf16.gmra.mxu0 %v843
        %v1228 = vpop.f32.mrf.mxu0
        %v1229 = vadd.f32 0.0, %v1228
        %v1230 = vpop.f32.mrf.mxu0
        %v1231 = vpop.f32.mrf.mxu0
        %v1232 = vadd.f32 0.0, %v1231
        %v1233 = vpop.f32.mrf.mxu0
        %1234 = vmatprep.mubr.bf16.mxu0 0
        %1235 = vmatmul.mubr.bf16.gmra.mxu0 %v844
        %v1236 = vpop.f32.mrf.mxu0
        %v1237 = vadd.f32 0.0, %v1236
        %v1238 = vpop.f32.mrf.mxu0
        %v1239 = vpop.f32.mrf.mxu0
        %v1240 = vadd.f32 0.0, %v1239
        %v1241 = vpop.f32.mrf.mxu0
        %1242 = vmatprep.mubr.bf16.mxu0 0
        %1243 = vmatmul.mubr.bf16.gmra.mxu0 %v845
        %v1244 = vpop.f32.mrf.mxu0
        %v1245 = vadd.f32 0.0, %v1244
        %v1246 = vpop.f32.mrf.mxu0
        %v1247 = vpop.f32.mrf.mxu0
        %v1248 = vadd.f32 0.0, %v1247
        %v1249 = vpop.f32.mrf.mxu0
        %1250 = vmatprep.mubr.bf16.mxu0 0
        %1251 = vmatmul.mubr.bf16.gmra.mxu0 %v846
        %v1252 = vpop.f32.mrf.mxu0
        %v1253 = vadd.f32 0.0, %v1252
        %v1254 = vpop.f32.mrf.mxu0
        %v1255 = vpop.f32.mrf.mxu0
        %v1256 = vadd.f32 0.0, %v1255
        %v1257 = vpop.f32.mrf.mxu0
        %1258 = vmatprep.mubr.bf16.mxu0 0
        %1259 = vmatmul.mubr.bf16.gmra.mxu0 %v847
        %v1260 = vpop.f32.mrf.mxu0
        %v1261 = vadd.f32 0.0, %v1260
        %v1262 = vpop.f32.mrf.mxu0
        %v1263 = vpop.f32.mrf.mxu0
        %v1264 = vadd.f32 0.0, %v1263
        %v1265 = vpop.f32.mrf.mxu0
        %1266 = vmatprep.mubr.bf16.mxu0 0
        %1267 = vmatmul.mubr.bf16.gmra.mxu0 %v848
        %v1268 = vpop.f32.mrf.mxu0
        %v1269 = vadd.f32 0.0, %v1268
        %v1270 = vpop.f32.mrf.mxu0
        %v1271 = vpop.f32.mrf.mxu0
        %v1272 = vadd.f32 0.0, %v1271
        %v1273 = vpop.f32.mrf.mxu0
        %1274 = vmatprep.mubr.bf16.mxu0 0
        %1275 = vmatmul.mubr.bf16.gmra.mxu0 %v849
        %v1276 = vpop.f32.mrf.mxu0
        %v1277 = vadd.f32 0.0, %v1276
        %v1278 = vpop.f32.mrf.mxu0
        %v1279 = vpop.f32.mrf.mxu0
        %v1280 = vadd.f32 0.0, %v1279
        %v1281 = vpop.f32.mrf.mxu0
        %1282 = vmatprep.mubr.bf16.mxu0 0
        %1283 = vmatmul.mubr.bf16.gmra.mxu0 %v850
        %v1284 = vpop.f32.mrf.mxu0
        %v1285 = vadd.f32 0.0, %v1284
        %v1286 = vpop.f32.mrf.mxu0
        %v1287 = vpop.f32.mrf.mxu0
        %v1288 = vadd.f32 0.0, %v1287
        %v1289 = vpop.f32.mrf.mxu0
        %1290 = vmatprep.mubr.bf16.mxu0 0
        %1291 = vmatmul.mubr.bf16.gmra.mxu0 %v851
        %v1292 = vpop.f32.mrf.mxu0
        %v1293 = vadd.f32 0.0, %v1292
        %v1294 = vpop.f32.mrf.mxu0
        %v1295 = vpop.f32.mrf.mxu0
        %v1296 = vadd.f32 0.0, %v1295
        %v1297 = vpop.f32.mrf.mxu0
        %1298 = vmatprep.mubr.bf16.mxu0 0
        %1299 = vmatmul.mubr.bf16.gmra.mxu0 %v852
        %v1300 = vpop.f32.mrf.mxu0
        %v1301 = vadd.f32 0.0, %v1300
        %v1302 = vpop.f32.mrf.mxu0
        %v1303 = vpop.f32.mrf.mxu0
        %v1304 = vadd.f32 0.0, %v1303
        %v1305 = vpop.f32.mrf.mxu0
        %1306 = vmatprep.mubr.bf16.mxu0 0
        %1307 = vmatmul.mubr.bf16.gmra.mxu0 %v853
        %v1308 = vpop.f32.mrf.mxu0
        %v1309 = vadd.f32 0.0, %v1308
        %v1310 = vpop.f32.mrf.mxu0
        %v1311 = vpop.f32.mrf.mxu0
        %v1312 = vadd.f32 0.0, %v1311
        %v1313 = vpop.f32.mrf.mxu0
        %1314 = vmatprep.mubr.bf16.mxu0 0
        %1315 = vmatmul.mubr.bf16.gmra.mxu0 %v854
        %v1316 = vpop.f32.mrf.mxu0
        %v1317 = vadd.f32 0.0, %v1316
        %v1318 = vpop.f32.mrf.mxu0
        %v1319 = vpop.f32.mrf.mxu0
        %v1320 = vadd.f32 0.0, %v1319
        %v1321 = vpop.f32.mrf.mxu0
        %1322 = vmatprep.mubr.bf16.mxu0 0
        %1323 = vmatmul.mubr.bf16.gmra.mxu0 %v917
        %v1324 = vpop.f32.mrf.mxu0
        %v1325 = vadd.f32 0.0, %v1324
        %v1326 = vpop.f32.mrf.mxu0
        %v1327 = vpop.f32.mrf.mxu0
        %v1328 = vadd.f32 0.0, %v1327
        %v1329 = vpop.f32.mrf.mxu0
        %1330 = vmatprep.mubr.bf16.mxu0 0
        %1331 = vmatmul.mubr.bf16.gmra.mxu0 %v918
        %v1332 = vpop.f32.mrf.mxu0
        %v1333 = vadd.f32 0.0, %v1332
        %v1334 = vpop.f32.mrf.mxu0
        %v1335 = vpop.f32.mrf.mxu0
        %v1336 = vadd.f32 0.0, %v1335
        %v1337 = vpop.f32.mrf.mxu0
        %1338 = vmatprep.mubr.bf16.mxu0 0
        %1339 = vmatmul.mubr.bf16.gmra.mxu0 %v919
        %v1340 = vpop.f32.mrf.mxu0
        %v1341 = vadd.f32 0.0, %v1340
        %v1342 = vpop.f32.mrf.mxu0
        %v1343 = vpop.f32.mrf.mxu0
        %v1344 = vadd.f32 0.0, %v1343
        %v1345 = vpop.f32.mrf.mxu0
        %1346 = vmatprep.mubr.bf16.mxu0 0
        %1347 = vmatmul.mubr.bf16.gmra.mxu0 %v920
        %v1348 = vpop.f32.mrf.mxu0
        %v1349 = vadd.f32 0.0, %v1348
        %v1350 = vpop.f32.mrf.mxu0
        %v1351 = vpop.f32.mrf.mxu0
        %v1352 = vadd.f32 0.0, %v1351
        %v1353 = vpop.f32.mrf.mxu0
        %1354 = vmatprep.mubr.bf16.mxu0 0
        %1355 = vmatmul.mubr.bf16.gmra.mxu0 %v921
        %v1356 = vpop.f32.mrf.mxu0
        %v1357 = vadd.f32 0.0, %v1356
        %v1358 = vpop.f32.mrf.mxu0
        %v1359 = vpop.f32.mrf.mxu0
        %v1360 = vadd.f32 0.0, %v1359
        %v1361 = vpop.f32.mrf.mxu0
        %1362 = vmatprep.mubr.bf16.mxu0 0
        %1363 = vmatmul.mubr.bf16.gmra.mxu0 %v922
        %v1364 = vpop.f32.mrf.mxu0
        %v1365 = vadd.f32 0.0, %v1364
        %v1366 = vpop.f32.mrf.mxu0
        %v1367 = vpop.f32.mrf.mxu0
        %v1368 = vadd.f32 0.0, %v1367
        %v1369 = vpop.f32.mrf.mxu0
        %1370 = vmatprep.mubr.bf16.mxu0 0
        %1371 = vmatmul.mubr.bf16.gmra.mxu0 %v923
        %v1372 = vpop.f32.mrf.mxu0
        %v1373 = vadd.f32 0.0, %v1372
        %v1374 = vpop.f32.mrf.mxu0
        %v1375 = vpop.f32.mrf.mxu0
        %v1376 = vadd.f32 0.0, %v1375
        %v1377 = vpop.f32.mrf.mxu0
        %1378 = vmatprep.mubr.bf16.mxu0 0
        %1379 = vmatmul.mubr.bf16.gmra.mxu0 %v924
        %v1380 = vpop.f32.mrf.mxu0
        %v1381 = vadd.f32 0.0, %v1380
        %v1382 = vpop.f32.mrf.mxu0
        %v1383 = vpop.f32.mrf.mxu0
        %v1384 = vadd.f32 0.0, %v1383
        %v1385 = vpop.f32.mrf.mxu0
        %1386 = vmatprep.mubr.bf16.mxu0 0
        %1387 = vmatmul.mubr.bf16.gmra.mxu0 %v925
        %v1388 = vpop.f32.mrf.mxu0
        %v1389 = vadd.f32 0.0, %v1388
        %v1390 = vpop.f32.mrf.mxu0
        %v1391 = vpop.f32.mrf.mxu0
        %v1392 = vadd.f32 0.0, %v1391
        %v1393 = vpop.f32.mrf.mxu0
        %1394 = vmatprep.mubr.bf16.mxu0 0
        %1395 = vmatmul.mubr.bf16.gmra.mxu0 %v926
        %v1396 = vpop.f32.mrf.mxu0
        %v1397 = vadd.f32 0.0, %v1396
        %v1398 = vpop.f32.mrf.mxu0
        %v1399 = vpop.f32.mrf.mxu0
        %v1400 = vadd.f32 0.0, %v1399
        %v1401 = vpop.f32.mrf.mxu0
        %1402 = vmatprep.mubr.bf16.mxu0 0
        %1403 = vmatmul.mubr.bf16.gmra.mxu0 %v927
        %v1404 = vpop.f32.mrf.mxu0
        %v1405 = vadd.f32 0.0, %v1404
        %v1406 = vpop.f32.mrf.mxu0
        %v1407 = vpop.f32.mrf.mxu0
        %v1408 = vadd.f32 0.0, %v1407
        %v1409 = vpop.f32.mrf.mxu0
        %1410 = vmatprep.mubr.bf16.mxu0 0
        %1411 = vmatmul.mubr.bf16.gmra.mxu0 %v928
        %v1412 = vpop.f32.mrf.mxu0
        %v1413 = vadd.f32 0.0, %v1412
        %v1414 = vpop.f32.mrf.mxu0
        %v1415 = vpop.f32.mrf.mxu0
        %v1416 = vadd.f32 0.0, %v1415
        %v1417 = vpop.f32.mrf.mxu0
        %1418 = vmatprep.mubr.bf16.mxu0 0
        %1419 = vmatmul.mubr.bf16.gmra.mxu0 %v1024
        %v1420 = vpop.f32.mrf.mxu0
        %v1421 = vadd.f32 0.0, %v1420
        %v1422 = vpop.f32.mrf.mxu0
        %v1423 = vpop.f32.mrf.mxu0
        %v1424 = vadd.f32 0.0, %v1423
        %v1425 = vpop.f32.mrf.mxu0
        %1426 = vmatprep.mubr.bf16.mxu0 0
        %1427 = vmatmul.mubr.bf16.gmra.mxu0 %v993
        %v1428 = vpop.f32.mrf.mxu0
        %v1429 = vadd.f32 0.0, %v1428
        %v1430 = vpop.f32.mrf.mxu0
        %v1431 = vpop.f32.mrf.mxu0
        %v1432 = vadd.f32 0.0, %v1431
        %v1433 = vpop.f32.mrf.mxu0
        %1434 = vmatprep.mubr.bf16.mxu0 0
        %1435 = vmatmul.mubr.bf16.gmra.mxu0 %v994
        %v1436 = vpop.f32.mrf.mxu0
        %v1437 = vadd.f32 0.0, %v1436
        %v1438 = vpop.f32.mrf.mxu0
        %v1439 = vpop.f32.mrf.mxu0
        %v1440 = vadd.f32 0.0, %v1439
        %v1441 = vpop.f32.mrf.mxu0
        %1442 = vmatprep.mubr.bf16.mxu0 0
        %1443 = vmatmul.mubr.bf16.gmra.mxu0 %v995
        %v1444 = vpop.f32.mrf.mxu0
        %v1445 = vadd.f32 0.0, %v1444
        %v1446 = vpop.f32.mrf.mxu0
        %v1447 = vpop.f32.mrf.mxu0
        %v1448 = vadd.f32 0.0, %v1447
        %v1449 = vpop.f32.mrf.mxu0
        %1450 = vmatprep.mubr.bf16.mxu0 0
        %1451 = vmatmul.mubr.bf16.gmra.mxu0 %v996
        %v1452 = vpop.f32.mrf.mxu0
        %v1453 = vadd.f32 0.0, %v1452
        %v1454 = vpop.f32.mrf.mxu0
        %v1455 = vpop.f32.mrf.mxu0
        %v1456 = vadd.f32 0.0, %v1455
        %v1457 = vpop.f32.mrf.mxu0
        %1458 = vmatprep.mubr.bf16.mxu0 0
        %1459 = vmatmul.mubr.bf16.gmra.mxu0 %v997
        %v1460 = vpop.f32.mrf.mxu0
        %v1461 = vadd.f32 0.0, %v1460
        %v1462 = vpop.f32.mrf.mxu0
        %v1463 = vpop.f32.mrf.mxu0
        %v1464 = vadd.f32 0.0, %v1463
        %v1465 = vpop.f32.mrf.mxu0
        %1466 = vmatprep.mubr.bf16.mxu0 0
        %1467 = vmatmul.mubr.bf16.gmra.mxu0 %v998
        %v1468 = vpop.f32.mrf.mxu0
        %v1469 = vadd.f32 0.0, %v1468
        %v1470 = vpop.f32.mrf.mxu0
        %v1471 = vpop.f32.mrf.mxu0
        %v1472 = vadd.f32 0.0, %v1471
        %v1473 = vpop.f32.mrf.mxu0
        %1474 = vmatprep.mubr.bf16.mxu0 0
        %1475 = vmatmul.mubr.bf16.gmra.mxu0 %v999
        %v1476 = vpop.f32.mrf.mxu0
        %v1477 = vadd.f32 0.0, %v1476
        %v1478 = vpop.f32.mrf.mxu0
        %v1479 = vpop.f32.mrf.mxu0
        %v1480 = vadd.f32 0.0, %v1479
        %v1481 = vpop.f32.mrf.mxu0
        %1482 = vmatprep.mubr.bf16.mxu0 0
        %1483 = vmatmul.mubr.bf16.gmra.mxu0 %v1000
        %v1484 = vpop.f32.mrf.mxu0
        %v1485 = vadd.f32 0.0, %v1484
        %v1486 = vpop.f32.mrf.mxu0
        %v1487 = vpop.f32.mrf.mxu0
        %v1488 = vadd.f32 0.0, %v1487
        %v1489 = vpop.f32.mrf.mxu0
        %1490 = vmatprep.mubr.bf16.mxu0 0
        %1491 = vmatmul.mubr.bf16.gmra.mxu0 %v1001
        %v1492 = vpop.f32.mrf.mxu0
        %v1493 = vadd.f32 0.0, %v1492
        %v1494 = vpop.f32.mrf.mxu0
        %v1495 = vpop.f32.mrf.mxu0
        %v1496 = vadd.f32 0.0, %v1495
        %v1497 = vpop.f32.mrf.mxu0
        %1498 = vmatprep.mubr.bf16.mxu0 0
        %1499 = vmatmul.mubr.bf16.gmra.mxu0 %v1002
        %v1500 = vpop.f32.mrf.mxu0
        %v1501 = vadd.f32 0.0, %v1500
        %v1502 = vpop.f32.mrf.mxu0
        %v1503 = vpop.f32.mrf.mxu0
        %v1504 = vadd.f32 0.0, %v1503
        %v1505 = vpop.f32.mrf.mxu0
        %1506 = vmatprep.mubr.bf16.mxu0 0
        %1507 = vmatmul.mubr.bf16.gmra.mxu0 %v1003
        %v1508 = vpop.f32.mrf.mxu0
        %v1509 = vadd.f32 0.0, %v1508
        %v1510 = vpop.f32.mrf.mxu0
        %v1511 = vpop.f32.mrf.mxu0
        %v1512 = vadd.f32 0.0, %v1511
        %v1513 = vpop.f32.mrf.mxu0
        %1514 = vmatprep.mubr.bf16.mxu0 0
        %1515 = vmatmul.mubr.bf16.gmra.mxu0 %v1004
        %v1516 = vpop.f32.mrf.mxu0
        %v1517 = vadd.f32 0.0, %v1516
        %v1518 = vpop.f32.mrf.mxu0
        %v1519 = vpop.f32.mrf.mxu0
        %v1520 = vadd.f32 0.0, %v1519
        %v1521 = vpop.f32.mrf.mxu0
        %1522 = vdwg.mxu0
        %v1523 = vmax.f32 %v1125, %v1224
        %v1524 = vmax.f32 %v1128, %v1229
        %v1525 = vmax.f32 %v1133, %v1232
        %v1526 = vmax.f32 %v1136, %v1237
        %v1527 = vmax.f32 %v1141, %v1240
        %v1528 = vmax.f32 %v1144, %v1245
        %v1529 = vmax.f32 %v1149, %v1248
        %v1530 = vmax.f32 %v1152, %v1253
        %v1531 = vmax.f32 %v1157, %v1256
        %v1532 = vmax.f32 %v1160, %v1261
        %v1533 = vmax.f32 %v1165, %v1264
        %v1534 = vmax.f32 %v1168, %v1269
        %v1535 = vmax.f32 %v1173, %v1272
        %v1536 = vmax.f32 %v1176, %v1277
        %v1537 = vmax.f32 %v1181, %v1280
        %v1538 = vmax.f32 %v1184, %v1285
        %v1539 = vmax.f32 %v1189, %v1288
        %v1540 = vmax.f32 %v1192, %v1293
        %v1541 = vmax.f32 %v1197, %v1296
        %v1542 = vmax.f32 %v1200, %v1301
        %v1543 = vmax.f32 %v1205, %v1304
        %v1544 = vmax.f32 %v1208, %v1309
        %v1545 = vmax.f32 %v1213, %v1312
        %v1546 = vmax.f32 %v1216, %v1317
        %v1547 = vmax.f32 %v1221, %v1320
        %v1548 = vmax.f32 %v1325, %v1424
        %v1549 = vmax.f32 %v1328, %v1429
        %v1550 = vmax.f32 %v1333, %v1432
        %v1551 = vmax.f32 %v1336, %v1437
        %v1552 = vmax.f32 %v1341, %v1440
        %v1553 = vmax.f32 %v1344, %v1445
        %v1554 = vmax.f32 %v1349, %v1448
        %v1555 = vmax.f32 %v1352, %v1453
        %v1556 = vmax.f32 %v1357, %v1456
        %v1557 = vmax.f32 %v1360, %v1461
        %v1558 = vmax.f32 %v1365, %v1464
        %v1559 = vmax.f32 %v1368, %v1469
        %v1560 = vmax.f32 %v1373, %v1472
        %v1561 = vmax.f32 %v1376, %v1477
        %v1562 = vmax.f32 %v1381, %v1480
        %v1563 = vmax.f32 %v1384, %v1485
        %v1564 = vmax.f32 %v1389, %v1488
        %v1565 = vmax.f32 %v1392, %v1493
        %v1566 = vmax.f32 %v1397, %v1496
        %v1567 = vmax.f32 %v1400, %v1501
        %v1568 = vmax.f32 %v1405, %v1504
        %v1569 = vmax.f32 %v1408, %v1509
        %v1570 = vmax.f32 %v1413, %v1512
        %v1571 = vmax.f32 %v1416, %v1517
        %v1572 = vmax.f32 %v1421, %v1520
        %v1573 = vmax.f32 %v1523, %v1548
        %v1574 = vmax.f32 %v1524, %v1549
        %v1575 = vmax.f32 %v1525, %v1550
        %v1576 = vmax.f32 %v1526, %v1551
        %v1577 = vmax.f32 %v1527, %v1552
        %v1578 = vmax.f32 %v1528, %v1553
        %v1579 = vmax.f32 %v1529, %v1554
        %v1580 = vmax.f32 %v1530, %v1555
        %v1581 = vmax.f32 %v1531, %v1556
        %v1582 = vmax.f32 %v1532, %v1557
        %v1583 = vmax.f32 %v1533, %v1558
        %v1584 = vmax.f32 %v1534, %v1559
        %v1585 = vmax.f32 %v1535, %v1560
        %v1586 = vmax.f32 %v1536, %v1561
        %v1587 = vmax.f32 %v1537, %v1562
        %v1588 = vmax.f32 %v1538, %v1563
        %v1589 = vmax.f32 %v1539, %v1564
        %v1590 = vmax.f32 %v1540, %v1565
        %v1591 = vmax.f32 %v1541, %v1566
        %v1592 = vmax.f32 %v1542, %v1567
        %v1593 = vmax.f32 %v1543, %v1568
        %v1594 = vmax.f32 %v1544, %v1569
        %v1595 = vmax.f32 %v1545, %v1570
        %v1596 = vmax.f32 %v1546, %v1571
        %v1597 = vmax.f32 %v1547, %v1572
        %v1598 = vld [vmem:[%s2] sm:$0x1]
        %v1600 = vlaneseq
        %v1601 = vshrl.u32 %v1600, 7
        %v1602 = vsub.s32 0, %v1601
        %v1603 = vrot.slane %v1598, %v1602
        %v1605 = vadd.f32 %v1573, %v1603
        %v1606 = vadd.f32 %v1574, %v1603
        %v1607 = vadd.f32 %v1575, %v1603
        %v1608 = vadd.f32 %v1576, %v1603
        %v1609 = vadd.f32 %v1577, %v1603
        %v1610 = vadd.f32 %v1578, %v1603
        %v1611 = vadd.f32 %v1579, %v1603
        %v1612 = vadd.f32 %v1580, %v1603
        %v1613 = vadd.f32 %v1581, %v1603
        %v1614 = vadd.f32 %v1582, %v1603
        %v1615 = vadd.f32 %v1583, %v1603
        %v1616 = vadd.f32 %v1584, %v1603
        %v1617 = vadd.f32 %v1585, %v1603
        %v1618 = vadd.f32 %v1586, %v1603
        %v1619 = vadd.f32 %v1587, %v1603
        %v1620 = vadd.f32 %v1588, %v1603
        %v1621 = vadd.f32 %v1589, %v1603
        %v1622 = vadd.f32 %v1590, %v1603
        %v1623 = vadd.f32 %v1591, %v1603
        %v1624 = vadd.f32 %v1592, %v1603
        %v1625 = vadd.f32 %v1593, %v1603
        %v1626 = vadd.f32 %v1594, %v1603
        %v1627 = vadd.f32 %v1595, %v1603
        %v1628 = vadd.f32 %v1596, %v1603
        %v1629 = vadd.f32 %v1597, %v1603
        %v1630 = vmax.f32 %v1605, 0.0
        %v1631 = vmax.f32 %v1606, 0.0
        %v1632 = vmax.f32 %v1607, 0.0
        %v1633 = vmax.f32 %v1608, 0.0
        %v1634 = vmax.f32 %v1609, 0.0
        %v1635 = vmax.f32 %v1610, 0.0
        %v1636 = vmax.f32 %v1611, 0.0
        %v1637 = vmax.f32 %v1612, 0.0
        %v1638 = vmax.f32 %v1613, 0.0
        %v1639 = vmax.f32 %v1614, 0.0
        %v1640 = vmax.f32 %v1615, 0.0
        %v1641 = vmax.f32 %v1616, 0.0
        %v1642 = vmax.f32 %v1617, 0.0
        %v1643 = vmax.f32 %v1618, 0.0
        %v1644 = vmax.f32 %v1619, 0.0
        %v1645 = vmax.f32 %v1620, 0.0
        %v1646 = vmax.f32 %v1621, 0.0
        %v1647 = vmax.f32 %v1622, 0.0
        %v1648 = vmax.f32 %v1623, 0.0
        %v1649 = vmax.f32 %v1624, 0.0
        %v1650 = vmax.f32 %v1625, 0.0
        %v1651 = vmax.f32 %v1626, 0.0
        %v1652 = vmax.f32 %v1627, 0.0
        %v1653 = vmax.f32 %v1628, 0.0
        %v1654 = vmax.f32 %v1629, 0.0
        %v1655 = vpack.c.bf16 %v1631, %v1630
        %v1656 = vpack.c.bf16 %v1633, %v1632
        %v1657 = vpack.c.bf16 %v1635, %v1634
        %v1658 = vpack.c.bf16 %v1637, %v1636
        %v1659 = vpack.c.bf16 %v1639, %v1638
        %v1660 = vpack.c.bf16 %v1641, %v1640
        %v1661 = vpack.c.bf16 %v1643, %v1642
        %v1662 = vpack.c.bf16 %v1645, %v1644
        %v1663 = vpack.c.bf16 %v1647, %v1646
        %v1664 = vpack.c.bf16 %v1649, %v1648
        %v1665 = vpack.c.bf16 %v1651, %v1650
        %v1666 = vpack.c.bf16 %v1653, %v1652
        %v1667 = vpack.c.bf16 %v1654, %v1654
        %v1681 = vunpack.c.l.b16 %v1655
        %v1682 = vunpack.c.h.b16 %v1655
        %v1683 = vunpack.c.l.b16 %v1656
        %v1684 = vunpack.c.h.b16 %v1656
        %v1685 = vunpack.c.l.b16 %v1657
        %v1686 = vunpack.c.h.b16 %v1657
        %v1687 = vunpack.c.l.b16 %v1658
        %v1688 = vunpack.c.h.b16 %v1658
        %v1689 = vunpack.c.l.b16 %v1659
        %v1690 = vunpack.c.h.b16 %v1659
        %v1691 = vunpack.c.l.b16 %v1660
        %v1692 = vunpack.c.h.b16 %v1660
        %v1693 = vunpack.c.l.b16 %v1661
        %v1694 = vunpack.c.h.b16 %v1661
        %v1695 = vunpack.c.l.b16 %v1662
        %v1696 = vunpack.c.h.b16 %v1662
        %v1697 = vunpack.c.l.b16 %v1663
        %v1698 = vunpack.c.h.b16 %v1663
        %v1699 = vunpack.c.l.b16 %v1664
        %v1700 = vunpack.c.h.b16 %v1664
        %v1701 = vunpack.c.l.b16 %v1665
        %v1702 = vunpack.c.h.b16 %v1665
        %v1703 = vunpack.c.l.b16 %v1666
        %v1704 = vunpack.c.h.b16 %v1666
        %v1705 = vunpack.c.l.b16 %v1667
        %v1706 = vpack.c.b16 %v1681, %v1681
        %v1707 = vpack.c.b16 %v1682, %v1682
        %v1708 = vpack.c.b16 %v1683, %v1683
        %v1709 = vpack.c.b16 %v1684, %v1684
        %v1710 = vpack.c.b16 %v1685, %v1685
        %v1711 = vpack.c.b16 %v1686, %v1686
        %v1712 = vpack.c.b16 %v1687, %v1687
        %v1713 = vpack.c.b16 %v1688, %v1688
        %v1714 = vpack.c.b16 %v1689, %v1689
        %v1715 = vpack.c.b16 %v1690, %v1690
        %v1716 = vpack.c.b16 %v1691, %v1691
        %v1717 = vpack.c.b16 %v1692, %v1692
        %v1718 = vpack.c.b16 %v1693, %v1693
        %v1719 = vpack.c.b16 %v1694, %v1694
        %v1720 = vpack.c.b16 %v1695, %v1695
        %v1721 = vpack.c.b16 %v1696, %v1696
        %v1722 = vpack.c.b16 %v1697, %v1697
        %v1723 = vpack.c.b16 %v1698, %v1698
        %v1724 = vpack.c.b16 %v1699, %v1699
        %v1725 = vpack.c.b16 %v1700, %v1700
        %v1726 = vpack.c.b16 %v1701, %v1701
        %v1727 = vpack.c.b16 %v1702, %v1702
        %v1728 = vpack.c.b16 %v1703, %v1703
        %v1729 = vpack.c.b16 %v1704, %v1704
        %v1730 = vpack.c.b16 %v1705, %v1705
        %1756 = vst [vmem:[%s611] sm:$0xf] %v1706
        %1757 = vst [vmem:[%s611 + $0x4] sm:$0xf] %v1707
        %1758 = vst [vmem:[%s611 + $0x8] sm:$0xf] %v1708
        %1759 = vst [vmem:[%s611 + $0xc] sm:$0xf] %v1709
        %1760 = vst [vmem:[%s611 + $0x10] sm:$0xf] %v1710
        %1761 = vst [vmem:[%s611 + $0x14] sm:$0xf] %v1711
        %1762 = vst [vmem:[%s611 + $0x18] sm:$0xf] %v1712
        %1763 = vst [vmem:[%s611 + $0x1c] sm:$0xf] %v1713
        %1764 = vst [vmem:[%s611 + $0x20] sm:$0xf] %v1714
        %1765 = vst [vmem:[%s611 + $0x24] sm:$0xf] %v1715
        %1766 = vst [vmem:[%s611 + $0x28] sm:$0xf] %v1716
        %1767 = vst [vmem:[%s611 + $0x2c] sm:$0xf] %v1717
        %1768 = vst [vmem:[%s611 + $0x30] sm:$0xf] %v1718
        %1769 = vst [vmem:[%s611 + $0x34] sm:$0xf] %v1719
        %1770 = vst [vmem:[%s611 + $0x38] sm:$0xf] %v1720
        %1771 = vst [vmem:[%s611 + $0x3c] sm:$0xf] %v1721
        %1772 = vst [vmem:[%s611 + $0x40] sm:$0xf] %v1722
        %1773 = vst [vmem:[%s611 + $0x44] sm:$0xf] %v1723
        %1774 = vst [vmem:[%s611 + $0x48] sm:$0xf] %v1724
        %1775 = vst [vmem:[%s611 + $0x4c] sm:$0xf] %v1725
        %1776 = vst [vmem:[%s611 + $0x50] sm:$0xf] %v1726
        %1777 = vst [vmem:[%s611 + $0x54] sm:$0xf] %v1727
        %1778 = vst [vmem:[%s611 + $0x58] sm:$0xf] %v1728
        %1779 = vst [vmem:[%s611 + $0x5c] sm:$0xf] %v1729
        %1780 = vst [vmem:[%s611 + $0x60] sm:$0xf] %v1730
        %s1781 = smul.u32 25, %s14
        %p1782 = scmp.lt.s32.totalorder %s1781, 49
        %s1783 = scalar_select %p1782, %s1781, 49
        %s1784 = smul.addr %s1783, 4
        %s1785 = scalar_lea.vmem %s3, %s1784
        // Predicated region
        $region74: #{alexnet_forward.3} parent=68 // pred_check
          %p1786 = pneg %p100
        $region75: #{alexnet_forward.3} parent=68 // pred_check_branch
          %1788 = sbr.rel (%p1786) target = $region77
        $region76: #{alexnet_forward.3} parent=68 // pred_region
          %s1789 = smul.u32 25, %s14
        $region77: #{alexnet_forward.3} parent=68 // pred_fallthru
          _
      $region69: #{alexnet_forward.3} parent=5 // pred_fallthru
        _
      %p1790 = scmp.le.s32.totalorder 2, %s9
      // Predicated region
      $region78: #{alexnet_forward.3} parent=5 // pred_check
        %p1791 = pneg %p1790
      $region79: #{alexnet_forward.3} parent=5 // pred_check_branch
        %1793 = sbr.rel (%p1791) target = $region81
      $region80: #{alexnet_forward.3} parent=5 // pred_region
        %s1794 = ssub.s32 %s9, 2
        // Predicated region
        $region82: #{alexnet_forward.3} parent=80 // pred_check
          %p1795 = pneg %p106
        $region83: #{alexnet_forward.3} parent=80 // pred_check_branch
          %1797 = sbr.rel (%p1795) target = $region85
        $region84: #{alexnet_forward.3} parent=80 // pred_region
          %s1798 = smul.u32 25, %s15
          %p1799 = scmp.lt.s32.totalorder %s1798, 49
          %s1800 = scalar_select %p1799, %s1798, 49
          %s1801 = smul.addr %s1800, 4
          %s1802 = scalar_lea.vmem %s3, %s1801
        $region85: #{alexnet_forward.3} parent=80 // pred_fallthru
          _
      $region81: #{alexnet_forward.3} parent=5 // pred_fallthru
        _
    $region6: #{alexnet_forward.3} parent=1 // loop_footer
      %s13 = sadd.s32 1, %s9
    $region7: #{alexnet_forward.3} parent=1 // loop_footer_branch
      %8 = sbr.rel target = $region3
    $region8: #{alexnet_forward.3} parent=1 // loop_exit
      _

// kernel: alexnet_forward.4
$region0: #{alexnet_forward.4}
  #allocation0 [shape = 'u32[]', space=smem, size = 0x4, offset = 0x4, fixed_abs, tag = 'smem constant byte address 0x4 - core index']
  #allocation1 [shape = 'u32[144,128]{1,0:T(1,128)}', space=vmem, size = 0x12000, scoped, tag = 'internal scratch']
  %s0 = inlined_call_operand.vmem [shape: bf16[4,64,256], index: 0, kind: input, shape index: {}]
  %s1 = inlined_call_operand.vmem [shape: bf16[256,128], index: 1, kind: input, shape index: {}]
  %s2 = inlined_call_operand.vmem [shape: f32[1,128], index: 2, kind: input, shape index: {}]
  %s3 = inlined_call_operand.vmem [shape: bf16[64,128], index: 3, kind: output, shape index: {}]
  %s4 = sld [smem:[#allocation0]]
  $region83: #{alexnet_forward.4} parent=0
    _
  %s6 = ssub.s32 1, %s4
  %s7 = scalar_select 0, %s6, %s4
  $region1: #{alexnet_forward.4} parent=0
    #allocation2 [shape = 'u8[131072]{0}', space=vmem, size = 0x20000, scoped, tag = 'input window, operand 0']
    loop: start=0, step=1, limit=4
    $region2: #{alexnet_forward.4} parent=1 // loop_pre_header
      _
    $region3: #{alexnet_forward.4} parent=1 // loop_header
      %s9 = sphi 0, %s13
      %p10 = scmp.ge.s32.totalorder %s9, 4
      %s19 = sphi 0, %s21
      %s22 = sphi 0, %s19
      %s23 = sphi 0, %s22
      %s39 = sphi 0, %s23
      %s43 = sphi 0, %s43
      %s45 = sphi 0, %s43
      %s46 = sphi 0, %s45
      %s60 = sphi 0, %s46
      %s64 = sphi 0, %s64
      %s66 = sphi 0, %s64
      %s67 = sphi 0, %s66
      %s81 = sphi 0, %s67
      %s87 = sphi 0, %s89
      %s90 = sphi 0, %s87
      %s91 = sphi 0, %s90
      %s107 = sphi 0, %s91
    $region4: #{alexnet_forward.4} parent=1 // loop_header_branch
      %12 = sbr.rel (%p10) target = $region8
    $region5: #{alexnet_forward.4} parent=1 // loop_body
      %s14 = ssub.s32 %s9, 1
      %s15 = ssub.s32 %s9, 2
      %s16 = sadd.s32 %s9, 1
      %s17 = ssub.s32 %s9, %s16
      %p18 = scmp.eq.s32.totalorder %s17, 0
      %s20 = sadd.s32 %s19, 1
      %s21 = scalar_select %p18, %s19, %s20
      %p24 = pneg %p18
      %p25 = scmp.eq.s32.totalorder %s9, 1
      %p26 = por %p24, %p25
      %p27 = scmp.ne.s32.totalorder %s19, %s22
      %p28 = scmp.eq.s32.totalorder %s9, 0
      %p29 = por %p27, %p28
      %p30 = scmp.ne.s32.totalorder %s19, %s22
      %p31 = scmp.eq.s32.totalorder %s14, 1
      %p32 = por %p30, %p31
      %p33 = scmp.ne.s32.totalorder %s22, %s23
      %p34 = scmp.eq.s32.totalorder %s14, 0
      %p35 = por %p33, %p34
      %p36 = scmp.ne.s32.totalorder %s22, %s23
      %p37 = scmp.eq.s32.totalorder %s15, 1
      %p38 = por %p36, %p37
      %p40 = scmp.ne.s32.totalorder %s23, %s39
      %p41 = scmp.eq.s32.totalorder %s15, 0
      %p42 = por %p40, %p41
      %s44 = sadd.s32 %s43, 1
      %p47 = scmp.eq.s32.totalorder %s9, 1
      %p48 = scmp.ne.s32.totalorder %s43, %s45
      %p49 = scmp.eq.s32.totalorder %s9, 0
      %p50 = por %p48, %p49
      %p51 = scmp.ne.s32.totalorder %s43, %s45
      %p52 = scmp.eq.s32.totalorder %s14, 1
      %p53 = por %p51, %p52
      %p54 = scmp.ne.s32.totalorder %s45, %s46
      %p55 = scmp.eq.s32.totalorder %s14, 0
      %p56 = por %p54, %p55
      %p57 = scmp.ne.s32.totalorder %s45, %s46
      %p58 = scmp.eq.s32.totalorder %s15, 1
      %p59 = por %p57, %p58
      %p61 = scmp.ne.s32.totalorder %s46, %s60
      %p62 = scmp.eq.s32.totalorder %s15, 0
      %p63 = por %p61, %p62
      %s65 = sadd.s32 %s64, 1
      %p68 = scmp.eq.s32.totalorder %s9, 1
      %p69 = scmp.ne.s32.totalorder %s64, %s66
      %p70 = scmp.eq.s32.totalorder %s9, 0
      %p71 = por %p69, %p70
      %p72 = scmp.ne.s32.totalorder %s64, %s66
      %p73 = scmp.eq.s32.totalorder %s14, 1
      %p74 = por %p72, %p73
      %p75 = scmp.ne.s32.totalorder %s66, %s67
      %p76 = scmp.eq.s32.totalorder %s14, 0
      %p77 = por %p75, %p76
      %p78 = scmp.ne.s32.totalorder %s66, %s67
      %p79 = scmp.eq.s32.totalorder %s15, 1
      %p80 = por %p78, %p79
      %p82 = scmp.ne.s32.totalorder %s67, %s81
      %p83 = scmp.eq.s32.totalorder %s15, 0
      %p84 = por %p82, %p83
      %s85 = ssub.s32 %s9, %s16
      %p86 = scmp.eq.s32.totalorder %s85, 0
      %s88 = sadd.s32 %s87, 1
      %s89 = scalar_select %p86, %s87, %s88
      %p92 = pneg %p86
      %p93 = scmp.eq.s32.totalorder %s9, 1
      %p94 = por %p92, %p93
      %p95 = scmp.ne.s32.totalorder %s87, %s90
      %p96 = scmp.eq.s32.totalorder %s9, 0
      %p97 = por %p95, %p96
      %p98 = scmp.ne.s32.totalorder %s87, %s90
      %p99 = scmp.eq.s32.totalorder %s14, 1
      %p100 = por %p98, %p99
      %p101 = scmp.ne.s32.totalorder %s90, %s91
      %p102 = scmp.eq.s32.totalorder %s14, 0
      %p103 = por %p101, %p102
      %p104 = scmp.ne.s32.totalorder %s90, %s91
      %p105 = scmp.eq.s32.totalorder %s15, 1
      %p106 = por %p104, %p105
      %p108 = scmp.ne.s32.totalorder %s91, %s107
      %p109 = scmp.eq.s32.totalorder %s15, 0
      %p110 = por %p108, %p109
      %p111 = scmp.le.s32.totalorder 1, %s9
      %p112 = scmp.lt.s32.totalorder %s9, 3
      %p113 = pnand %p111, %p112
      %p114 = pneg %p113
      // Predicated region
      $region9: #{alexnet_forward.4} parent=5 // pred_check
        _
      $region10: #{alexnet_forward.4} parent=5 // pred_check_branch
        %116 = sbr.rel (%p113) target = $region12
      $region11: #{alexnet_forward.4} parent=5 // pred_region
        %s117 = ssub.s32 %s9, 1
        // Predicated region
        $region13: #{alexnet_forward.4} parent=11 // pred_check
          %p118 = pneg %p56
        $region14: #{alexnet_forward.4} parent=11 // pred_check_branch
          %120 = sbr.rel (%p118) target = $region16
        $region15: #{alexnet_forward.4} parent=11 // pred_region
          _
        $region16: #{alexnet_forward.4} parent=11 // pred_fallthru
          _
        // Predicated region
        $region17: #{alexnet_forward.4} parent=11 // pred_check
          %p121 = pneg %p77
        $region18: #{alexnet_forward.4} parent=11 // pred_check_branch
          %123 = sbr.rel (%p121) target = $region20
        $region19: #{alexnet_forward.4} parent=11 // pred_region
          _
        $region20: #{alexnet_forward.4} parent=11 // pred_fallthru
          _
      $region12: #{alexnet_forward.4} parent=5 // pred_fallthru
        _
      %p124 = scmp.lt.s32.totalorder %s9, 2
      // Predicated region
      $region21: #{alexnet_forward.4} parent=5 // pred_check
        %p125 = pneg %p124
      $region22: #{alexnet_forward.4} parent=5 // pred_check_branch
        %127 = sbr.rel (%p125) target = $region24
      $region23: #{alexnet_forward.4} parent=5 // pred_region
        // Predicated region
        $region25: #{alexnet_forward.4} parent=23 // pred_check
          %p128 = pneg %p29
        $region26: #{alexnet_forward.4} parent=23 // pred_check_branch
          %130 = sbr.rel (%p128) target = $region28
        $region27: #{alexnet_forward.4} parent=23 // pred_region
          %s131 = sand.u32 %s19, 1
          %s132 = sand.u32 %s19, 1
          %s133 = smul.addr %s132, 128
          %s134 = scalar_lea.vmem [#allocation2], %s133
          %s135 = smul.u32 4, %s9
          %s136 = smul.addr %s135, 2
          %s137 = smul.addr %s136, 4
          %s138 = scalar_lea.vmem %s0, %s137
          // Predicated region
          $region29: #{alexnet_forward.4} parent=27 // pred_check
            _
          $region30: #{alexnet_forward.4} parent=27 // pred_check_branch
            %140 = sbr.rel (0) target = $region32
          $region31: #{alexnet_forward.4} parent=27 // pred_region
            // Predicated region
            $region33: #{alexnet_forward.4} parent=31 // pred_check
              _
            $region34: #{alexnet_forward.4} parent=31 // pred_check_branch
              %142 = sbr.rel (0) target = $region36
            $region35: #{alexnet_forward.4} parent=31 // pred_region
              // Predicated region
              $region48: #{alexnet_forward.4} parent=35 // pred_check
                _
              $region49: #{alexnet_forward.4} parent=35 // pred_check_branch
                %188 = sbr.rel (0) target = $region51
              $region50: #{alexnet_forward.4} parent=35 // pred_region
                loop: start=0, step=1, limit=1
                $region52: #{alexnet_forward.4} parent=50 // loop_pre_header
                  _
                $region53: #{alexnet_forward.4} parent=50 // loop_header
                  %s190 = sphi 0, %s194
                  %p191 = scmp.ge.s32.totalorder %s190, 1
                  %s195 = sphi %s138, %s138
                  %s196 = sphi %s134, %s134
                $region54: #{alexnet_forward.4} parent=50 // loop_header_branch
                  %193 = sbr.rel (%p191) target = $region58
                $region55: #{alexnet_forward.4} parent=50 // loop_body
                  %v197 = vld [vmem:[%s195] sm:$0xff]
                  %198 = vst [vmem:[%s196] sm:$0xff] %v197
                  %v199 = vld [vmem:[%s195 + $0x8] sm:$0xff]
                  %200 = vst [vmem:[%s196 + $0x8] sm:$0xff] %v199
                  %v201 = vld [vmem:[%s195 + $0x10] sm:$0xff]
                  %202 = vst [vmem:[%s196 + $0x10] sm:$0xff] %v201
                  %v203 = vld [vmem:[%s195 + $0x18] sm:$0xff]
                  %204 = vst [vmem:[%s196 + $0x18] sm:$0xff] %v203
                  %v205 = vld [vmem:[%s195 + $0x40] sm:$0xff]
                  %206 = vst [vmem:[%s196 + $0x20] sm:$0xff] %v205
                  %v207 = vld [vmem:[%s195 + $0x48] sm:$0xff]
                  %208 = vst [vmem:[%s196 + $0x28] sm:$0xff] %v207
                  %v209 = vld [vmem:[%s195 + $0x50] sm:$0xff]
                  %210 = vst [vmem:[%s196 + $0x30] sm:$0xff] %v209
                  %v211 = vld [vmem:[%s195 + $0x58] sm:$0xff]
                  %212 = vst [vmem:[%s196 + $0x38] sm:$0xff] %v211
                  %v213 = vld [vmem:[%s195 + $0x80] sm:$0xff]
                  %214 = vst [vmem:[%s196 + $0x40] sm:$0xff] %v213
                  %v215 = vld [vmem:[%s195 + $0x88] sm:$0xff]
                  %216 = vst [vmem:[%s196 + $0x48] sm:$0xff] %v215
                  %v217 = vld [vmem:[%s195 + $0x90] sm:$0xff]
                  %218 = vst [vmem:[%s196 + $0x50] sm:$0xff] %v217
                  %v219 = vld [vmem:[%s195 + $0x98] sm:$0xff]
                  %220 = vst [vmem:[%s196 + $0x58] sm:$0xff] %v219
                  %v221 = vld [vmem:[%s195 + $0xc0] sm:$0xff]
                  %222 = vst [vmem:[%s196 + $0x60] sm:$0xff] %v221
                  %v223 = vld [vmem:[%s195 + $0xc8] sm:$0xff]
                  %224 = vst [vmem:[%s196 + $0x68] sm:$0xff] %v223
                  %v225 = vld [vmem:[%s195 + $0xd0] sm:$0xff]
                  %226 = vst [vmem:[%s196 + $0x70] sm:$0xff] %v225
                  %v227 = vld [vmem:[%s195 + $0xd8] sm:$0xff]
                  %228 = vst [vmem:[%s196 + $0x78] sm:$0xff] %v227
                $region56: #{alexnet_forward.4} parent=50 // loop_footer
                  %s194 = sadd.s32 1, %s190
                $region57: #{alexnet_forward.4} parent=50 // loop_footer_branch
                  %189 = sbr.rel target = $region53
                $region58: #{alexnet_forward.4} parent=50 // loop_exit
                  _
              $region51: #{alexnet_forward.4} parent=35 // pred_fallthru
                _
              // Predicated region
              $region59: #{alexnet_forward.4} parent=35 // pred_check
                _
              $region60: #{alexnet_forward.4} parent=35 // pred_check_branch
                %230 = sbr.rel target = $region62
              $region61: #{alexnet_forward.4} parent=35 // pred_region
                _
              $region62: #{alexnet_forward.4} parent=35 // pred_fallthru
                _
            $region36: #{alexnet_forward.4} parent=31 // pred_fallthru
              _
            // Predicated region
            $region37: #{alexnet_forward.4} parent=31 // pred_check
              _
            $region38: #{alexnet_forward.4} parent=31 // pred_check_branch
              %144 = sbr.rel target = $region40
            $region39: #{alexnet_forward.4} parent=31 // pred_region
              %s146 = ssub.s32 256, 1
              loop: start=0, step=1, limit=1
              $region41: #{alexnet_forward.4} parent=39 // loop_pre_header
                _
              $region42: #{alexnet_forward.4} parent=39 // loop_header
                %s148 = sphi 0, %s152
                %p149 = scmp.ge.s32.totalorder %s148, 1
                %s153 = sphi %s138, %s138
                %s154 = sphi %s134, %s134
              $region43: #{alexnet_forward.4} parent=39 // loop_header_branch
                %151 = sbr.rel (%p149) target = $region47
              $region44: #{alexnet_forward.4} parent=39 // loop_body
                %v155 = vld [vmem:[%s153] sm:%s146]
                %156 = vst [vmem:[%s154] sm:%s146] %v155
                %v157 = vld [vmem:[%s153 + $0x8] sm:%s146]
                %158 = vst [vmem:[%s154 + $0x8] sm:%s146] %v157
                %v159 = vld [vmem:[%s153 + $0x10] sm:%s146]
                %160 = vst [vmem:[%s154 + $0x10] sm:%s146] %v159
                %v161 = vld [vmem:[%s153 + $0x18] sm:%s146]
                %162 = vst [vmem:[%s154 + $0x18] sm:%s146] %v161
                %v163 = vld [vmem:[%s153 + $0x40] sm:%s146]
                %164 = vst [vmem:[%s154 + $0x20] sm:%s146] %v163
                %v165 = vld [vmem:[%s153 + $0x48] sm:%s146]
                %166 = vst [vmem:[%s154 + $0x28] sm:%s146] %v165
                %v167 = vld [vmem:[%s153 + $0x50] sm:%s146]
                %168 = vst [vmem:[%s154 + $0x30] sm:%s146] %v167
                %v169 = vld [vmem:[%s153 + $0x58] sm:%s146]
                %170 = vst [vmem:[%s154 + $0x38] sm:%s146] %v169
                %v171 = vld [vmem:[%s153 + $0x80] sm:%s146]
                %172 = vst [vmem:[%s154 + $0x40] sm:%s146] %v171
                %v173 = vld [vmem:[%s153 + $0x88] sm:%s146]
                %174 = vst [vmem:[%s154 + $0x48] sm:%s146] %v173
                %v175 = vld [vmem:[%s153 + $0x90] sm:%s146]
                %176 = vst [vmem:[%s154 + $0x50] sm:%s146] %v175
                %v177 = vld [vmem:[%s153 + $0x98] sm:%s146]
                %178 = vst [vmem:[%s154 + $0x58] sm:%s146] %v177
                %v179 = vld [vmem:[%s153 + $0xc0] sm:%s146]
                %180 = vst [vmem:[%s154 + $0x60] sm:%s146] %v179
                %v181 = vld [vmem:[%s153 + $0xc8] sm:%s146]
                %182 = vst [vmem:[%s154 + $0x68] sm:%s146] %v181
                %v183 = vld [vmem:[%s153 + $0xd0] sm:%s146]
                %184 = vst [vmem:[%s154 + $0x70] sm:%s146] %v183
                %v185 = vld [vmem:[%s153 + $0xd8] sm:%s146]
                %186 = vst [vmem:[%s154 + $0x78] sm:%s146] %v185
              $region45: #{alexnet_forward.4} parent=39 // loop_footer
                %s152 = sadd.s32 1, %s148
              $region46: #{alexnet_forward.4} parent=39 // loop_footer_branch
                %147 = sbr.rel target = $region42
              $region47: #{alexnet_forward.4} parent=39 // loop_exit
                _
            $region40: #{alexnet_forward.4} parent=31 // pred_fallthru
              _
          $region32: #{alexnet_forward.4} parent=27 // pred_fallthru
            _
          %231 = vnop
        $region28: #{alexnet_forward.4} parent=23 // pred_fallthru
          _
      $region24: #{alexnet_forward.4} parent=5 // pred_fallthru
        _
      %p232 = scmp.le.s32.totalorder 1, %s9
      %p233 = scmp.lt.s32.totalorder %s9, 3
      %p234 = pnand %p232, %p233
      %p235 = pneg %p234
      // Predicated region
      $region63: #{alexnet_forward.4} parent=5 // pred_check
        _
      $region64: #{alexnet_forward.4} parent=5 // pred_check_branch
        %237 = sbr.rel (%p234) target = $region66
      $region65: #{alexnet_forward.4} parent=5 // pred_region
        %s238 = ssub.s32 %s9, 1
        %s239 = sand.u32 %s22, 1
        %s240 = sand.u32 %s22, 1
        %s241 = smul.addr %s240, 128
        %s242 = scalar_lea.vmem [#allocation2], %s241
        // Predicated region
        $region67: #{alexnet_forward.4} parent=65 // pred_check
          %p243 = pneg %p35
        $region68: #{alexnet_forward.4} parent=65 // pred_check_branch
          %245 = sbr.rel (%p243) target = $region70
        $region69: #{alexnet_forward.4} parent=65 // pred_region
          _
        $region70: #{alexnet_forward.4} parent=65 // pred_fallthru
          _
        %s246 = sand.u32 %s22, 1
        %s247 = sand.u32 %s22, 1
        %s248 = smul.addr %s247, 128
        %s249 = scalar_lea.vmem [#allocation2], %s248
        %p250 = pneg %p35
        %p251 = pneg %p32
        %p252 = pneg %p56
        %p253 = pneg %p53
        %p254 = pneg %p77
        %p255 = pneg %p74
        %p256 = pneg %p103
        %p257 = pneg %p100
        %s258 = smul.u32 4, %s14
        %p259 = scmp.lt.s32.totalorder %s258, 7
        %s260 = scalar_select %p259, %s258, 7
        %s261 = smul.addr %s260, 4
        %s262 = scalar_lea.vmem %s3, %s261
        %s263 = smul.u32 4, %s14
        %s264 = smul.u32 4, %s14
        %p265 = scmp.lt.s32.totalorder %s264, 7
        %s266 = scalar_select %p265, %s264, 7
        %s267 = smul.addr %s266, 4
        %s268 = scalar_lea.vmem %s3, %s267
        %s269 = smul.u32 4, %s14
        %v271 = vld [vmem:[%s242] sm:$0xff]
        %v272 = vld [vmem:[%s242 + $0x8] sm:$0xff]
        %v273 = vld [vmem:[%s242 + $0x10] sm:$0xff]
        %v274 = vld [vmem:[%s242 + $0x18] sm:$0xff]
        %s275 = scalar_lea.vmem %s242, 32 [#allocation2]
        %v276 = vld [vmem:[%s275] sm:$0xff]
        %v277 = vld [vmem:[%s275 + $0x8] sm:$0xff]
        %v278 = vld [vmem:[%s275 + $0x10] sm:$0xff]
        %v279 = vld [vmem:[%s275 + $0x18] sm:$0xff]
        %s280 = scalar_lea.vmem %s242, 64 [#allocation2]
        %v281 = vld [vmem:[%s280] sm:$0xff]
        %v282 = vld [vmem:[%s280 + $0x8] sm:$0xff]
        %v283 = vld [vmem:[%s280 + $0x10] sm:$0xff]
        %v284 = vld [vmem:[%s280 + $0x18] sm:$0xff]
        %s285 = scalar_lea.vmem %s242, 96 [#allocation2]
        %v286 = vld [vmem:[%s285] sm:$0xff]
        %v287 = vld [vmem:[%s285 + $0x8] sm:$0xff]
        %v288 = vld [vmem:[%s285 + $0x10] sm:$0xff]
        %v289 = vld [vmem:[%s285 + $0x18] sm:$0xff]
        %v294 = vunpack.c.l.b16 %v271
        %v295 = vunpack.c.h.b16 %v271
        %v296 = vunpack.c.l.b16 %v272
        %v297 = vunpack.c.h.b16 %v272
        %v298 = vunpack.c.l.b16 %v273
        %v299 = vunpack.c.h.b16 %v273
        %v300 = vunpack.c.l.b16 %v274
        %v301 = vunpack.c.h.b16 %v274
        %v302 = vpack.c.b16 %v296, %v294
        %v303 = vpack.c.b16 %v297, %v295
        %v304 = vpack.c.b16 %v300, %v298
        %v305 = vpack.c.b16 %v301, %v299
        %v314 = vunpack.c.l.b16 %v276
        %v315 = vunpack.c.h.b16 %v276
        %v316 = vunpack.c.l.b16 %v277
        %v317 = vunpack.c.h.b16 %v277
        %v318 = vunpack.c.l.b16 %v278
        %v319 = vunpack.c.h.b16 %v278
        %v320 = vunpack.c.l.b16 %v279
        %v321 = vunpack.c.h.b16 %v279
        %v322 = vpack.c.b16 %v316, %v314
        %v323 = vpack.c.b16 %v317, %v315
        %v324 = vpack.c.b16 %v320, %v318
        %v325 = vpack.c.b16 %v321, %v319
        %v334 = vunpack.c.l.b16 %v281
        %v335 = vunpack.c.h.b16 %v281
        %v336 = vunpack.c.l.b16 %v282
        %v337 = vunpack.c.h.b16 %v282
        %v338 = vunpack.c.l.b16 %v283
        %v339 = vunpack.c.h.b16 %v283
        %v340 = vunpack.c.l.b16 %v284
        %v341 = vunpack.c.h.b16 %v284
        %v342 = vpack.c.b16 %v336, %v334
        %v343 = vpack.c.b16 %v337, %v335
        %v344 = vpack.c.b16 %v340, %v338
        %v345 = vpack.c.b16 %v341, %v339
        %v354 = vunpack.c.l.b16 %v286
        %v355 = vunpack.c.h.b16 %v286
        %v356 = vunpack.c.l.b16 %v287
        %v357 = vunpack.c.h.b16 %v287
        %v358 = vunpack.c.l.b16 %v288
        %v359 = vunpack.c.h.b16 %v288
        %v360 = vunpack.c.l.b16 %v289
        %v361 = vunpack.c.h.b16 %v289
        %v362 = vpack.c.b16 %v356, %v354
        %v363 = vpack.c.b16 %v357, %v355
        %v364 = vpack.c.b16 %v360, %v358
        %v365 = vpack.c.b16 %v361, %v359
        %v370 = vld [vmem:[%s1] sm:$0xf]
        %v371 = vld [vmem:[%s1 + $0x4] sm:$0xf]
        %v372 = vld [vmem:[%s1 + $0x8] sm:$0xf]
        %v373 = vld [vmem:[%s1 + $0xc] sm:$0xf]
        %v374 = vld [vmem:[%s1 + $0x10] sm:$0xf]
        %v375 = vld [vmem:[%s1 + $0x14] sm:$0xf]
        %v376 = vld [vmem:[%s1 + $0x18] sm:$0xf]
        %v377 = vld [vmem:[%s1 + $0x1c] sm:$0xf]
        %v378 = vld [vmem:[%s1 + $0x20] sm:$0xf]
        %v379 = vld [vmem:[%s1 + $0x24] sm:$0xf]
        %v380 = vld [vmem:[%s1 + $0x28] sm:$0xf]
        %v381 = vld [vmem:[%s1 + $0x2c] sm:$0xf]
        %v382 = vld [vmem:[%s1 + $0x30] sm:$0xf]
        %v383 = vld [vmem:[%s1 + $0x34] sm:$0xf]
        %v384 = vld [vmem:[%s1 + $0x38] sm:$0xf]
        %v385 = vld [vmem:[%s1 + $0x3c] sm:$0xf]
        %v386 = vld [vmem:[%s1 + $0x40] sm:$0xf]
        %v387 = vld [vmem:[%s1 + $0x44] sm:$0xf]
        %v388 = vld [vmem:[%s1 + $0x48] sm:$0xf]
        %v389 = vld [vmem:[%s1 + $0x4c] sm:$0xf]
        %v390 = vld [vmem:[%s1 + $0x50] sm:$0xf]
        %v391 = vld [vmem:[%s1 + $0x54] sm:$0xf]
        %v392 = vld [vmem:[%s1 + $0x58] sm:$0xf]
        %v393 = vld [vmem:[%s1 + $0x5c] sm:$0xf]
        %v394 = vld [vmem:[%s1 + $0x60] sm:$0xf]
        %v395 = vld [vmem:[%s1 + $0x64] sm:$0xf]
        %v396 = vld [vmem:[%s1 + $0x68] sm:$0xf]
        %v397 = vld [vmem:[%s1 + $0x6c] sm:$0xf]
        %v398 = vld [vmem:[%s1 + $0x70] sm:$0xf]
        %v399 = vld [vmem:[%s1 + $0x74] sm:$0xf]
        %v400 = vld [vmem:[%s1 + $0x78] sm:$0xf]
        %v401 = vld [vmem:[%s1 + $0x7c] sm:$0xf]
        %v434 = vunpack.c.l.b16 %v370
        %v435 = vunpack.c.l.b16 %v371
        %v436 = vunpack.c.l.b16 %v372
        %v437 = vunpack.c.l.b16 %v373
        %v438 = vunpack.c.l.b16 %v374
        %v439 = vunpack.c.l.b16 %v375
        %v440 = vunpack.c.l.b16 %v376
        %v441 = vunpack.c.l.b16 %v377
        %v442 = vunpack.c.l.b16 %v378
        %v443 = vunpack.c.l.b16 %v379
        %v444 = vunpack.c.l.b16 %v380
        %v445 = vunpack.c.l.b16 %v381
        %v446 = vunpack.c.l.b16 %v382
        %v447 = vunpack.c.l.b16 %v383
        %v448 = vunpack.c.l.b16 %v384
        %v449 = vunpack.c.l.b16 %v385
        %v450 = vunpack.c.l.b16 %v386
        %v451 = vunpack.c.l.b16 %v387
        %v452 = vunpack.c.l.b16 %v388
        %v453 = vunpack.c.l.b16 %v389
        %v454 = vunpack.c.l.b16 %v390
        %v455 = vunpack.c.l.b16 %v391
        %v456 = vunpack.c.l.b16 %v392
        %v457 = vunpack.c.l.b16 %v393
        %v458 = vunpack.c.l.b16 %v394
        %v459 = vunpack.c.l.b16 %v395
        %v460 = vunpack.c.l.b16 %v396
        %v461 = vunpack.c.l.b16 %v397
        %v462 = vunpack.c.l.b16 %v398
        %v463 = vunpack.c.l.b16 %v399
        %v464 = vunpack.c.l.b16 %v400
        %v465 = vunpack.c.l.b16 %v401
        %v466 = vpack.c.b16 %v435, %v434
        %v467 = vpack.c.b16 %v437, %v436
        %v468 = vpack.c.b16 %v439, %v438
        %v469 = vpack.c.b16 %v441, %v440
        %v470 = vpack.c.b16 %v443, %v442
        %v471 = vpack.c.b16 %v445, %v444
        %v472 = vpack.c.b16 %v447, %v446
        %v473 = vpack.c.b16 %v449, %v448
        %v474 = vpack.c.b16 %v451, %v450
        %v475 = vpack.c.b16 %v453, %v452
        %v476 = vpack.c.b16 %v455, %v454
        %v477 = vpack.c.b16 %v457, %v456
        %v478 = vpack.c.b16 %v459, %v458
        %v479 = vpack.c.b16 %v461, %v460
        %v480 = vpack.c.b16 %v463, %v462
        %v481 = vpack.c.b16 %v465, %v464
        %498 = vmatprep.subr.bf16.mxu0 0
        %499 = vmatpush1.bf16.msra.mxu0 %v473
        %500 = vmatprep.subr.bf16.mxu0 0
        %501 = vmatpush1.bf16.msra.mxu0 %v472
        %502 = vmatprep.subr.bf16.mxu0 0
        %503 = vmatpush1.bf16.msra.mxu0 %v471
        %504 = vmatprep.subr.bf16.mxu0 0
        %505 = vmatpush1.bf16.msra.mxu0 %v470
        %506 = vmatprep.subr.bf16.mxu0 0
        %507 = vmatpush1.bf16.msra.mxu0 %v469
        %508 = vmatprep.subr.bf16.mxu0 0
        %509 = vmatpush1.bf16.msra.mxu0 %v468
        %510 = vmatprep.subr.bf16.mxu0 0
        %511 = vmatpush1.bf16.msra.mxu0 %v467
        %512 = vmatprep.subr.bf16.mxu0 0
        %513 = vmatpush1.bf16.msra.mxu0 %v466
        %514 = vmatprep.subr.bf16.mxu0 0
        %515 = vmatpush2.bf16.msra.mxu0 %v481
        %516 = vmatprep.subr.bf16.mxu0 0
        %517 = vmatpush2.bf16.msra.mxu0 %v480
        %518 = vmatprep.subr.bf16.mxu0 0
        %519 = vmatpush2.bf16.msra.mxu0 %v479
        %520 = vmatprep.subr.bf16.mxu0 0
        %521 = vmatpush2.bf16.msra.mxu0 %v478
        %522 = vmatprep.subr.bf16.mxu0 0
        %523 = vmatpush2.bf16.msra.mxu0 %v477
        %524 = vmatprep.subr.bf16.mxu0 0
        %525 = vmatpush2.bf16.msra.mxu0 %v476
        %526 = vmatprep.subr.bf16.mxu0 0
        %527 = vmatpush2.bf16.msra.mxu0 %v475
        %528 = vmatprep.subr.bf16.mxu0 0
        %529 = vmatpush2.bf16.msra.mxu0 %v474
        %530 = vmatprep.mubr.bf16.mxu0 %v303
        %531 = vmatmul.mubr.bf16.gmra.mxu0 %v302
        %v532 = vpop.f32.mrf.mxu0
        %v533 = vadd.f32 0.0, %v532
        %v534 = vpop.f32.mrf.mxu0
        %v535 = vpop.f32.mrf.mxu0
        %v536 = vadd.f32 0.0, %v535
        %v537 = vpop.f32.mrf.mxu0
        %538 = vmatprep.mubr.bf16.mxu0 %v305
        %539 = vmatmul.mubr.bf16.gmra.mxu0 %v304
        %v540 = vpop.f32.mrf.mxu0
        %v541 = vadd.f32 0.0, %v540
        %v542 = vpop.f32.mrf.mxu0
        %v543 = vpop.f32.mrf.mxu0
        %v544 = vadd.f32 0.0, %v543
        %v545 = vpop.f32.mrf.mxu0
        %546 = vmatprep.mubr.bf16.mxu0 %v323
        %547 = vmatmul.mubr.bf16.gmra.mxu0 %v322
        %v548 = vpop.f32.mrf.mxu0
        %v549 = vadd.f32 0.0, %v548
        %v550 = vpop.f32.mrf.mxu0
        %v551 = vpop.f32.mrf.mxu0
        %v552 = vadd.f32 0.0, %v551
        %v553 = vpop.f32.mrf.mxu0
        %554 = vmatprep.mubr.bf16.mxu0 %v325
        %555 = vmatmul.mubr.bf16.gmra.mxu0 %v324
        %v556 = vpop.f32.mrf.mxu0
        %v557 = vadd.f32 0.0, %v556
        %v558 = vpop.f32.mrf.mxu0
        %v559 = vpop.f32.mrf.mxu0
        %v560 = vadd.f32 0.0, %v559
        %v561 = vpop.f32.mrf.mxu0
        %562 = vmatprep.mubr.bf16.mxu0 %v343
        %563 = vmatmul.mubr.bf16.gmra.mxu0 %v342
        %v564 = vpop.f32.mrf.mxu0
        %v565 = vadd.f32 0.0, %v564
        %v566 = vpop.f32.mrf.mxu0
        %v567 = vpop.f32.mrf.mxu0
        %v568 = vadd.f32 0.0, %v567
        %v569 = vpop.f32.mrf.mxu0
        %570 = vmatprep.mubr.bf16.mxu0 %v345
        %571 = vmatmul.mubr.bf16.gmra.mxu0 %v344
        %v572 = vpop.f32.mrf.mxu0
        %v573 = vadd.f32 0.0, %v572
        %v574 = vpop.f32.mrf.mxu0
        %v575 = vpop.f32.mrf.mxu0
        %v576 = vadd.f32 0.0, %v575
        %v577 = vpop.f32.mrf.mxu0
        %578 = vmatprep.mubr.bf16.mxu0 %v363
        %579 = vmatmul.mubr.bf16.gmra.mxu0 %v362
        %v580 = vpop.f32.mrf.mxu0
        %v581 = vadd.f32 0.0, %v580
        %v582 = vpop.f32.mrf.mxu0
        %v583 = vpop.f32.mrf.mxu0
        %v584 = vadd.f32 0.0, %v583
        %v585 = vpop.f32.mrf.mxu0
        %586 = vmatprep.mubr.bf16.mxu0 %v365
        %587 = vmatmul.mubr.bf16.gmra.mxu0 %v364
        %v588 = vpop.f32.mrf.mxu0
        %v589 = vadd.f32 0.0, %v588
        %v590 = vpop.f32.mrf.mxu0
        %v591 = vpop.f32.mrf.mxu0
        %v592 = vadd.f32 0.0, %v591
        %v593 = vpop.f32.mrf.mxu0
        %594 = vdwg.mxu0
        %v595 = vmax.f32 %v533, %v549
        %v596 = vmax.f32 %v536, %v552
        %v597 = vmax.f32 %v541, %v557
        %v598 = vmax.f32 %v544, %v560
        %v599 = vmax.f32 %v565, %v581
        %v600 = vmax.f32 %v568, %v584
        %v601 = vmax.f32 %v573, %v589
        %v602 = vmax.f32 %v576, %v592
        %v603 = vmax.f32 %v595, %v599
        %v604 = vmax.f32 %v596, %v600
        %v605 = vmax.f32 %v597, %v601
        %v606 = vmax.f32 %v598, %v602
        %v607 = vld [vmem:[%s2] sm:$0x1]
        %v609 = vlaneseq
        %v610 = vshrl.u32 %v609, 7
        %v611 = vsub.s32 0, %v610
        %v612 = vrot.slane %v607, %v611
        %v614 = vadd.f32 %v603, %v612
        %v615 = vadd.f32 %v604, %v612
        %v616 = vadd.f32 %v605, %v612
        %v617 = vadd.f32 %v606, %v612
        %v618 = vmax.f32 %v614, 0.0
        %v619 = vmax.f32 %v615, 0.0
        %v620 = vmax.f32 %v616, 0.0
        %v621 = vmax.f32 %v617, 0.0
        %v622 = vpack.c.bf16 %v619, %v618
        %v623 = vpack.c.bf16 %v621, %v620
        %v626 = vunpack.c.l.b16 %v622
        %v627 = vunpack.c.h.b16 %v622
        %v628 = vunpack.c.l.b16 %v623
        %v629 = vunpack.c.h.b16 %v623
        %v630 = vpack.c.b16 %v626, %v626
        %v631 = vpack.c.b16 %v627, %v627
        %v632 = vpack.c.b16 %v628, %v628
        %v633 = vpack.c.b16 %v629, %v629
        %638 = vst [vmem:[%s268] sm:$0xf] %v630
        %639 = vst [vmem:[%s268 + $0x4] sm:$0xf] %v631
        %640 = vst [vmem:[%s268 + $0x8] sm:$0xf] %v632
        %641 = vst [vmem:[%s268 + $0xc] sm:$0xf] %v633
        %s642 = smul.u32 4, %s14
        %p643 = scmp.lt.s32.totalorder %s642, 7
        %s644 = scalar_select %p643, %s642, 7
        %s645 = smul.addr %s644, 4
        %s646 = scalar_lea.vmem %s3, %s645
        // Predicated region
        $region71: #{alexnet_forward.4} parent=65 // pred_check
          %p647 = pneg %p100
        $region72: #{alexnet_forward.4} parent=65 // pred_check_branch
          %649 = sbr.rel (%p647) target = $region74
        $region73: #{alexnet_forward.4} parent=65 // pred_region
          %s650 = smul.u32 4, %s14
        $region74: #{alexnet_forward.4} parent=65 // pred_fallthru
          _
      $region66: #{alexnet_forward.4} parent=5 // pred_fallthru
        _
      %p651 = scmp.le.s32.totalorder 2, %s9
      // Predicated region
      $region75: #{alexnet_forward.4} parent=5 // pred_check
        %p652 = pneg %p651
      $region76: #{alexnet_forward.4} parent=5 // pred_check_branch
        %654 = sbr.rel (%p652) target = $region78
      $region77: #{alexnet_forward.4} parent=5 // pred_region
        %s655 = ssub.s32 %s9, 2
        // Predicated region
        $region79: #{alexnet_forward.4} parent=77 // pred_check
          %p656 = pneg %p106
        $region80: #{alexnet_forward.4} parent=77 // pred_check_branch
          %658 = sbr.rel (%p656) target = $region82
        $region81: #{alexnet_forward.4} parent=77 // pred_region
          %s659 = smul.u32 4, %s15
          %p660 = scmp.lt.s32.totalorder %s659, 7
          %s661 = scalar_select %p660, %s659, 7
          %s662 = smul.addr %s661, 4
          %s663 = scalar_lea.vmem %s3, %s662
        $region82: #{alexnet_forward.4} parent=77 // pred_fallthru
          _
      $region78: #{alexnet_forward.4} parent=5 // pred_fallthru
        _
    $region6: #{alexnet_forward.4} parent=1 // loop_footer
      %s13 = sadd.s32 1, %s9
    $region7: #{alexnet_forward.4} parent=1 // loop_footer_branch
      %8 = sbr.rel target = $region3
    $region8: #{alexnet_forward.4} parent=1 // loop_exit
      _

// kernel: alexnet_forward.5
$region0: #{alexnet_forward.5}
  #allocation0 [shape = 'u32[]', space=smem, size = 0x4, offset = 0x4, fixed_abs, tag = 'smem constant byte address 0x4 - core index']
  #allocation1 [shape = 'u32[144,128]{1,0:T(1,128)}', space=vmem, size = 0x12000, scoped, tag = 'internal scratch']
  %s0 = inlined_call_operand.vmem [shape: bf16[8,512], index: 0, kind: input, shape index: {}]
  %s1 = inlined_call_operand.vmem [shape: bf16[512,128], index: 1, kind: input, shape index: {}]
  %s2 = inlined_call_operand.vmem [shape: f32[1,128], index: 2, kind: input, shape index: {}]
  %s3 = inlined_call_operand.vmem [shape: bf16[128,128], index: 3, kind: input, shape index: {}]
  %s4 = inlined_call_operand.vmem [shape: f32[1,128], index: 4, kind: input, shape index: {}]
  %s5 = inlined_call_operand.vmem [shape: bf16[128,128], index: 5, kind: input, shape index: {}]
  %s6 = inlined_call_operand.vmem [shape: f32[1,128], index: 6, kind: input, shape index: {}]
  %s7 = inlined_call_operand.vmem [shape: f32[8,128], index: 7, kind: output, shape index: {}]
  %s8 = sld [smem:[#allocation0]]
  $region38: #{alexnet_forward.5} parent=0
    _
  %s10 = ssub.s32 1, %s8
  %s11 = scalar_select 0, %s10, %s8
  // Predicated region
  $region2: #{alexnet_forward.5} parent=0 // pred_check
    _
  $region3: #{alexnet_forward.5} parent=0 // pred_check_branch
    %13 = sbr.rel (0) target = $region5
  $region4: #{alexnet_forward.5} parent=0 // pred_region
    _
  $region5: #{alexnet_forward.5} parent=0 // pred_fallthru
    _
  // Predicated region
  $region6: #{alexnet_forward.5} parent=0 // pred_check
    _
  $region7: #{alexnet_forward.5} parent=0 // pred_check_branch
    %15 = sbr.rel (0) target = $region9
  $region8: #{alexnet_forward.5} parent=0 // pred_region
    _
  $region9: #{alexnet_forward.5} parent=0 // pred_fallthru
    _
  // Predicated region
  $region10: #{alexnet_forward.5} parent=0 // pred_check
    _
  $region11: #{alexnet_forward.5} parent=0 // pred_check_branch
    %17 = sbr.rel (0) target = $region13
  $region12: #{alexnet_forward.5} parent=0 // pred_region
    _
  $region13: #{alexnet_forward.5} parent=0 // pred_fallthru
    _
  // Predicated region
  $region14: #{alexnet_forward.5} parent=0 // pred_check
    _
  $region15: #{alexnet_forward.5} parent=0 // pred_check_branch
    %19 = sbr.rel (0) target = $region17
  $region16: #{alexnet_forward.5} parent=0 // pred_region
    _
  $region17: #{alexnet_forward.5} parent=0 // pred_fallthru
    _
  // Predicated region
  $region18: #{alexnet_forward.5} parent=0 // pred_check
    _
  $region19: #{alexnet_forward.5} parent=0 // pred_check_branch
    %21 = sbr.rel (0) target = $region21
  $region20: #{alexnet_forward.5} parent=0 // pred_region
    _
  $region21: #{alexnet_forward.5} parent=0 // pred_fallthru
    _
  // Predicated region
  $region22: #{alexnet_forward.5} parent=0 // pred_check
    _
  $region23: #{alexnet_forward.5} parent=0 // pred_check_branch
    %23 = sbr.rel (0) target = $region25
  $region24: #{alexnet_forward.5} parent=0 // pred_region
    _
  $region25: #{alexnet_forward.5} parent=0 // pred_fallthru
    _
  // Predicated region
  $region26: #{alexnet_forward.5} parent=0 // pred_check
    _
  $region27: #{alexnet_forward.5} parent=0 // pred_check_branch
    %25 = sbr.rel (0) target = $region29
  $region28: #{alexnet_forward.5} parent=0 // pred_region
    _
  $region29: #{alexnet_forward.5} parent=0 // pred_fallthru
    _
  %v27 = vld [vmem:[%s0] sm:$0xff]
  %v28 = vld [vmem:[%s0 + $0x8] sm:$0xff]
  %v29 = vld [vmem:[%s1] sm:$0xf]
  %v30 = vld [vmem:[%s1 + $0x4] sm:$0xf]
  %v31 = vld [vmem:[%s1 + $0x8] sm:$0xf]
  %v32 = vld [vmem:[%s1 + $0xc] sm:$0xf]
  %v33 = vld [vmem:[%s1 + $0x10] sm:$0xf]
  %v34 = vld [vmem:[%s1 + $0x14] sm:$0xf]
  %v35 = vld [vmem:[%s1 + $0x18] sm:$0xf]
  %v36 = vld [vmem:[%s1 + $0x1c] sm:$0xf]
  %v37 = vld [vmem:[%s1 + $0x20] sm:$0xf]
  %v38 = vld [vmem:[%s1 + $0x24] sm:$0xf]
  %v39 = vld [vmem:[%s1 + $0x28] sm:$0xf]
  %v40 = vld [vmem:[%s1 + $0x2c] sm:$0xf]
  %v41 = vld [vmem:[%s1 + $0x30] sm:$0xf]
  %v42 = vld [vmem:[%s1 + $0x34] sm:$0xf]
  %v43 = vld [vmem:[%s1 + $0x38] sm:$0xf]
  %v44 = vld [vmem:[%s1 + $0x3c] sm:$0xf]
  %v45 = vld [vmem:[%s1 + $0x40] sm:$0xf]
  %v46 = vld [vmem:[%s1 + $0x44] sm:$0xf]
  %v47 = vld [vmem:[%s1 + $0x48] sm:$0xf]
  %v48 = vld [vmem:[%s1 + $0x4c] sm:$0xf]
  %v49 = vld [vmem:[%s1 + $0x50] sm:$0xf]
  %v50 = vld [vmem:[%s1 + $0x54] sm:$0xf]
  %v51 = vld [vmem:[%s1 + $0x58] sm:$0xf]
  %v52 = vld [vmem:[%s1 + $0x5c] sm:$0xf]
  %v53 = vld [vmem:[%s1 + $0x60] sm:$0xf]
  %v54 = vld [vmem:[%s1 + $0x64] sm:$0xf]
  %v55 = vld [vmem:[%s1 + $0x68] sm:$0xf]
  %v56 = vld [vmem:[%s1 + $0x6c] sm:$0xf]
  %v57 = vld [vmem:[%s1 + $0x70] sm:$0xf]
  %v58 = vld [vmem:[%s1 + $0x74] sm:$0xf]
  %v59 = vld [vmem:[%s1 + $0x78] sm:$0xf]
  %v60 = vld [vmem:[%s1 + $0x7c] sm:$0xf]
  %v61 = vld [vmem:[%s1 + $0x80] sm:$0xf]
  %v62 = vld [vmem:[%s1 + $0x84] sm:$0xf]
  %v63 = vld [vmem:[%s1 + $0x88] sm:$0xf]
  %v64 = vld [vmem:[%s1 + $0x8c] sm:$0xf]
  %v65 = vld [vmem:[%s1 + $0x90] sm:$0xf]
  %v66 = vld [vmem:[%s1 + $0x94] sm:$0xf]
  %v67 = vld [vmem:[%s1 + $0x98] sm:$0xf]
  %v68 = vld [vmem:[%s1 + $0x9c] sm:$0xf]
  %v69 = vld [vmem:[%s1 + $0xa0] sm:$0xf]
  %v70 = vld [vmem:[%s1 + $0xa4] sm:$0xf]
  %v71 = vld [vmem:[%s1 + $0xa8] sm:$0xf]
  %v72 = vld [vmem:[%s1 + $0xac] sm:$0xf]
  %v73 = vld [vmem:[%s1 + $0xb0] sm:$0xf]
  %v74 = vld [vmem:[%s1 + $0xb4] sm:$0xf]
  %v75 = vld [vmem:[%s1 + $0xb8] sm:$0xf]
  %v76 = vld [vmem:[%s1 + $0xbc] sm:$0xf]
  %v77 = vld [vmem:[%s1 + $0xc0] sm:$0xf]
  %v78 = vld [vmem:[%s1 + $0xc4] sm:$0xf]
  %v79 = vld [vmem:[%s1 + $0xc8] sm:$0xf]
  %v80 = vld [vmem:[%s1 + $0xcc] sm:$0xf]
  %v81 = vld [vmem:[%s1 + $0xd0] sm:$0xf]
  %v82 = vld [vmem:[%s1 + $0xd4] sm:$0xf]
  %v83 = vld [vmem:[%s1 + $0xd8] sm:$0xf]
  %v84 = vld [vmem:[%s1 + $0xdc] sm:$0xf]
  %v85 = vld [vmem:[%s1 + $0xe0] sm:$0xf]
  %v86 = vld [vmem:[%s1 + $0xe4] sm:$0xf]
  %v87 = vld [vmem:[%s1 + $0xe8] sm:$0xf]
  %v88 = vld [vmem:[%s1 + $0xec] sm:$0xf]
  %v89 = vld [vmem:[%s1 + $0xf0] sm:$0xf]
  %v90 = vld [vmem:[%s1 + $0xf4] sm:$0xf]
  %v91 = vld [vmem:[%s1 + $0xf8] sm:$0xf]
  %v92 = vld [vmem:[%s1 + $0xfc] sm:$0xf]
  %v93 = vld [vmem:[%s2] sm:$0x1]
  %v95 = vlaneseq
  %v96 = vshrl.u32 %v95, 7
  %v97 = vsub.s32 0, %v96
  %v98 = vrot.slane %v93, %v97
  %v102 = vunpack.c.l.b16 %v27
  %v103 = vunpack.c.h.b16 %v27
  %v104 = vunpack.c.l.b16 %v28
  %v105 = vunpack.c.h.b16 %v28
  %v106 = vpack.c.b16 %v102, %v102
  %v107 = vpack.c.b16 %v103, %v103
  %v108 = vpack.c.b16 %v104, %v104
  %v109 = vpack.c.b16 %v105, %v105
  %v178 = vunpack.c.l.b16 %v29
  %v179 = vunpack.c.l.b16 %v30
  %v180 = vunpack.c.l.b16 %v31
  %v181 = vunpack.c.l.b16 %v32
  %v182 = vunpack.c.l.b16 %v33
  %v183 = vunpack.c.l.b16 %v34
  %v184 = vunpack.c.l.b16 %v35
  %v185 = vunpack.c.l.b16 %v36
  %v186 = vunpack.c.l.b16 %v37
  %v187 = vunpack.c.l.b16 %v38
  %v188 = vunpack.c.l.b16 %v39
  %v189 = vunpack.c.l.b16 %v40
  %v190 = vunpack.c.l.b16 %v41
  %v191 = vunpack.c.l.b16 %v42
  %v192 = vunpack.c.l.b16 %v43
  %v193 = vunpack.c.l.b16 %v44
  %v194 = vunpack.c.l.b16 %v45
  %v195 = vunpack.c.l.b16 %v46
  %v196 = vunpack.c.l.b16 %v47
  %v197 = vunpack.c.l.b16 %v48
  %v198 = vunpack.c.l.b16 %v49
  %v199 = vunpack.c.l.b16 %v50
  %v200 = vunpack.c.l.b16 %v51
  %v201 = vunpack.c.l.b16 %v52
  %v202 = vunpack.c.l.b16 %v53
  %v203 = vunpack.c.l.b16 %v54
  %v204 = vunpack.c.l.b16 %v55
  %v205 = vunpack.c.l.b16 %v56
  %v206 = vunpack.c.l.b16 %v57
  %v207 = vunpack.c.l.b16 %v58
  %v208 = vunpack.c.l.b16 %v59
  %v209 = vunpack.c.l.b16 %v60
  %v210 = vunpack.c.l.b16 %v61
  %v211 = vunpack.c.l.b16 %v62
  %v212 = vunpack.c.l.b16 %v63
  %v213 = vunpack.c.l.b16 %v64
  %v214 = vunpack.c.l.b16 %v65
  %v215 = vunpack.c.l.b16 %v66
  %v216 = vunpack.c.l.b16 %v67
  %v217 = vunpack.c.l.b16 %v68
  %v218 = vunpack.c.l.b16 %v69
  %v219 = vunpack.c.l.b16 %v70
  %v220 = vunpack.c.l.b16 %v71
  %v221 = vunpack.c.l.b16 %v72
  %v222 = vunpack.c.l.b16 %v73
  %v223 = vunpack.c.l.b16 %v74
  %v224 = vunpack.c.l.b16 %v75
  %v225 = vunpack.c.l.b16 %v76
  %v226 = vunpack.c.l.b16 %v77
  %v227 = vunpack.c.l.b16 %v78
  %v228 = vunpack.c.l.b16 %v79
  %v229 = vunpack.c.l.b16 %v80
  %v230 = vunpack.c.l.b16 %v81
  %v231 = vunpack.c.l.b16 %v82
  %v232 = vunpack.c.l.b16 %v83
  %v233 = vunpack.c.l.b16 %v84
  %v234 = vunpack.c.l.b16 %v85
  %v235 = vunpack.c.l.b16 %v86
  %v236 = vunpack.c.l.b16 %v87
  %v237 = vunpack.c.l.b16 %v88
  %v238 = vunpack.c.l.b16 %v89
  %v239 = vunpack.c.l.b16 %v90
  %v240 = vunpack.c.l.b16 %v91
  %v241 = vunpack.c.l.b16 %v92
  %v242 = vpack.c.b16 %v179, %v178
  %v243 = vpack.c.b16 %v181, %v180
  %v244 = vpack.c.b16 %v183, %v182
  %v245 = vpack.c.b16 %v185, %v184
  %v246 = vpack.c.b16 %v187, %v186
  %v247 = vpack.c.b16 %v189, %v188
  %v248 = vpack.c.b16 %v191, %v190
  %v249 = vpack.c.b16 %v193, %v192
  %v250 = vpack.c.b16 %v195, %v194
  %v251 = vpack.c.b16 %v197, %v196
  %v252 = vpack.c.b16 %v199, %v198
  %v253 = vpack.c.b16 %v201, %v200
  %v254 = vpack.c.b16 %v203, %v202
  %v255 = vpack.c.b16 %v205, %v204
  %v256 = vpack.c.b16 %v207, %v206
  %v257 = vpack.c.b16 %v209, %v208
  %v258 = vpack.c.b16 %v211, %v210
  %v259 = vpack.c.b16 %v213, %v212
  %v260 = vpack.c.b16 %v215, %v214
  %v261 = vpack.c.b16 %v217, %v216
  %v262 = vpack.c.b16 %v219, %v218
  %v263 = vpack.c.b16 %v221, %v220
  %v264 = vpack.c.b16 %v223, %v222
  %v265 = vpack.c.b16 %v225, %v224
  %v266 = vpack.c.b16 %v227, %v226
  %v267 = vpack.c.b16 %v229, %v228
  %v268 = vpack.c.b16 %v231, %v230
  %v269 = vpack.c.b16 %v233, %v232
  %v270 = vpack.c.b16 %v235, %v234
  %v271 = vpack.c.b16 %v237, %v236
  %v272 = vpack.c.b16 %v239, %v238
  %v273 = vpack.c.b16 %v241, %v240
  %306 = vmatprep.subr.bf16.mxu0 0
  %307 = vmatpush1.bf16.msra.mxu0 %v249
  %308 = vmatprep.subr.bf16.mxu0 0
  %309 = vmatpush1.bf16.msra.mxu0 %v248
  %310 = vmatprep.subr.bf16.mxu0 0
  %311 = vmatpush1.bf16.msra.mxu0 %v247
  %312 = vmatprep.subr.bf16.mxu0 0
  %313 = vmatpush1.bf16.msra.mxu0 %v246
  %314 = vmatprep.subr.bf16.mxu0 0
  %315 = vmatpush1.bf16.msra.mxu0 %v245
  %316 = vmatprep.subr.bf16.mxu0 0
  %317 = vmatpush1.bf16.msra.mxu0 %v244
  %318 = vmatprep.subr.bf16.mxu0 0
  %319 = vmatpush1.bf16.msra.mxu0 %v243
  %320 = vmatprep.subr.bf16.mxu0 0
  %321 = vmatpush1.bf16.msra.mxu0 %v242
  %322 = vmatprep.subr.bf16.mxu0 0
  %323 = vmatpush2.bf16.msra.mxu0 %v257
  %324 = vmatprep.subr.bf16.mxu0 0
  %325 = vmatpush2.bf16.msra.mxu0 %v256
  %326 = vmatprep.subr.bf16.mxu0 0
  %327 = vmatpush2.bf16.msra.mxu0 %v255
  %328 = vmatprep.subr.bf16.mxu0 0
  %329 = vmatpush2.bf16.msra.mxu0 %v254
  %330 = vmatprep.subr.bf16.mxu0 0
  %331 = vmatpush2.bf16.msra.mxu0 %v253
  %332 = vmatprep.subr.bf16.mxu0 0
  %333 = vmatpush2.bf16.msra.mxu0 %v252
  %334 = vmatprep.subr.bf16.mxu0 0
  %335 = vmatpush2.bf16.msra.mxu0 %v251
  %336 = vmatprep.subr.bf16.mxu0 0
  %337 = vmatpush2.bf16.msra.mxu0 %v250
  %338 = vmatprep.mubr.bf16.mxu0 %v107
  %339 = vmatmul.mubr.bf16.gmra.mxu0 %v106
  %v340 = vpop.f32.mrf.mxu0
  %v341 = vadd.f32 %v98, %v340
  %v342 = vpop.f32.mrf.mxu0
  %v343 = vpop.f32.mrf.mxu0
  %v344 = vpop.f32.mrf.mxu0
  %345 = vdwg.mxu0
  %346 = vmatprep.subr.bf16.mxu0 0
  %347 = vmatpush1.bf16.msra.mxu0 %v265
  %348 = vmatprep.subr.bf16.mxu0 0
  %349 = vmatpush1.bf16.msra.mxu0 %v264
  %350 = vmatprep.subr.bf16.mxu0 0
  %351 = vmatpush1.bf16.msra.mxu0 %v263
  %352 = vmatprep.subr.bf16.mxu0 0
  %353 = vmatpush1.bf16.msra.mxu0 %v262
  %354 = vmatprep.subr.bf16.mxu0 0
  %355 = vmatpush1.bf16.msra.mxu0 %v261
  %356 = vmatprep.subr.bf16.mxu0 0
  %357 = vmatpush1.bf16.msra.mxu0 %v260
  %358 = vmatprep.subr.bf16.mxu0 0
  %359 = vmatpush1.bf16.msra.mxu0 %v259
  %360 = vmatprep.subr.bf16.mxu0 0
  %361 = vmatpush1.bf16.msra.mxu0 %v258
  %362 = vmatprep.subr.bf16.mxu0 0
  %363 = vmatpush2.bf16.msra.mxu0 %v273
  %364 = vmatprep.subr.bf16.mxu0 0
  %365 = vmatpush2.bf16.msra.mxu0 %v272
  %366 = vmatprep.subr.bf16.mxu0 0
  %367 = vmatpush2.bf16.msra.mxu0 %v271
  %368 = vmatprep.subr.bf16.mxu0 0
  %369 = vmatpush2.bf16.msra.mxu0 %v270
  %370 = vmatprep.subr.bf16.mxu0 0
  %371 = vmatpush2.bf16.msra.mxu0 %v269
  %372 = vmatprep.subr.bf16.mxu0 0
  %373 = vmatpush2.bf16.msra.mxu0 %v268
  %374 = vmatprep.subr.bf16.mxu0 0
  %375 = vmatpush2.bf16.msra.mxu0 %v267
  %376 = vmatprep.subr.bf16.mxu0 0
  %377 = vmatpush2.bf16.msra.mxu0 %v266
  %378 = vmatprep.mubr.bf16.mxu0 %v109
  %379 = vmatmul.mubr.bf16.gmra.mxu0 %v108
  %v380 = vpop.f32.mrf.mxu0
  %v381 = vadd.f32 %v341, %v380
  %v382 = vpop.f32.mrf.mxu0
  %v383 = vpop.f32.mrf.mxu0
  %v384 = vpop.f32.mrf.mxu0
  %385 = vdwg.mxu0
  %v386 = vmax.f32 %v381, 0.0
  %v387 = vpack.c.bf16 %v386, %v386
  %v388 = vld [vmem:[%s3] sm:$0xf]
  %v389 = vld [vmem:[%s3 + $0x4] sm:$0xf]
  %v390 = vld [vmem:[%s3 + $0x8] sm:$0xf]
  %v391 = vld [vmem:[%s3 + $0xc] sm:$0xf]
  %v392 = vld [vmem:[%s3 + $0x10] sm:$0xf]
  %v393 = vld [vmem:[%s3 + $0x14] sm:$0xf]
  %v394 = vld [vmem:[%s3 + $0x18] sm:$0xf]
  %v395 = vld [vmem:[%s3 + $0x1c] sm:$0xf]
  %v396 = vld [vmem:[%s3 + $0x20] sm:$0xf]
  %v397 = vld [vmem:[%s3 + $0x24] sm:$0xf]
  %v398 = vld [vmem:[%s3 + $0x28] sm:$0xf]
  %v399 = vld [vmem:[%s3 + $0x2c] sm:$0xf]
  %v400 = vld [vmem:[%s3 + $0x30] sm:$0xf]
  %v401 = vld [vmem:[%s3 + $0x34] sm:$0xf]
  %v402 = vld [vmem:[%s3 + $0x38] sm:$0xf]
  %v403 = vld [vmem:[%s3 + $0x3c] sm:$0xf]
  %v404 = vld [vmem:[%s4] sm:$0x1]
  %v406 = vlaneseq
  %v407 = vshrl.u32 %v406, 7
  %v408 = vsub.s32 0, %v407
  %v409 = vrot.slane %v404, %v408
  %v427 = vunpack.c.l.b16 %v388
  %v428 = vunpack.c.l.b16 %v389
  %v429 = vunpack.c.l.b16 %v390
  %v430 = vunpack.c.l.b16 %v391
  %v431 = vunpack.c.l.b16 %v392
  %v432 = vunpack.c.l.b16 %v393
  %v433 = vunpack.c.l.b16 %v394
  %v434 = vunpack.c.l.b16 %v395
  %v435 = vunpack.c.l.b16 %v396
  %v436 = vunpack.c.l.b16 %v397
  %v437 = vunpack.c.l.b16 %v398
  %v438 = vunpack.c.l.b16 %v399
  %v439 = vunpack.c.l.b16 %v400
  %v440 = vunpack.c.l.b16 %v401
  %v441 = vunpack.c.l.b16 %v402
  %v442 = vunpack.c.l.b16 %v403
  %v443 = vpack.c.b16 %v428, %v427
  %v444 = vpack.c.b16 %v430, %v429
  %v445 = vpack.c.b16 %v432, %v431
  %v446 = vpack.c.b16 %v434, %v433
  %v447 = vpack.c.b16 %v436, %v435
  %v448 = vpack.c.b16 %v438, %v437
  %v449 = vpack.c.b16 %v440, %v439
  %v450 = vpack.c.b16 %v442, %v441
  %459 = vmatprep.subr.bf16.mxu0 0
  %460 = vmatpush1.bf16.msra.mxu0 %v450
  %461 = vmatprep.subr.bf16.mxu0 0
  %462 = vmatpush1.bf16.msra.mxu0 %v449
  %463 = vmatprep.subr.bf16.mxu0 0
  %464 = vmatpush1.bf16.msra.mxu0 %v448
  %465 = vmatprep.subr.bf16.mxu0 0
  %466 = vmatpush1.bf16.msra.mxu0 %v447
  %467 = vmatprep.subr.bf16.mxu0 0
  %468 = vmatpush1.bf16.msra.mxu0 %v446
  %469 = vmatprep.subr.bf16.mxu0 0
  %470 = vmatpush1.bf16.msra.mxu0 %v445
  %471 = vmatprep.subr.bf16.mxu0 0
  %472 = vmatpush1.bf16.msra.mxu0 %v444
  %473 = vmatprep.subr.bf16.mxu0 0
  %474 = vmatpush1.bf16.msra.mxu0 %v443
  %475 = vmatprep.subr.bf16.mxu0 0
  %476 = vmatpush2.bf16.msra.mxu0 0
  %477 = vmatprep.subr.bf16.mxu0 0
  %478 = vmatpush2.bf16.msra.mxu0 0
  %479 = vmatprep.subr.bf16.mxu0 0
  %480 = vmatpush2.bf16.msra.mxu0 0
  %481 = vmatprep.subr.bf16.mxu0 0
  %482 = vmatpush2.bf16.msra.mxu0 0
  %483 = vmatprep.subr.bf16.mxu0 0
  %484 = vmatpush2.bf16.msra.mxu0 0
  %485 = vmatprep.subr.bf16.mxu0 0
  %486 = vmatpush2.bf16.msra.mxu0 0
  %487 = vmatprep.subr.bf16.mxu0 0
  %488 = vmatpush2.bf16.msra.mxu0 0
  %489 = vmatprep.subr.bf16.mxu0 0
  %490 = vmatpush2.bf16.msra.mxu0 0
  %491 = vmatprep.mubr.bf16.mxu0 0
  %492 = vmatmul.mubr.bf16.gmra.mxu0 %v387
  %v493 = vpop.f32.mrf.mxu0
  %v494 = vadd.f32 %v409, %v493
  %v495 = vpop.f32.mrf.mxu0
  %v496 = vpop.f32.mrf.mxu0
  %v497 = vpop.f32.mrf.mxu0
  %498 = vdwg.mxu0
  %v499 = vmax.f32 %v494, 0.0
  %v500 = vpack.c.bf16 %v499, %v499
  %v501 = vld [vmem:[%s5] sm:$0xf]
  %v502 = vld [vmem:[%s5 + $0x4] sm:$0xf]
  %v503 = vld [vmem:[%s5 + $0x8] sm:$0xf]
  %v504 = vld [vmem:[%s5 + $0xc] sm:$0xf]
  %v505 = vld [vmem:[%s5 + $0x10] sm:$0xf]
  %v506 = vld [vmem:[%s5 + $0x14] sm:$0xf]
  %v507 = vld [vmem:[%s5 + $0x18] sm:$0xf]
  %v508 = vld [vmem:[%s5 + $0x1c] sm:$0xf]
  %v509 = vld [vmem:[%s5 + $0x20] sm:$0xf]
  %v510 = vld [vmem:[%s5 + $0x24] sm:$0xf]
  %v511 = vld [vmem:[%s5 + $0x28] sm:$0xf]
  %v512 = vld [vmem:[%s5 + $0x2c] sm:$0xf]
  %v513 = vld [vmem:[%s5 + $0x30] sm:$0xf]
  %v514 = vld [vmem:[%s5 + $0x34] sm:$0xf]
  %v515 = vld [vmem:[%s5 + $0x38] sm:$0xf]
  %v516 = vld [vmem:[%s5 + $0x3c] sm:$0xf]
  %v517 = vld [vmem:[%s6] sm:$0x1]
  %v519 = vlaneseq
  %v520 = vshrl.u32 %v519, 7
  %v521 = vsub.s32 0, %v520
  %v522 = vrot.slane %v517, %v521
  %v540 = vunpack.c.l.b16 %v501
  %v541 = vunpack.c.l.b16 %v502
  %v542 = vunpack.c.l.b16 %v503
  %v543 = vunpack.c.l.b16 %v504
  %v544 = vunpack.c.l.b16 %v505
  %v545 = vunpack.c.l.b16 %v506
  %v546 = vunpack.c.l.b16 %v507
  %v547 = vunpack.c.l.b16 %v508
  %v548 = vunpack.c.l.b16 %v509
  %v549 = vunpack.c.l.b16 %v510
  %v550 = vunpack.c.l.b16 %v511
  %v551 = vunpack.c.l.b16 %v512
  %v552 = vunpack.c.l.b16 %v513
  %v553 = vunpack.c.l.b16 %v514
  %v554 = vunpack.c.l.b16 %v515
  %v555 = vunpack.c.l.b16 %v516
  %v556 = vpack.c.b16 %v541, %v540
  %v557 = vpack.c.b16 %v543, %v542
  %v558 = vpack.c.b16 %v545, %v544
  %v559 = vpack.c.b16 %v547, %v546
  %v560 = vpack.c.b16 %v549, %v548
  %v561 = vpack.c.b16 %v551, %v550
  %v562 = vpack.c.b16 %v553, %v552
  %v563 = vpack.c.b16 %v555, %v554
  %572 = vmatprep.subr.bf16.mxu0 0
  %573 = vmatpush1.bf16.msra.mxu0 %v563
  %574 = vmatprep.subr.bf16.mxu0 0
  %575 = vmatpush1.bf16.msra.mxu0 %v562
  %576 = vmatprep.subr.bf16.mxu0 0
  %577 = vmatpush1.bf16.msra.mxu0 %v561
  %578 = vmatprep.subr.bf16.mxu0 0
  %579 = vmatpush1.bf16.msra.mxu0 %v560
  %580 = vmatprep.subr.bf16.mxu0 0
  %581 = vmatpush1.bf16.msra.mxu0 %v559
  %582 = vmatprep.subr.bf16.mxu0 0
  %583 = vmatpush1.bf16.msra.mxu0 %v558
  %584 = vmatprep.subr.bf16.mxu0 0
  %585 = vmatpush1.bf16.msra.mxu0 %v557
  %586 = vmatprep.subr.bf16.mxu0 0
  %587 = vmatpush1.bf16.msra.mxu0 %v556
  %588 = vmatprep.subr.bf16.mxu0 0
  %589 = vmatpush2.bf16.msra.mxu0 0
  %590 = vmatprep.subr.bf16.mxu0 0
  %591 = vmatpush2.bf16.msra.mxu0 0
  %592 = vmatprep.subr.bf16.mxu0 0
  %593 = vmatpush2.bf16.msra.mxu0 0
  %594 = vmatprep.subr.bf16.mxu0 0
  %595 = vmatpush2.bf16.msra.mxu0 0
  %596 = vmatprep.subr.bf16.mxu0 0
  %597 = vmatpush2.bf16.msra.mxu0 0
  %598 = vmatprep.subr.bf16.mxu0 0
  %599 = vmatpush2.bf16.msra.mxu0 0
  %600 = vmatprep.subr.bf16.mxu0 0
  %601 = vmatpush2.bf16.msra.mxu0 0
  %602 = vmatprep.subr.bf16.mxu0 0
  %603 = vmatpush2.bf16.msra.mxu0 0
  %604 = vmatprep.mubr.bf16.mxu0 0
  %605 = vmatmul.mubr.bf16.gmra.mxu0 %v500
  %v606 = vpop.f32.mrf.mxu0
  %v607 = vadd.f32 %v522, %v606
  %v608 = vpop.f32.mrf.mxu0
  %v609 = vpop.f32.mrf.mxu0
  %v610 = vpop.f32.mrf.mxu0
  %611 = vdwg.mxu0
  %612 = vst [vmem:[%s7] sm:$0xff] %v607
  // Predicated region
  $region30: #{alexnet_forward.5} parent=0 // pred_check
    _
  $region31: #{alexnet_forward.5} parent=0 // pred_check_branch
    %614 = sbr.rel (0) target = $region33
  $region32: #{alexnet_forward.5} parent=0 // pred_region
    _
  $region33: #{alexnet_forward.5} parent=0 // pred_fallthru
    _
  // Predicated region
  $region34: #{alexnet_forward.5} parent=0 // pred_check
    _
  $region35: #{alexnet_forward.5} parent=0 // pred_check_branch
    %616 = sbr.rel (0) target = $region37
  $region36: #{alexnet_forward.5} parent=0 // pred_region
    _
  $region37: #{alexnet_forward.5} parent=0 // pred_fallthru
    _

</llo_original>
